<compile_context>
chip_gen: v5e
topology: v5e:2x2
jax: 0.10.0
libtpu: 0.0.40
codegen_flags: <defaults>
</compile_context>

<pallas_src>
import functools

import jax
import jax.numpy as jnp
from jax import lax
from jax.experimental import pallas as pl
from jax.experimental.pallas import tpu as pltpu

EPS = 1e-5  # matches nn.BatchNorm2d default


# ----------------------------------------------------------------------------
# Kernels
# ----------------------------------------------------------------------------
def _accumulate_3x3(xf_ref, w_ref, r_out, wp):
    """Sum of 9 shifted matmuls on a spatially-flattened, zero-padded input.

    xf_ref: (1, N_in, Cin)  flattened padded input for one batch element,
            row index = h_pad * wp + w_pad (wp = padded width).
    w_ref:  (9, Cin, Cout)  tap-major (t = kh*3 + kw) conv weights.
    Returns a float32 (r_out, Cout) accumulator; row r corresponds to output
    pixel (r // wp, r % wp) — the last two columns of each row are junk and are
    dropped by the wrapper.
    """
    cout = w_ref.shape[2]
    acc = jnp.zeros((r_out, cout), jnp.float32)
    for kh in range(3):
        for kw in range(3):
            off = kh * wp + kw
            patch = xf_ref[0, off:off + r_out, :]          # (r_out, Cin)
            acc = acc + jnp.dot(patch, w_ref[kh * 3 + kw],
                                preferred_element_type=jnp.float32)
    return acc


def _conv3x3_bn_relu_kernel(xf_ref, w_ref, scale_ref, bias_ref, o_ref, *, wp):
    """relu(bn(conv3x3(x)))  — conv bias folded into `bias`."""
    r_out = o_ref.shape[1]
    acc = _accumulate_3x3(xf_ref, w_ref, r_out, wp)
    y = acc * scale_ref[...] + bias_ref[...]
    o_ref[0] = jnp.maximum(y, 0.0).astype(o_ref.dtype)


def _conv3x3_bn_add_relu_kernel(xf_ref, w_ref, scale_ref, bias_ref, sc_ref,
                                o_ref, *, wp):
    """relu(bn(conv3x3(x)) + shortcut)."""
    r_out = o_ref.shape[1]
    acc = _accumulate_3x3(xf_ref, w_ref, r_out, wp)
    y = acc * scale_ref[...] + bias_ref[...] + sc_ref[0].astype(jnp.float32)
    o_ref[0] = jnp.maximum(y, 0.0).astype(o_ref.dtype)


def _conv1x1_bias_kernel(x_ref, w_ref, b_ref, o_ref):
    """1x1 conv (pure matmul over channels) + bias, for the projection shortcut."""
    y = jnp.dot(x_ref[0], w_ref[...],
                preferred_element_type=jnp.float32) + b_ref[...]
    o_ref[0] = y.astype(o_ref.dtype)


# ----------------------------------------------------------------------------
# pallas_call wrappers
# ----------------------------------------------------------------------------
def _conv3x3_block(x_flat, w9, scale2d, bias2d, *, r_out, wp, shortcut=None):
    b, n_in, cin = x_flat.shape
    cout = w9.shape[2]
    in_specs = [
        pl.BlockSpec((1, n_in, cin), lambda i: (i, 0, 0)),
        pl.BlockSpec((9, cin, cout), lambda i: (0, 0, 0)),
        pl.BlockSpec((1, cout), lambda i: (0, 0)),
        pl.BlockSpec((1, cout), lambda i: (0, 0)),
    ]
    args = [x_flat, w9, scale2d, bias2d]
    if shortcut is None:
        kernel = functools.partial(_conv3x3_bn_relu_kernel, wp=wp)
    else:
        kernel = functools.partial(_conv3x3_bn_add_relu_kernel, wp=wp)
        in_specs.append(pl.BlockSpec((1, r_out, cout), lambda i: (i, 0, 0)))
        args.append(shortcut)
    return pl.pallas_call(
        kernel,
        out_shape=jax.ShapeDtypeStruct((b, r_out, cout), x_flat.dtype),
        grid=(b,),
        in_specs=in_specs,
        out_specs=pl.BlockSpec((1, r_out, cout), lambda i: (i, 0, 0)),
        compiler_params=pltpu.CompilerParams(
            dimension_semantics=("parallel",)),
    )(*args)


def _conv1x1_block(x_flat, w2d, b2d):
    b, p, cin = x_flat.shape
    cout = w2d.shape[1]
    return pl.pallas_call(
        _conv1x1_bias_kernel,
        out_shape=jax.ShapeDtypeStruct((b, p, cout), x_flat.dtype),
        grid=(b,),
        in_specs=[
            pl.BlockSpec((1, p, cin), lambda i: (i, 0, 0)),
            pl.BlockSpec((cin, cout), lambda i: (0, 0)),
            pl.BlockSpec((1, cout), lambda i: (0, 0)),
        ],
        out_specs=pl.BlockSpec((1, p, cout), lambda i: (i, 0, 0)),
        compiler_params=pltpu.CompilerParams(
            dimension_semantics=("parallel",)),
    )(x_flat, w2d, b2d)


# ----------------------------------------------------------------------------
# Residual forward (matches the PyTorch module, inference-mode BN)
# ----------------------------------------------------------------------------
@functools.partial(jax.jit, static_argnames=("use_1x1conv", "stride"))
def residual_forward(x_nchw, params, *, use_1x1conv=False, stride=1):
    B, Cin, H, W = x_nchw.shape
    Cout = params["w1"].shape[0]
    dtype = x_nchw.dtype

    # ---- layout plumbing (XLA): NCHW -> NHWC, reshape weights, fold BN ----
    x = jnp.transpose(x_nchw, (0, 2, 3, 1))                       # (B,H,W,Cin)
    w1 = jnp.transpose(params["w1"], (2, 3, 1, 0)).reshape(9, Cin, Cout)
    w2 = jnp.transpose(params["w2"], (2, 3, 1, 0)).reshape(9, Cout, Cout)
    s1 = params["gamma1"] / jnp.sqrt(params["var1"] + EPS)
    b1 = params["beta1"] + (params["b1"] - params["mean1"]) * s1
    s2 = params["gamma2"] / jnp.sqrt(params["var2"] + EPS)
    b2 = params["beta2"] + (params["b2"] - params["mean2"]) * s2
    s1 = s1.reshape(1, Cout).astype(dtype)
    b1 = b1.reshape(1, Cout).astype(dtype)
    s2 = s2.reshape(1, Cout).astype(dtype)
    b2 = b2.reshape(1, Cout).astype(dtype)
    w1 = w1.astype(dtype)
    w2 = w2.astype(dtype)

    # ---- conv1 + bn1 + relu  (computed at stride 1, subsampled afterwards) --
    Wp = W + 2
    xf = jnp.pad(x, ((0, 0), (1, 2), (1, 1), (0, 0)))             # (B,H+3,W+2,Cin)
    xf = xf.reshape(B, (H + 3) * Wp, Cin)
    y1_ext = _conv3x3_block(xf, w1, s1, b1, r_out=H * Wp, wp=Wp)
    y1 = y1_ext.reshape(B, H, Wp, Cout)[:, :, :W, :]              # drop junk cols
    y1 = y1[:, ::stride, ::stride, :]                             # conv1 stride
    Ho, Wo = y1.shape[1], y1.shape[2]
    Wp2 = Wo + 2

    # ---- shortcut (identity or 1x1 conv with stride) ----
    if use_1x1conv:
        xs = x[:, ::stride, ::stride, :]                          # (B,Ho,Wo,Cin)
        xs_ext = jnp.pad(xs, ((0, 0), (0, 0), (0, 2), (0, 0)))
        xs_ext = xs_ext.reshape(B, Ho * Wp2, Cin)
        w3 = params["w3"].reshape(Cout, Cin).T.astype(dtype)
        b3 = params["b3"].reshape(1, Cout).astype(dtype)
        sc_ext = _conv1x1_block(xs_ext, w3, b3)
    else:
        assert Cin == Cout and stride == 1, \
            "identity shortcut requires matching shapes (as in PyTorch)"
        sc_ext = jnp.pad(x, ((0, 0), (0, 0), (0, 2), (0, 0)))
        sc_ext = sc_ext.reshape(B, Ho * Wp2, Cout)

    # ---- conv2 + bn2 + residual add + relu ----
    y1f = jnp.pad(y1, ((0, 0), (1, 2), (1, 1), (0, 0)))           # (B,Ho+3,Wo+2,Cout)
    y1f = y1f.reshape(B, (Ho + 3) * Wp2, Cout)
    out_ext = _conv3x3_block(y1f, w2, s2, b2, r_out=Ho * Wp2, wp=Wp2,
                             shortcut=sc_ext)
    out = out_ext.reshape(B, Ho, Wp2, Cout)[:, :, :Wo, :]
    return jnp.transpose(out, (0, 3, 1, 2))                       # back to NCHW


# ----------------------------------------------------------------------------
# Pure-JAX reference (inference-mode BN), for verification only
# ----------------------------------------------------------------------------
def residual_reference(x, params, *, use_1x1conv=False, stride=1):
    prec = lax.Precision.HIGHEST

    def conv(z, w, b, s, pad):
        y = lax.conv_general_dilated(
            z, w, window_strides=(s, s), padding=pad,
            dimension_numbers=("NCHW", "OIHW", "NCHW"), precision=prec)
        return y + b[None, :, None, None]

    def bn(z, g, be, m, v):
        inv = g / jnp.sqrt(v + EPS)
        return (z - m[None, :, None, None]) * inv[None, :, None, None] \
            + be[None, :, None, None]

    y = jax.nn.relu(bn(conv(x, params["w1"], params["b1"], stride, ((1, 1), (1, 1))),
                       params["gamma1"], params["beta1"],
                       params["mean1"], params["var1"]))
    y = bn(conv(y, params["w2"], params["b2"], 1, ((1, 1), (1, 1))),
           params["gamma2"], params["beta2"], params["mean2"], params["var2"])
    if use_1x1conv:
        sc = conv(x, params["w3"], params["b3"], stride, ((0, 0), (0, 0)))
    else:
        sc = x
    return jax.nn.relu(y + sc)


# ----------------------------------------------------------------------------
# Demo / self-check
# ----------------------------------------------------------------------------
if __name__ == "__main__":
    root = jax.random.PRNGKey(0)
    kx, kp1, kp2 = jax.random.split(root, 3)
    B, Cin, H, W = 2, 4, 16, 16
    x = jax.random.normal(kx, (B, Cin, H, W), dtype=jnp.float32)

    def make_params(key, cin, cout, use_1x1conv):
        ks = jax.random.split(key, 14)
        p = {
            "w1": 0.3 * jax.random.normal(ks[0], (cout, cin, 3, 3), jnp.float32),
            "b1": 0.5 * jax.random.normal(ks[1], (cout,), jnp.float32),
            "w2": 0.3 * jax.random.normal(ks[2], (cout, cout, 3, 3), jnp.float32),
            "b2": 0.5 * jax.random.normal(ks[3], (cout,), jnp.float32),
            "gamma1": 1.0 + 0.2 * jax.random.normal(ks[4], (cout,), jnp.float32),
            "beta1": 0.3 * jax.random.normal(ks[5], (cout,), jnp.float32),
            "mean1": 0.3 * jax.random.normal(ks[6], (cout,), jnp.float32),
            "var1": 0.5 + jax.random.uniform(ks[7], (cout,), jnp.float32),
            "gamma2": 1.0 + 0.2 * jax.random.normal(ks[8], (cout,), jnp.float32),
            "beta2": 0.3 * jax.random.normal(ks[9], (cout,), jnp.float32),
            "mean2": 0.3 * jax.random.normal(ks[10], (cout,), jnp.float32),
            "var2": 0.5 + jax.random.uniform(ks[11], (cout,), jnp.float32),
        }
        if use_1x1conv:
            p["w3"] = 0.3 * jax.random.normal(ks[12], (cout, cin, 1, 1), jnp.float32)
            p["b3"] = 0.5 * jax.random.normal(ks[13], (cout,), jnp.float32)
        return p

    # Config 1: default Residual(in=out) — identity shortcut, stride 1.
    p1 = make_params(kp1, Cin, Cin, False)
    out1 = jax.block_until_ready(
        residual_forward(x, p1, use_1x1conv=False, stride=1))
    ref1 = residual_reference(x, p1, use_1x1conv=False, stride=1)
    assert out1.shape == (B, Cin, H, W), out1.shape
    assert out1.dtype == x.dtype
    assert bool(jnp.allclose(out1, ref1, rtol=5e-2, atol=5e-2)), \
        float(jnp.max(jnp.abs(out1 - ref1)))

    # Config 2: downsampling block — 1x1-conv shortcut, stride 2, Cout=8.
    Cout2 = 8
    p2 = make_params(kp2, Cin, Cout2, True)
    out2 = jax.block_until_ready(
        residual_forward(x, p2, use_1x1conv=True, stride=2))
    ref2 = residual_reference(x, p2, use_1x1conv=True, stride=2)
    assert out2.shape == (B, Cout2, H // 2, W // 2), out2.shape
    assert bool(jnp.allclose(out2, ref2, rtol=5e-2, atol=5e-2)), \
        float(jnp.max(jnp.abs(out2 - ref2)))

    print("KERNEL_OK")
</pallas_src>

<mosaic_0001>
module attributes {stable_mosaic.version = 11 : i64} {
  func.func @_conv3x3_bn_relu_kernel(%arg0: i32, %arg1: memref<1x342x4xf32, #tpu.memory_space<vmem>>, %arg2: memref<9x4x4xf32, #tpu.memory_space<vmem>>, %arg3: memref<1x4xf32, #tpu.memory_space<vmem>>, %arg4: memref<1x4xf32, #tpu.memory_space<vmem>>, %arg5: memref<1x288x4xf32, #tpu.memory_space<vmem>>) attributes {dimension_semantics = [#tpu.dimension_semantics<parallel>], iteration_bounds = array<i64: 2>, scalar_prefetch = 0 : i64, scratch_operands = 0 : i64, tpu.core_type = #tpu.core_type<tc>, window_params = [{transform_indices = @transform_0, window_bounds = array<i64: 1, 342, 4>}, {pipeline_mode = #tpu.pipeline_mode<synchronous>, transform_indices = @transform_1, window_bounds = array<i64: 9, 4, 4>}, {pipeline_mode = #tpu.pipeline_mode<synchronous>, transform_indices = @transform_2, window_bounds = array<i64: 1, 4>}, {pipeline_mode = #tpu.pipeline_mode<synchronous>, transform_indices = @transform_3, window_bounds = array<i64: 1, 4>}, {transform_indices = @transform_4, window_bounds = array<i64: 1, 288, 4>}]} {
    %cst = arith.constant 0.000000e+00 : f32
    %0 = vector.broadcast %cst : f32 to vector<288x4xf32>
    %c0 = arith.constant 0 : index
    %c0_0 = arith.constant 0 : index
    %c0_1 = arith.constant 0 : index
    %1 = vector.load %arg1[%c0, %c0_0, %c0_1] : memref<1x342x4xf32, #tpu.memory_space<vmem>>, vector<1x288x4xf32>
    %2 = vector.shape_cast %1 : vector<1x288x4xf32> to vector<288x4xf32>
    %c0_2 = arith.constant 0 : index
    %c0_3 = arith.constant 0 : index
    %c0_4 = arith.constant 0 : index
    %3 = vector.load %arg2[%c0_2, %c0_3, %c0_4] : memref<9x4x4xf32, #tpu.memory_space<vmem>>, vector<1x4x4xf32>
    %4 = vector.shape_cast %3 : vector<1x4x4xf32> to vector<4x4xf32>
    %cst_5 = arith.constant dense<0.000000e+00> : vector<288x4xf32>
    %5 = tpu.matmul %2, %4, %cst_5 {dimension_numbers = #tpu.dot_dimension_numbers<[1], [0], [0], [1], [0, 0, 1, 1], [], []>} : vector<288x4xf32>, vector<4x4xf32>, vector<288x4xf32> -> vector<288x4xf32>
    %6 = arith.addf %0, %5 : vector<288x4xf32>
    %c0_6 = arith.constant 0 : index
    %c1 = arith.constant 1 : index
    %c0_7 = arith.constant 0 : index
    %7 = vector.load %arg1[%c0_6, %c1, %c0_7] : memref<1x342x4xf32, #tpu.memory_space<vmem>>, vector<1x288x4xf32>
    %8 = vector.shape_cast %7 : vector<1x288x4xf32> to vector<288x4xf32>
    %c1_8 = arith.constant 1 : index
    %c0_9 = arith.constant 0 : index
    %c0_10 = arith.constant 0 : index
    %9 = vector.load %arg2[%c1_8, %c0_9, %c0_10] : memref<9x4x4xf32, #tpu.memory_space<vmem>>, vector<1x4x4xf32>
    %10 = vector.shape_cast %9 : vector<1x4x4xf32> to vector<4x4xf32>
    %cst_11 = arith.constant dense<0.000000e+00> : vector<288x4xf32>
    %11 = tpu.matmul %8, %10, %cst_11 {dimension_numbers = #tpu.dot_dimension_numbers<[1], [0], [0], [1], [0, 0, 1, 1], [], []>} : vector<288x4xf32>, vector<4x4xf32>, vector<288x4xf32> -> vector<288x4xf32>
    %12 = arith.addf %6, %11 : vector<288x4xf32>
    %c0_12 = arith.constant 0 : index
    %c2 = arith.constant 2 : index
    %c0_13 = arith.constant 0 : index
    %13 = vector.load %arg1[%c0_12, %c2, %c0_13] : memref<1x342x4xf32, #tpu.memory_space<vmem>>, vector<1x288x4xf32>
    %14 = vector.shape_cast %13 : vector<1x288x4xf32> to vector<288x4xf32>
    %c2_14 = arith.constant 2 : index
    %c0_15 = arith.constant 0 : index
    %c0_16 = arith.constant 0 : index
    %15 = vector.load %arg2[%c2_14, %c0_15, %c0_16] : memref<9x4x4xf32, #tpu.memory_space<vmem>>, vector<1x4x4xf32>
    %16 = vector.shape_cast %15 : vector<1x4x4xf32> to vector<4x4xf32>
    %cst_17 = arith.constant dense<0.000000e+00> : vector<288x4xf32>
    %17 = tpu.matmul %14, %16, %cst_17 {dimension_numbers = #tpu.dot_dimension_numbers<[1], [0], [0], [1], [0, 0, 1, 1], [], []>} : vector<288x4xf32>, vector<4x4xf32>, vector<288x4xf32> -> vector<288x4xf32>
    %18 = arith.addf %12, %17 : vector<288x4xf32>
    %c0_18 = arith.constant 0 : index
    %c18 = arith.constant 18 : index
    %c0_19 = arith.constant 0 : index
    %19 = vector.load %arg1[%c0_18, %c18, %c0_19] : memref<1x342x4xf32, #tpu.memory_space<vmem>>, vector<1x288x4xf32>
    %20 = vector.shape_cast %19 : vector<1x288x4xf32> to vector<288x4xf32>
    %c3 = arith.constant 3 : index
    %c0_20 = arith.constant 0 : index
    %c0_21 = arith.constant 0 : index
    %21 = vector.load %arg2[%c3, %c0_20, %c0_21] : memref<9x4x4xf32, #tpu.memory_space<vmem>>, vector<1x4x4xf32>
    %22 = vector.shape_cast %21 : vector<1x4x4xf32> to vector<4x4xf32>
    %cst_22 = arith.constant dense<0.000000e+00> : vector<288x4xf32>
    %23 = tpu.matmul %20, %22, %cst_22 {dimension_numbers = #tpu.dot_dimension_numbers<[1], [0], [0], [1], [0, 0, 1, 1], [], []>} : vector<288x4xf32>, vector<4x4xf32>, vector<288x4xf32> -> vector<288x4xf32>
    %24 = arith.addf %18, %23 : vector<288x4xf32>
    %c0_23 = arith.constant 0 : index
    %c19 = arith.constant 19 : index
    %c0_24 = arith.constant 0 : index
    %25 = vector.load %arg1[%c0_23, %c19, %c0_24] : memref<1x342x4xf32, #tpu.memory_space<vmem>>, vector<1x288x4xf32>
    %26 = vector.shape_cast %25 : vector<1x288x4xf32> to vector<288x4xf32>
    %c4 = arith.constant 4 : index
    %c0_25 = arith.constant 0 : index
    %c0_26 = arith.constant 0 : index
    %27 = vector.load %arg2[%c4, %c0_25, %c0_26] : memref<9x4x4xf32, #tpu.memory_space<vmem>>, vector<1x4x4xf32>
    %28 = vector.shape_cast %27 : vector<1x4x4xf32> to vector<4x4xf32>
    %cst_27 = arith.constant dense<0.000000e+00> : vector<288x4xf32>
    %29 = tpu.matmul %26, %28, %cst_27 {dimension_numbers = #tpu.dot_dimension_numbers<[1], [0], [0], [1], [0, 0, 1, 1], [], []>} : vector<288x4xf32>, vector<4x4xf32>, vector<288x4xf32> -> vector<288x4xf32>
    %30 = arith.addf %24, %29 : vector<288x4xf32>
    %c0_28 = arith.constant 0 : index
    %c20 = arith.constant 20 : index
    %c0_29 = arith.constant 0 : index
    %31 = vector.load %arg1[%c0_28, %c20, %c0_29] : memref<1x342x4xf32, #tpu.memory_space<vmem>>, vector<1x288x4xf32>
    %32 = vector.shape_cast %31 : vector<1x288x4xf32> to vector<288x4xf32>
    %c5 = arith.constant 5 : index
    %c0_30 = arith.constant 0 : index
    %c0_31 = arith.constant 0 : index
    %33 = vector.load %arg2[%c5, %c0_30, %c0_31] : memref<9x4x4xf32, #tpu.memory_space<vmem>>, vector<1x4x4xf32>
    %34 = vector.shape_cast %33 : vector<1x4x4xf32> to vector<4x4xf32>
    %cst_32 = arith.constant dense<0.000000e+00> : vector<288x4xf32>
    %35 = tpu.matmul %32, %34, %cst_32 {dimension_numbers = #tpu.dot_dimension_numbers<[1], [0], [0], [1], [0, 0, 1, 1], [], []>} : vector<288x4xf32>, vector<4x4xf32>, vector<288x4xf32> -> vector<288x4xf32>
    %36 = arith.addf %30, %35 : vector<288x4xf32>
    %c0_33 = arith.constant 0 : index
    %c36 = arith.constant 36 : index
    %c0_34 = arith.constant 0 : index
    %37 = vector.load %arg1[%c0_33, %c36, %c0_34] : memref<1x342x4xf32, #tpu.memory_space<vmem>>, vector<1x288x4xf32>
    %38 = vector.shape_cast %37 : vector<1x288x4xf32> to vector<288x4xf32>
    %c6 = arith.constant 6 : index
    %c0_35 = arith.constant 0 : index
    %c0_36 = arith.constant 0 : index
    %39 = vector.load %arg2[%c6, %c0_35, %c0_36] : memref<9x4x4xf32, #tpu.memory_space<vmem>>, vector<1x4x4xf32>
    %40 = vector.shape_cast %39 : vector<1x4x4xf32> to vector<4x4xf32>
    %cst_37 = arith.constant dense<0.000000e+00> : vector<288x4xf32>
    %41 = tpu.matmul %38, %40, %cst_37 {dimension_numbers = #tpu.dot_dimension_numbers<[1], [0], [0], [1], [0, 0, 1, 1], [], []>} : vector<288x4xf32>, vector<4x4xf32>, vector<288x4xf32> -> vector<288x4xf32>
    %42 = arith.addf %36, %41 : vector<288x4xf32>
    %c0_38 = arith.constant 0 : index
    %c37 = arith.constant 37 : index
    %c0_39 = arith.constant 0 : index
    %43 = vector.load %arg1[%c0_38, %c37, %c0_39] : memref<1x342x4xf32, #tpu.memory_space<vmem>>, vector<1x288x4xf32>
    %44 = vector.shape_cast %43 : vector<1x288x4xf32> to vector<288x4xf32>
    %c7 = arith.constant 7 : index
    %c0_40 = arith.constant 0 : index
    %c0_41 = arith.constant 0 : index
    %45 = vector.load %arg2[%c7, %c0_40, %c0_41] : memref<9x4x4xf32, #tpu.memory_space<vmem>>, vector<1x4x4xf32>
    %46 = vector.shape_cast %45 : vector<1x4x4xf32> to vector<4x4xf32>
    %cst_42 = arith.constant dense<0.000000e+00> : vector<288x4xf32>
    %47 = tpu.matmul %44, %46, %cst_42 {dimension_numbers = #tpu.dot_dimension_numbers<[1], [0], [0], [1], [0, 0, 1, 1], [], []>} : vector<288x4xf32>, vector<4x4xf32>, vector<288x4xf32> -> vector<288x4xf32>
    %48 = arith.addf %42, %47 : vector<288x4xf32>
    %c0_43 = arith.constant 0 : index
    %c38 = arith.constant 38 : index
    %c0_44 = arith.constant 0 : index
    %49 = vector.load %arg1[%c0_43, %c38, %c0_44] : memref<1x342x4xf32, #tpu.memory_space<vmem>>, vector<1x288x4xf32>
    %50 = vector.shape_cast %49 : vector<1x288x4xf32> to vector<288x4xf32>
    %c8 = arith.constant 8 : index
    %c0_45 = arith.constant 0 : index
    %c0_46 = arith.constant 0 : index
    %51 = vector.load %arg2[%c8, %c0_45, %c0_46] : memref<9x4x4xf32, #tpu.memory_space<vmem>>, vector<1x4x4xf32>
    %52 = vector.shape_cast %51 : vector<1x4x4xf32> to vector<4x4xf32>
    %cst_47 = arith.constant dense<0.000000e+00> : vector<288x4xf32>
    %53 = tpu.matmul %50, %52, %cst_47 {dimension_numbers = #tpu.dot_dimension_numbers<[1], [0], [0], [1], [0, 0, 1, 1], [], []>} : vector<288x4xf32>, vector<4x4xf32>, vector<288x4xf32> -> vector<288x4xf32>
    %54 = arith.addf %48, %53 : vector<288x4xf32>
    %c0_48 = arith.constant 0 : index
    %c0_49 = arith.constant 0 : index
    %55 = vector.load %arg3[%c0_48, %c0_49] : memref<1x4xf32, #tpu.memory_space<vmem>>, vector<1x4xf32>
    %56 = vector.broadcast %55 : vector<1x4xf32> to vector<288x4xf32>
    %57 = arith.mulf %54, %56 : vector<288x4xf32>
    %c0_50 = arith.constant 0 : index
    %c0_51 = arith.constant 0 : index
    %58 = vector.load %arg4[%c0_50, %c0_51] : memref<1x4xf32, #tpu.memory_space<vmem>>, vector<1x4xf32>
    %59 = vector.broadcast %58 : vector<1x4xf32> to vector<288x4xf32>
    %60 = arith.addf %57, %59 : vector<288x4xf32>
    %cst_52 = arith.constant 0.000000e+00 : f32
    %61 = vector.broadcast %cst_52 : f32 to vector<288x4xf32>
    %62 = arith.maximumf %60, %61 : vector<288x4xf32>
    %c0_53 = arith.constant 0 : index
    %c0_54 = arith.constant 0 : index
    %c0_55 = arith.constant 0 : index
    %63 = vector.load %arg5[%c0_53, %c0_54, %c0_55] : memref<1x288x4xf32, #tpu.memory_space<vmem>>, vector<1x288x4xf32>
    %64 = vector.shape_cast %63 : vector<1x288x4xf32> to vector<288x4xf32>
    %65 = vector.shape_cast %62 : vector<288x4xf32> to vector<1x288x4xf32>
    tpu.vector_store %arg5[%c0_53, %c0_54, %c0_55], %65 {strides = array<i32>} : memref<1x288x4xf32, #tpu.memory_space<vmem>>, vector<1x288x4xf32>,
    return
  }
  func.func @transform_0(%arg0: i32) -> (i32, i32, i32) {
    %c0_i32 = arith.constant 0 : i32
    %c0_i32_0 = arith.constant 0 : i32
    %c0_i32_1 = arith.constant 0 : i32
    return %arg0, %c0_i32, %c0_i32_0 : i32, i32, i32
  }
  func.func @transform_1(%arg0: i32) -> (i32, i32, i32) {
    %c0_i32 = arith.constant 0 : i32
    %c0_i32_0 = arith.constant 0 : i32
    %c0_i32_1 = arith.constant 0 : i32
    %c0_i32_2 = arith.constant 0 : i32
    return %c0_i32, %c0_i32_0, %c0_i32_1 : i32, i32, i32
  }
  func.func @transform_2(%arg0: i32) -> (i32, i32) {
    %c0_i32 = arith.constant 0 : i32
    %c0_i32_0 = arith.constant 0 : i32
    %c0_i32_1 = arith.constant 0 : i32
    return %c0_i32, %c0_i32_0 : i32, i32
  }
  func.func @transform_3(%arg0: i32) -> (i32, i32) {
    %c0_i32 = arith.constant 0 : i32
    %c0_i32_0 = arith.constant 0 : i32
    %c0_i32_1 = arith.constant 0 : i32
    return %c0_i32, %c0_i32_0 : i32, i32
  }
  func.func @transform_4(%arg0: i32) -> (i32, i32, i32) {
    %c0_i32 = arith.constant 0 : i32
    %c0_i32_0 = arith.constant 0 : i32
    %c0_i32_1 = arith.constant 0 : i32
    return %arg0, %c0_i32, %c0_i32_0 : i32, i32, i32
  }
}

module attributes {stable_mosaic.version = 11 : i64} {
  func.func @_conv3x3_bn_add_relu_kernel(%arg0: i32, %arg1: memref<1x342x4xf32, #tpu.memory_space<vmem>>, %arg2: memref<9x4x4xf32, #tpu.memory_space<vmem>>, %arg3: memref<1x4xf32, #tpu.memory_space<vmem>>, %arg4: memref<1x4xf32, #tpu.memory_space<vmem>>, %arg5: memref<1x288x4xf32, #tpu.memory_space<vmem>>, %arg6: memref<1x288x4xf32, #tpu.memory_space<vmem>>) attributes {dimension_semantics = [#tpu.dimension_semantics<parallel>], iteration_bounds = array<i64: 2>, scalar_prefetch = 0 : i64, scratch_operands = 0 : i64, tpu.core_type = #tpu.core_type<tc>, window_params = [{transform_indices = @transform_0, window_bounds = array<i64: 1, 342, 4>}, {pipeline_mode = #tpu.pipeline_mode<synchronous>, transform_indices = @transform_1, window_bounds = array<i64: 9, 4, 4>}, {pipeline_mode = #tpu.pipeline_mode<synchronous>, transform_indices = @transform_2, window_bounds = array<i64: 1, 4>}, {pipeline_mode = #tpu.pipeline_mode<synchronous>, transform_indices = @transform_3, window_bounds = array<i64: 1, 4>}, {transform_indices = @transform_4, window_bounds = array<i64: 1, 288, 4>}, {transform_indices = @transform_5, window_bounds = array<i64: 1, 288, 4>}]} {
    %cst = arith.constant 0.000000e+00 : f32
    %0 = vector.broadcast %cst : f32 to vector<288x4xf32>
    %c0 = arith.constant 0 : index
    %c0_0 = arith.constant 0 : index
    %c0_1 = arith.constant 0 : index
    %1 = vector.load %arg1[%c0, %c0_0, %c0_1] : memref<1x342x4xf32, #tpu.memory_space<vmem>>, vector<1x288x4xf32>
    %2 = vector.shape_cast %1 : vector<1x288x4xf32> to vector<288x4xf32>
    %c0_2 = arith.constant 0 : index
    %c0_3 = arith.constant 0 : index
    %c0_4 = arith.constant 0 : index
    %3 = vector.load %arg2[%c0_2, %c0_3, %c0_4] : memref<9x4x4xf32, #tpu.memory_space<vmem>>, vector<1x4x4xf32>
    %4 = vector.shape_cast %3 : vector<1x4x4xf32> to vector<4x4xf32>
    %cst_5 = arith.constant dense<0.000000e+00> : vector<288x4xf32>
    %5 = tpu.matmul %2, %4, %cst_5 {dimension_numbers = #tpu.dot_dimension_numbers<[1], [0], [0], [1], [0, 0, 1, 1], [], []>} : vector<288x4xf32>, vector<4x4xf32>, vector<288x4xf32> -> vector<288x4xf32>
    %6 = arith.addf %0, %5 : vector<288x4xf32>
    %c0_6 = arith.constant 0 : index
    %c1 = arith.constant 1 : index
    %c0_7 = arith.constant 0 : index
    %7 = vector.load %arg1[%c0_6, %c1, %c0_7] : memref<1x342x4xf32, #tpu.memory_space<vmem>>, vector<1x288x4xf32>
    %8 = vector.shape_cast %7 : vector<1x288x4xf32> to vector<288x4xf32>
    %c1_8 = arith.constant 1 : index
    %c0_9 = arith.constant 0 : index
    %c0_10 = arith.constant 0 : index
    %9 = vector.load %arg2[%c1_8, %c0_9, %c0_10] : memref<9x4x4xf32, #tpu.memory_space<vmem>>, vector<1x4x4xf32>
    %10 = vector.shape_cast %9 : vector<1x4x4xf32> to vector<4x4xf32>
    %cst_11 = arith.constant dense<0.000000e+00> : vector<288x4xf32>
    %11 = tpu.matmul %8, %10, %cst_11 {dimension_numbers = #tpu.dot_dimension_numbers<[1], [0], [0], [1], [0, 0, 1, 1], [], []>} : vector<288x4xf32>, vector<4x4xf32>, vector<288x4xf32> -> vector<288x4xf32>
    %12 = arith.addf %6, %11 : vector<288x4xf32>
    %c0_12 = arith.constant 0 : index
    %c2 = arith.constant 2 : index
    %c0_13 = arith.constant 0 : index
    %13 = vector.load %arg1[%c0_12, %c2, %c0_13] : memref<1x342x4xf32, #tpu.memory_space<vmem>>, vector<1x288x4xf32>
    %14 = vector.shape_cast %13 : vector<1x288x4xf32> to vector<288x4xf32>
    %c2_14 = arith.constant 2 : index
    %c0_15 = arith.constant 0 : index
    %c0_16 = arith.constant 0 : index
    %15 = vector.load %arg2[%c2_14, %c0_15, %c0_16] : memref<9x4x4xf32, #tpu.memory_space<vmem>>, vector<1x4x4xf32>
    %16 = vector.shape_cast %15 : vector<1x4x4xf32> to vector<4x4xf32>
    %cst_17 = arith.constant dense<0.000000e+00> : vector<288x4xf32>
    %17 = tpu.matmul %14, %16, %cst_17 {dimension_numbers = #tpu.dot_dimension_numbers<[1], [0], [0], [1], [0, 0, 1, 1], [], []>} : vector<288x4xf32>, vector<4x4xf32>, vector<288x4xf32> -> vector<288x4xf32>
    %18 = arith.addf %12, %17 : vector<288x4xf32>
    %c0_18 = arith.constant 0 : index
    %c18 = arith.constant 18 : index
    %c0_19 = arith.constant 0 : index
    %19 = vector.load %arg1[%c0_18, %c18, %c0_19] : memref<1x342x4xf32, #tpu.memory_space<vmem>>, vector<1x288x4xf32>
    %20 = vector.shape_cast %19 : vector<1x288x4xf32> to vector<288x4xf32>
    %c3 = arith.constant 3 : index
    %c0_20 = arith.constant 0 : index
    %c0_21 = arith.constant 0 : index
    %21 = vector.load %arg2[%c3, %c0_20, %c0_21] : memref<9x4x4xf32, #tpu.memory_space<vmem>>, vector<1x4x4xf32>
    %22 = vector.shape_cast %21 : vector<1x4x4xf32> to vector<4x4xf32>
    %cst_22 = arith.constant dense<0.000000e+00> : vector<288x4xf32>
    %23 = tpu.matmul %20, %22, %cst_22 {dimension_numbers = #tpu.dot_dimension_numbers<[1], [0], [0], [1], [0, 0, 1, 1], [], []>} : vector<288x4xf32>, vector<4x4xf32>, vector<288x4xf32> -> vector<288x4xf32>
    %24 = arith.addf %18, %23 : vector<288x4xf32>
    %c0_23 = arith.constant 0 : index
    %c19 = arith.constant 19 : index
    %c0_24 = arith.constant 0 : index
    %25 = vector.load %arg1[%c0_23, %c19, %c0_24] : memref<1x342x4xf32, #tpu.memory_space<vmem>>, vector<1x288x4xf32>
    %26 = vector.shape_cast %25 : vector<1x288x4xf32> to vector<288x4xf32>
    %c4 = arith.constant 4 : index
    %c0_25 = arith.constant 0 : index
    %c0_26 = arith.constant 0 : index
    %27 = vector.load %arg2[%c4, %c0_25, %c0_26] : memref<9x4x4xf32, #tpu.memory_space<vmem>>, vector<1x4x4xf32>
    %28 = vector.shape_cast %27 : vector<1x4x4xf32> to vector<4x4xf32>
    %cst_27 = arith.constant dense<0.000000e+00> : vector<288x4xf32>
    %29 = tpu.matmul %26, %28, %cst_27 {dimension_numbers = #tpu.dot_dimension_numbers<[1], [0], [0], [1], [0, 0, 1, 1], [], []>} : vector<288x4xf32>, vector<4x4xf32>, vector<288x4xf32> -> vector<288x4xf32>
    %30 = arith.addf %24, %29 : vector<288x4xf32>
    %c0_28 = arith.constant 0 : index
    %c20 = arith.constant 20 : index
    %c0_29 = arith.constant 0 : index
    %31 = vector.load %arg1[%c0_28, %c20, %c0_29] : memref<1x342x4xf32, #tpu.memory_space<vmem>>, vector<1x288x4xf32>
    %32 = vector.shape_cast %31 : vector<1x288x4xf32> to vector<288x4xf32>
    %c5 = arith.constant 5 : index
    %c0_30 = arith.constant 0 : index
    %c0_31 = arith.constant 0 : index
    %33 = vector.load %arg2[%c5, %c0_30, %c0_31] : memref<9x4x4xf32, #tpu.memory_space<vmem>>, vector<1x4x4xf32>
    %34 = vector.shape_cast %33 : vector<1x4x4xf32> to vector<4x4xf32>
    %cst_32 = arith.constant dense<0.000000e+00> : vector<288x4xf32>
    %35 = tpu.matmul %32, %34, %cst_32 {dimension_numbers = #tpu.dot_dimension_numbers<[1], [0], [0], [1], [0, 0, 1, 1], [], []>} : vector<288x4xf32>, vector<4x4xf32>, vector<288x4xf32> -> vector<288x4xf32>
    %36 = arith.addf %30, %35 : vector<288x4xf32>
    %c0_33 = arith.constant 0 : index
    %c36 = arith.constant 36 : index
    %c0_34 = arith.constant 0 : index
    %37 = vector.load %arg1[%c0_33, %c36, %c0_34] : memref<1x342x4xf32, #tpu.memory_space<vmem>>, vector<1x288x4xf32>
    %38 = vector.shape_cast %37 : vector<1x288x4xf32> to vector<288x4xf32>
    %c6 = arith.constant 6 : index
    %c0_35 = arith.constant 0 : index
    %c0_36 = arith.constant 0 : index
    %39 = vector.load %arg2[%c6, %c0_35, %c0_36] : memref<9x4x4xf32, #tpu.memory_space<vmem>>, vector<1x4x4xf32>
    %40 = vector.shape_cast %39 : vector<1x4x4xf32> to vector<4x4xf32>
    %cst_37 = arith.constant dense<0.000000e+00> : vector<288x4xf32>
    %41 = tpu.matmul %38, %40, %cst_37 {dimension_numbers = #tpu.dot_dimension_numbers<[1], [0], [0], [1], [0, 0, 1, 1], [], []>} : vector<288x4xf32>, vector<4x4xf32>, vector<288x4xf32> -> vector<288x4xf32>
    %42 = arith.addf %36, %41 : vector<288x4xf32>
    %c0_38 = arith.constant 0 : index
    %c37 = arith.constant 37 : index
    %c0_39 = arith.constant 0 : index
    %43 = vector.load %arg1[%c0_38, %c37, %c0_39] : memref<1x342x4xf32, #tpu.memory_space<vmem>>, vector<1x288x4xf32>
    %44 = vector.shape_cast %43 : vector<1x288x4xf32> to vector<288x4xf32>
    %c7 = arith.constant 7 : index
    %c0_40 = arith.constant 0 : index
    %c0_41 = arith.constant 0 : index
    %45 = vector.load %arg2[%c7, %c0_40, %c0_41] : memref<9x4x4xf32, #tpu.memory_space<vmem>>, vector<1x4x4xf32>
    %46 = vector.shape_cast %45 : vector<1x4x4xf32> to vector<4x4xf32>
    %cst_42 = arith.constant dense<0.000000e+00> : vector<288x4xf32>
    %47 = tpu.matmul %44, %46, %cst_42 {dimension_numbers = #tpu.dot_dimension_numbers<[1], [0], [0], [1], [0, 0, 1, 1], [], []>} : vector<288x4xf32>, vector<4x4xf32>, vector<288x4xf32> -> vector<288x4xf32>
    %48 = arith.addf %42, %47 : vector<288x4xf32>
    %c0_43 = arith.constant 0 : index
    %c38 = arith.constant 38 : index
    %c0_44 = arith.constant 0 : index
    %49 = vector.load %arg1[%c0_43, %c38, %c0_44] : memref<1x342x4xf32, #tpu.memory_space<vmem>>, vector<1x288x4xf32>
    %50 = vector.shape_cast %49 : vector<1x288x4xf32> to vector<288x4xf32>
    %c8 = arith.constant 8 : index
    %c0_45 = arith.constant 0 : index
    %c0_46 = arith.constant 0 : index
    %51 = vector.load %arg2[%c8, %c0_45, %c0_46] : memref<9x4x4xf32, #tpu.memory_space<vmem>>, vector<1x4x4xf32>
    %52 = vector.shape_cast %51 : vector<1x4x4xf32> to vector<4x4xf32>
    %cst_47 = arith.constant dense<0.000000e+00> : vector<288x4xf32>
    %53 = tpu.matmul %50, %52, %cst_47 {dimension_numbers = #tpu.dot_dimension_numbers<[1], [0], [0], [1], [0, 0, 1, 1], [], []>} : vector<288x4xf32>, vector<4x4xf32>, vector<288x4xf32> -> vector<288x4xf32>
    %54 = arith.addf %48, %53 : vector<288x4xf32>
    %c0_48 = arith.constant 0 : index
    %c0_49 = arith.constant 0 : index
    %55 = vector.load %arg3[%c0_48, %c0_49] : memref<1x4xf32, #tpu.memory_space<vmem>>, vector<1x4xf32>
    %56 = vector.broadcast %55 : vector<1x4xf32> to vector<288x4xf32>
    %57 = arith.mulf %54, %56 : vector<288x4xf32>
    %c0_50 = arith.constant 0 : index
    %c0_51 = arith.constant 0 : index
    %58 = vector.load %arg4[%c0_50, %c0_51] : memref<1x4xf32, #tpu.memory_space<vmem>>, vector<1x4xf32>
    %59 = vector.broadcast %58 : vector<1x4xf32> to vector<288x4xf32>
    %60 = arith.addf %57, %59 : vector<288x4xf32>
    %c0_52 = arith.constant 0 : index
    %c0_53 = arith.constant 0 : index
    %c0_54 = arith.constant 0 : index
    %61 = vector.load %arg5[%c0_52, %c0_53, %c0_54] : memref<1x288x4xf32, #tpu.memory_space<vmem>>, vector<1x288x4xf32>
    %62 = vector.shape_cast %61 : vector<1x288x4xf32> to vector<288x4xf32>
    %63 = arith.addf %60, %62 : vector<288x4xf32>
    %cst_55 = arith.constant 0.000000e+00 : f32
    %64 = vector.broadcast %cst_55 : f32 to vector<288x4xf32>
    %65 = arith.maximumf %63, %64 : vector<288x4xf32>
    %c0_56 = arith.constant 0 : index
    %c0_57 = arith.constant 0 : index
    %c0_58 = arith.constant 0 : index
    %66 = vector.load %arg6[%c0_56, %c0_57, %c0_58] : memref<1x288x4xf32, #tpu.memory_space<vmem>>, vector<1x288x4xf32>
    %67 = vector.shape_cast %66 : vector<1x288x4xf32> to vector<288x4xf32>
    %68 = vector.shape_cast %65 : vector<288x4xf32> to vector<1x288x4xf32>
    tpu.vector_store %arg6[%c0_56, %c0_57, %c0_58], %68 {strides = array<i32>} : memref<1x288x4xf32, #tpu.memory_space<vmem>>, vector<1x288x4xf32>,
    return
  }
  func.func @transform_0(%arg0: i32) -> (i32, i32, i32) {
    %c0_i32 = arith.constant 0 : i32
    %c0_i32_0 = arith.constant 0 : i32
    %c0_i32_1 = arith.constant 0 : i32
    return %arg0, %c0_i32, %c0_i32_0 : i32, i32, i32
  }
  func.func @transform_1(%arg0: i32) -> (i32, i32, i32) {
    %c0_i32 = arith.constant 0 : i32
    %c0_i32_0 = arith.constant 0 : i32
    %c0_i32_1 = arith.constant 0 : i32
    %c0_i32_2 = arith.constant 0 : i32
    return %c0_i32, %c0_i32_0, %c0_i32_1 : i32, i32, i32
  }
  func.func @transform_2(%arg0: i32) -> (i32, i32) {
    %c0_i32 = arith.constant 0 : i32
    %c0_i32_0 = arith.constant 0 : i32
    %c0_i32_1 = arith.constant 0 : i32
    return %c0_i32, %c0_i32_0 : i32, i32
  }
  func.func @transform_3(%arg0: i32) -> (i32, i32) {
    %c0_i32 = arith.constant 0 : i32
    %c0_i32_0 = arith.constant 0 : i32
    %c0_i32_1 = arith.constant 0 : i32
    return %c0_i32, %c0_i32_0 : i32, i32
  }
  func.func @transform_4(%arg0: i32) -> (i32, i32, i32) {
    %c0_i32 = arith.constant 0 : i32
    %c0_i32_0 = arith.constant 0 : i32
    %c0_i32_1 = arith.constant 0 : i32
    return %arg0, %c0_i32, %c0_i32_0 : i32, i32, i32
  }
  func.func @transform_5(%arg0: i32) -> (i32, i32, i32) {
    %c0_i32 = arith.constant 0 : i32
    %c0_i32_0 = arith.constant 0 : i32
    %c0_i32_1 = arith.constant 0 : i32
    return %arg0, %c0_i32, %c0_i32_0 : i32, i32, i32
  }
}

</mosaic_0001>

<llo_original>
// kernel: residual_forward.2
$region0: #{residual_forward.2}
  #allocation0 [shape = 'u32[]', space=smem, size = 0x4, offset = 0x4, fixed_abs, tag = 'smem constant byte address 0x4 - core index']
  #allocation1 [shape = 'u32[72,128]{1,0:T(1,128)}', space=vmem, size = 0x9000, scoped, tag = 'internal scratch']
  %s0 = inlined_call_operand.vmem [shape: f32[2,342,4], index: 0, kind: input, shape index: {}]
  %s1 = inlined_call_operand.vmem [shape: f32[9,4,4], index: 1, kind: input, shape index: {}]
  %s2 = inlined_call_operand.vmem [shape: f32[1,4], index: 2, kind: input, shape index: {}]
  %s3 = inlined_call_operand.vmem [shape: f32[1,4], index: 3, kind: input, shape index: {}]
  %s4 = inlined_call_operand.vmem [shape: f32[2,288,4], index: 4, kind: output, shape index: {}]
  %s5 = sld [smem:[#allocation0]]
  $region49: #{residual_forward.2} parent=0
    _
  %s7 = ssub.s32 1, %s5
  %s8 = scalar_select 0, %s7, %s5
  loop: start=0, step=1, limit=4
  $region2: #{residual_forward.2} parent=0 // loop_pre_header
    _
  $region3: #{residual_forward.2} parent=0 // loop_header
    %s10 = sphi 0, %s14
    %p11 = scmp.ge.s32.totalorder %s10, 4
    %s20 = sphi 0, %s22
    %s23 = sphi 0, %s20
    %s24 = sphi 0, %s23
    %s40 = sphi 0, %s24
    %s44 = sphi 0, %s44
    %s46 = sphi 0, %s44
    %s47 = sphi 0, %s46
    %s61 = sphi 0, %s47
    %s65 = sphi 0, %s65
    %s67 = sphi 0, %s65
    %s68 = sphi 0, %s67
    %s82 = sphi 0, %s68
    %s86 = sphi 0, %s86
    %s88 = sphi 0, %s86
    %s89 = sphi 0, %s88
    %s103 = sphi 0, %s89
    %s109 = sphi 0, %s111
    %s112 = sphi 0, %s109
    %s113 = sphi 0, %s112
    %s129 = sphi 0, %s113
  $region4: #{residual_forward.2} parent=0 // loop_header_branch
    %13 = sbr.rel (%p11) target = $region8
  $region5: #{residual_forward.2} parent=0 // loop_body
    %s15 = ssub.s32 %s10, 1
    %s16 = ssub.s32 %s10, 2
    %s17 = sadd.s32 %s10, 1
    %s18 = ssub.s32 %s10, %s17
    %p19 = scmp.eq.s32.totalorder %s18, 0
    %s21 = sadd.s32 %s20, 1
    %s22 = scalar_select %p19, %s20, %s21
    %p25 = pneg %p19
    %p26 = scmp.eq.s32.totalorder %s10, 1
    %p27 = por %p25, %p26
    %p28 = scmp.ne.s32.totalorder %s20, %s23
    %p29 = scmp.eq.s32.totalorder %s10, 0
    %p30 = por %p28, %p29
    %p31 = scmp.ne.s32.totalorder %s20, %s23
    %p32 = scmp.eq.s32.totalorder %s15, 1
    %p33 = por %p31, %p32
    %p34 = scmp.ne.s32.totalorder %s23, %s24
    %p35 = scmp.eq.s32.totalorder %s15, 0
    %p36 = por %p34, %p35
    %p37 = scmp.ne.s32.totalorder %s23, %s24
    %p38 = scmp.eq.s32.totalorder %s16, 1
    %p39 = por %p37, %p38
    %p41 = scmp.ne.s32.totalorder %s24, %s40
    %p42 = scmp.eq.s32.totalorder %s16, 0
    %p43 = por %p41, %p42
    %s45 = sadd.s32 %s44, 1
    %p48 = scmp.eq.s32.totalorder %s10, 1
    %p49 = scmp.ne.s32.totalorder %s44, %s46
    %p50 = scmp.eq.s32.totalorder %s10, 0
    %p51 = por %p49, %p50
    %p52 = scmp.ne.s32.totalorder %s44, %s46
    %p53 = scmp.eq.s32.totalorder %s15, 1
    %p54 = por %p52, %p53
    %p55 = scmp.ne.s32.totalorder %s46, %s47
    %p56 = scmp.eq.s32.totalorder %s15, 0
    %p57 = por %p55, %p56
    %p58 = scmp.ne.s32.totalorder %s46, %s47
    %p59 = scmp.eq.s32.totalorder %s16, 1
    %p60 = por %p58, %p59
    %p62 = scmp.ne.s32.totalorder %s47, %s61
    %p63 = scmp.eq.s32.totalorder %s16, 0
    %p64 = por %p62, %p63
    %s66 = sadd.s32 %s65, 1
    %p69 = scmp.eq.s32.totalorder %s10, 1
    %p70 = scmp.ne.s32.totalorder %s65, %s67
    %p71 = scmp.eq.s32.totalorder %s10, 0
    %p72 = por %p70, %p71
    %p73 = scmp.ne.s32.totalorder %s65, %s67
    %p74 = scmp.eq.s32.totalorder %s15, 1
    %p75 = por %p73, %p74
    %p76 = scmp.ne.s32.totalorder %s67, %s68
    %p77 = scmp.eq.s32.totalorder %s15, 0
    %p78 = por %p76, %p77
    %p79 = scmp.ne.s32.totalorder %s67, %s68
    %p80 = scmp.eq.s32.totalorder %s16, 1
    %p81 = por %p79, %p80
    %p83 = scmp.ne.s32.totalorder %s68, %s82
    %p84 = scmp.eq.s32.totalorder %s16, 0
    %p85 = por %p83, %p84
    %s87 = sadd.s32 %s86, 1
    %p90 = scmp.eq.s32.totalorder %s10, 1
    %p91 = scmp.ne.s32.totalorder %s86, %s88
    %p92 = scmp.eq.s32.totalorder %s10, 0
    %p93 = por %p91, %p92
    %p94 = scmp.ne.s32.totalorder %s86, %s88
    %p95 = scmp.eq.s32.totalorder %s15, 1
    %p96 = por %p94, %p95
    %p97 = scmp.ne.s32.totalorder %s88, %s89
    %p98 = scmp.eq.s32.totalorder %s15, 0
    %p99 = por %p97, %p98
    %p100 = scmp.ne.s32.totalorder %s88, %s89
    %p101 = scmp.eq.s32.totalorder %s16, 1
    %p102 = por %p100, %p101
    %p104 = scmp.ne.s32.totalorder %s89, %s103
    %p105 = scmp.eq.s32.totalorder %s16, 0
    %p106 = por %p104, %p105
    %s107 = ssub.s32 %s10, %s17
    %p108 = scmp.eq.s32.totalorder %s107, 0
    %s110 = sadd.s32 %s109, 1
    %s111 = scalar_select %p108, %s109, %s110
    %p114 = pneg %p108
    %p115 = scmp.eq.s32.totalorder %s10, 1
    %p116 = por %p114, %p115
    %p117 = scmp.ne.s32.totalorder %s109, %s112
    %p118 = scmp.eq.s32.totalorder %s10, 0
    %p119 = por %p117, %p118
    %p120 = scmp.ne.s32.totalorder %s109, %s112
    %p121 = scmp.eq.s32.totalorder %s15, 1
    %p122 = por %p120, %p121
    %p123 = scmp.ne.s32.totalorder %s112, %s113
    %p124 = scmp.eq.s32.totalorder %s15, 0
    %p125 = por %p123, %p124
    %p126 = scmp.ne.s32.totalorder %s112, %s113
    %p127 = scmp.eq.s32.totalorder %s16, 1
    %p128 = por %p126, %p127
    %p130 = scmp.ne.s32.totalorder %s113, %s129
    %p131 = scmp.eq.s32.totalorder %s16, 0
    %p132 = por %p130, %p131
    %p133 = scmp.le.s32.totalorder 1, %s10
    %p134 = scmp.lt.s32.totalorder %s10, 3
    %p135 = pnand %p133, %p134
    %p136 = pneg %p135
    // Predicated region
    $region9: #{residual_forward.2} parent=5 // pred_check
      _
    $region10: #{residual_forward.2} parent=5 // pred_check_branch
      %138 = sbr.rel (%p135) target = $region12
    $region11: #{residual_forward.2} parent=5 // pred_region
      %s139 = ssub.s32 %s10, 1
      // Predicated region
      $region13: #{residual_forward.2} parent=11 // pred_check
        %p140 = pneg %p57
      $region14: #{residual_forward.2} parent=11 // pred_check_branch
        %142 = sbr.rel (%p140) target = $region16
      $region15: #{residual_forward.2} parent=11 // pred_region
        _
      $region16: #{residual_forward.2} parent=11 // pred_fallthru
        _
      // Predicated region
      $region17: #{residual_forward.2} parent=11 // pred_check
        %p143 = pneg %p78
      $region18: #{residual_forward.2} parent=11 // pred_check_branch
        %145 = sbr.rel (%p143) target = $region20
      $region19: #{residual_forward.2} parent=11 // pred_region
        _
      $region20: #{residual_forward.2} parent=11 // pred_fallthru
        _
      // Predicated region
      $region21: #{residual_forward.2} parent=11 // pred_check
        %p146 = pneg %p99
      $region22: #{residual_forward.2} parent=11 // pred_check_branch
        %148 = sbr.rel (%p146) target = $region24
      $region23: #{residual_forward.2} parent=11 // pred_region
        _
      $region24: #{residual_forward.2} parent=11 // pred_fallthru
        _
    $region12: #{residual_forward.2} parent=5 // pred_fallthru
      _
    %p149 = scmp.lt.s32.totalorder %s10, 2
    // Predicated region
    $region25: #{residual_forward.2} parent=5 // pred_check
      %p150 = pneg %p149
    $region26: #{residual_forward.2} parent=5 // pred_check_branch
      %152 = sbr.rel (%p150) target = $region28
    $region27: #{residual_forward.2} parent=5 // pred_region
      // Predicated region
      $region29: #{residual_forward.2} parent=27 // pred_check
        %p153 = pneg %p30
      $region30: #{residual_forward.2} parent=27 // pred_check_branch
        %155 = sbr.rel (%p153) target = $region32
      $region31: #{residual_forward.2} parent=27 // pred_region
        %p156 = scmp.lt.s32.totalorder %s10, 1
        %s157 = scalar_select %p156, %s10, 1
        %s158 = smul.addr %s157, 43
        %s159 = smul.addr %s158, 8
        %s160 = scalar_lea.vmem %s0, %s159
      $region32: #{residual_forward.2} parent=27 // pred_fallthru
        _
    $region28: #{residual_forward.2} parent=5 // pred_fallthru
      _
    %p161 = scmp.le.s32.totalorder 1, %s10
    %p162 = scmp.lt.s32.totalorder %s10, 3
    %p163 = pnand %p161, %p162
    %p164 = pneg %p163
    // Predicated region
    $region33: #{residual_forward.2} parent=5 // pred_check
      _
    $region34: #{residual_forward.2} parent=5 // pred_check_branch
      %166 = sbr.rel (%p163) target = $region36
    $region35: #{residual_forward.2} parent=5 // pred_region
      %s167 = ssub.s32 %s10, 1
      %p168 = scmp.lt.s32.totalorder %s15, 1
      %s169 = scalar_select %p168, %s15, 1
      %s170 = smul.addr %s169, 43
      %s171 = smul.addr %s170, 8
      %s172 = scalar_lea.vmem %s0, %s171
      %p173 = pneg %p36
      %p174 = pneg %p33
      %p175 = pneg %p57
      %p176 = pneg %p54
      %p177 = pneg %p78
      %p178 = pneg %p75
      %p179 = pneg %p99
      %p180 = pneg %p96
      %p181 = pneg %p125
      %p182 = pneg %p122
      %p183 = scmp.lt.s32.totalorder %s15, 1
      %s184 = scalar_select %p183, %s15, 1
      %s185 = smul.addr %s184, 36
      %s186 = smul.addr %s185, 8
      %s187 = scalar_lea.vmem %s4, %s186
      %p188 = scmp.lt.s32.totalorder %s15, 1
      %s189 = scalar_select %p188, %s15, 1
      %s190 = smul.addr %s189, 43
      %s191 = smul.addr %s190, 8
      %s192 = scalar_lea.vmem %s0, %s191
      %p193 = scmp.lt.s32.totalorder %s15, 1
      %s194 = scalar_select %p193, %s15, 1
      %s195 = smul.addr %s194, 36
      %s196 = smul.addr %s195, 8
      %s197 = scalar_lea.vmem %s4, %s196
      %v198 = vld [vmem:[%s192] sm:$0xff]
      %v199 = vld [vmem:[%s192 + $0x8] sm:$0xff]
      %v200 = vld [vmem:[%s192 + $0x10] sm:$0xff]
      %v201 = vld [vmem:[%s192 + $0x18] sm:$0xff]
      %v202 = vld [vmem:[%s192 + $0x20] sm:$0xff]
      %v203 = vld [vmem:[%s192 + $0x28] sm:$0xff]
      %v204 = vld [vmem:[%s192 + $0x30] sm:$0xff]
      %v205 = vld [vmem:[%s192 + $0x38] sm:$0xff]
      %v206 = vld [vmem:[%s192 + $0x40] sm:$0xff]
      %v207 = vld [vmem:[%s192 + $0x48] sm:$0xff]
      %v208 = vld [vmem:[%s192 + $0x50] sm:$0xff]
      %v209 = vld [vmem:[%s192 + $0x58] sm:$0xff]
      %v210 = vld [vmem:[%s192 + $0x60] sm:$0xff]
      %v211 = vld [vmem:[%s192 + $0x68] sm:$0xff]
      %v212 = vld [vmem:[%s192 + $0x70] sm:$0xff]
      %v213 = vld [vmem:[%s192 + $0x78] sm:$0xff]
      %v214 = vld [vmem:[%s192 + $0x80] sm:$0xff]
      %v215 = vld [vmem:[%s192 + $0x88] sm:$0xff]
      %v216 = vld [vmem:[%s192 + $0x90] sm:$0xff]
      %v217 = vld [vmem:[%s192 + $0x98] sm:$0xff]
      %v218 = vld [vmem:[%s192 + $0xa0] sm:$0xff]
      %v219 = vld [vmem:[%s192 + $0xa8] sm:$0xff]
      %v220 = vld [vmem:[%s192 + $0xb0] sm:$0xff]
      %v221 = vld [vmem:[%s192 + $0xb8] sm:$0xff]
      %v222 = vld [vmem:[%s192 + $0xc0] sm:$0xff]
      %v223 = vld [vmem:[%s192 + $0xc8] sm:$0xff]
      %v224 = vld [vmem:[%s192 + $0xd0] sm:$0xff]
      %v225 = vld [vmem:[%s192 + $0xd8] sm:$0xff]
      %v226 = vld [vmem:[%s192 + $0xe0] sm:$0xff]
      %v227 = vld [vmem:[%s192 + $0xe8] sm:$0xff]
      %v228 = vld [vmem:[%s192 + $0xf0] sm:$0xff]
      %v229 = vld [vmem:[%s192 + $0xf8] sm:$0xff]
      %v230 = vld [vmem:[%s192 + $0x100] sm:$0xff]
      %v231 = vld [vmem:[%s192 + $0x108] sm:$0xff]
      %v232 = vld [vmem:[%s192 + $0x110] sm:$0xff]
      %v233 = vld [vmem:[%s192 + $0x118] sm:$0xff]
      %v234 = vld [vmem:[%s1] sm:$0xf]
      %v235 = vld [vmem:[%s192 + $0x1] sm:$0xff]
      %v236 = vld [vmem:[%s192 + $0x9] sm:$0xff]
      %v237 = vld [vmem:[%s192 + $0x11] sm:$0xff]
      %v238 = vld [vmem:[%s192 + $0x19] sm:$0xff]
      %v239 = vld [vmem:[%s192 + $0x21] sm:$0xff]
      %v240 = vld [vmem:[%s192 + $0x29] sm:$0xff]
      %v241 = vld [vmem:[%s192 + $0x31] sm:$0xff]
      %v242 = vld [vmem:[%s192 + $0x39] sm:$0xff]
      %v243 = vld [vmem:[%s192 + $0x41] sm:$0xff]
      %v244 = vld [vmem:[%s192 + $0x49] sm:$0xff]
      %v245 = vld [vmem:[%s192 + $0x51] sm:$0xff]
      %v246 = vld [vmem:[%s192 + $0x59] sm:$0xff]
      %v247 = vld [vmem:[%s192 + $0x61] sm:$0xff]
      %v248 = vld [vmem:[%s192 + $0x69] sm:$0xff]
      %v249 = vld [vmem:[%s192 + $0x71] sm:$0xff]
      %v250 = vld [vmem:[%s192 + $0x79] sm:$0xff]
      %v251 = vld [vmem:[%s192 + $0x81] sm:$0xff]
      %v252 = vld [vmem:[%s192 + $0x89] sm:$0xff]
      %v253 = vld [vmem:[%s192 + $0x91] sm:$0xff]
      %v254 = vld [vmem:[%s192 + $0x99] sm:$0xff]
      %v255 = vld [vmem:[%s192 + $0xa1] sm:$0xff]
      %v256 = vld [vmem:[%s192 + $0xa9] sm:$0xff]
      %v257 = vld [vmem:[%s192 + $0xb1] sm:$0xff]
      %v258 = vld [vmem:[%s192 + $0xb9] sm:$0xff]
      %v259 = vld [vmem:[%s192 + $0xc1] sm:$0xff]
      %v260 = vld [vmem:[%s192 + $0xc9] sm:$0xff]
      %v261 = vld [vmem:[%s192 + $0xd1] sm:$0xff]
      %v262 = vld [vmem:[%s192 + $0xd9] sm:$0xff]
      %v263 = vld [vmem:[%s192 + $0xe1] sm:$0xff]
      %v264 = vld [vmem:[%s192 + $0xe9] sm:$0xff]
      %v265 = vld [vmem:[%s192 + $0xf1] sm:$0xff]
      %v266 = vld [vmem:[%s192 + $0xf9] sm:$0xff]
      %v267 = vld [vmem:[%s192 + $0x101] sm:$0xff]
      %v268 = vld [vmem:[%s192 + $0x109] sm:$0xff]
      %v269 = vld [vmem:[%s192 + $0x111] sm:$0xff]
      %v270 = vld [vmem:[%s192 + $0x119] sm:$0xff]
      %s271 = scalar_lea.vmem %s1, 4
      %v272 = vld [vmem:[%s271] sm:$0xf]
      %vm273 = vcmask 31744
      %v275 = vsel %vm273, %v235, 0
      %v278 = vsel %vm273, %v236, 0
      %v281 = vsel %vm273, %v237, 0
      %v284 = vsel %vm273, %v238, 0
      %v287 = vsel %vm273, %v239, 0
      %v290 = vsel %vm273, %v240, 0
      %v293 = vsel %vm273, %v241, 0
      %v296 = vsel %vm273, %v242, 0
      %v299 = vsel %vm273, %v243, 0
      %v302 = vsel %vm273, %v244, 0
      %v305 = vsel %vm273, %v245, 0
      %v308 = vsel %vm273, %v246, 0
      %v311 = vsel %vm273, %v247, 0
      %v314 = vsel %vm273, %v248, 0
      %v317 = vsel %vm273, %v249, 0
      %v320 = vsel %vm273, %v250, 0
      %v323 = vsel %vm273, %v251, 0
      %v326 = vsel %vm273, %v252, 0
      %v329 = vsel %vm273, %v253, 0
      %v332 = vsel %vm273, %v254, 0
      %v335 = vsel %vm273, %v255, 0
      %v338 = vsel %vm273, %v256, 0
      %v341 = vsel %vm273, %v257, 0
      %v344 = vsel %vm273, %v258, 0
      %v347 = vsel %vm273, %v259, 0
      %v350 = vsel %vm273, %v260, 0
      %v353 = vsel %vm273, %v261, 0
      %v356 = vsel %vm273, %v262, 0
      %v359 = vsel %vm273, %v263, 0
      %v362 = vsel %vm273, %v264, 0
      %v365 = vsel %vm273, %v265, 0
      %v368 = vsel %vm273, %v266, 0
      %v371 = vsel %vm273, %v267, 0
      %v374 = vsel %vm273, %v268, 0
      %v377 = vsel %vm273, %v269, 0
      %v380 = vsel %vm273, %v270, 0
      %vm382 = vcmask 1043456
      %v384 = vsel %vm382, %v272, 0
      %386 = vmatpush.msra.mxu0 0.0
      %387 = vmatpush.msra.mxu0 0.0
      %388 = vmatpush.msra.mxu0 0.0
      %389 = vmatpush.msra.mxu0 0.0
      %390 = vmatpush.msra.mxu0 0.0
      %391 = vmatpush.msra.mxu0 0.0
      %392 = vmatpush.msra.mxu0 0.0
      %393 = vmatpush.msra.mxu0 0.0
      %394 = vmatpush.msra.mxu0 0.0
      %395 = vmatpush.msra.mxu0 0.0
      %396 = vmatpush.msra.mxu0 0.0
      %397 = vmatpush.msra.mxu0 0.0
      %398 = vmatpush.msra.mxu0 0.0
      %399 = vmatpush.msra.mxu0 0.0
      %400 = vmatpush.msra.mxu0 0.0
      %401 = vmatpush.msra.mxu0 %v384
      %402 = vmatmul.f32.gmra.mxu0 %v275
      %v403 = vpop.f32.mrf.mxu0
      %v404 = vadd.f32 0.0, %v403
      %405 = vmatmul.f32.gmra.mxu0 %v278
      %v406 = vpop.f32.mrf.mxu0
      %v407 = vadd.f32 0.0, %v406
      %408 = vmatmul.f32.gmra.mxu0 %v281
      %v409 = vpop.f32.mrf.mxu0
      %v410 = vadd.f32 0.0, %v409
      %411 = vmatmul.f32.gmra.mxu0 %v284
      %v412 = vpop.f32.mrf.mxu0
      %v413 = vadd.f32 0.0, %v412
      %414 = vmatmul.f32.gmra.mxu0 %v287
      %v415 = vpop.f32.mrf.mxu0
      %v416 = vadd.f32 0.0, %v415
      %417 = vmatmul.f32.gmra.mxu0 %v290
      %v418 = vpop.f32.mrf.mxu0
      %v419 = vadd.f32 0.0, %v418
      %420 = vmatmul.f32.gmra.mxu0 %v293
      %v421 = vpop.f32.mrf.mxu0
      %v422 = vadd.f32 0.0, %v421
      %423 = vmatmul.f32.gmra.mxu0 %v296
      %v424 = vpop.f32.mrf.mxu0
      %v425 = vadd.f32 0.0, %v424
      %426 = vmatmul.f32.gmra.mxu0 %v299
      %v427 = vpop.f32.mrf.mxu0
      %v428 = vadd.f32 0.0, %v427
      %429 = vmatmul.f32.gmra.mxu0 %v302
      %v430 = vpop.f32.mrf.mxu0
      %v431 = vadd.f32 0.0, %v430
      %432 = vmatmul.f32.gmra.mxu0 %v305
      %v433 = vpop.f32.mrf.mxu0
      %v434 = vadd.f32 0.0, %v433
      %435 = vmatmul.f32.gmra.mxu0 %v308
      %v436 = vpop.f32.mrf.mxu0
      %v437 = vadd.f32 0.0, %v436
      %438 = vmatmul.f32.gmra.mxu0 %v311
      %v439 = vpop.f32.mrf.mxu0
      %v440 = vadd.f32 0.0, %v439
      %441 = vmatmul.f32.gmra.mxu0 %v314
      %v442 = vpop.f32.mrf.mxu0
      %v443 = vadd.f32 0.0, %v442
      %444 = vmatmul.f32.gmra.mxu0 %v317
      %v445 = vpop.f32.mrf.mxu0
      %v446 = vadd.f32 0.0, %v445
      %447 = vmatmul.f32.gmra.mxu0 %v320
      %v448 = vpop.f32.mrf.mxu0
      %v449 = vadd.f32 0.0, %v448
      %450 = vmatmul.f32.gmra.mxu0 %v323
      %v451 = vpop.f32.mrf.mxu0
      %v452 = vadd.f32 0.0, %v451
      %453 = vmatmul.f32.gmra.mxu0 %v326
      %v454 = vpop.f32.mrf.mxu0
      %v455 = vadd.f32 0.0, %v454
      %456 = vmatmul.f32.gmra.mxu0 %v329
      %v457 = vpop.f32.mrf.mxu0
      %v458 = vadd.f32 0.0, %v457
      %459 = vmatmul.f32.gmra.mxu0 %v332
      %v460 = vpop.f32.mrf.mxu0
      %v461 = vadd.f32 0.0, %v460
      %462 = vmatmul.f32.gmra.mxu0 %v335
      %v463 = vpop.f32.mrf.mxu0
      %v464 = vadd.f32 0.0, %v463
      %465 = vmatmul.f32.gmra.mxu0 %v338
      %v466 = vpop.f32.mrf.mxu0
      %v467 = vadd.f32 0.0, %v466
      %468 = vmatmul.f32.gmra.mxu0 %v341
      %v469 = vpop.f32.mrf.mxu0
      %v470 = vadd.f32 0.0, %v469
      %471 = vmatmul.f32.gmra.mxu0 %v344
      %v472 = vpop.f32.mrf.mxu0
      %v473 = vadd.f32 0.0, %v472
      %474 = vmatmul.f32.gmra.mxu0 %v347
      %v475 = vpop.f32.mrf.mxu0
      %v476 = vadd.f32 0.0, %v475
      %477 = vmatmul.f32.gmra.mxu0 %v350
      %v478 = vpop.f32.mrf.mxu0
      %v479 = vadd.f32 0.0, %v478
      %480 = vmatmul.f32.gmra.mxu0 %v353
      %v481 = vpop.f32.mrf.mxu0
      %v482 = vadd.f32 0.0, %v481
      %483 = vmatmul.f32.gmra.mxu0 %v356
      %v484 = vpop.f32.mrf.mxu0
      %v485 = vadd.f32 0.0, %v484
      %486 = vmatmul.f32.gmra.mxu0 %v359
      %v487 = vpop.f32.mrf.mxu0
      %v488 = vadd.f32 0.0, %v487
      %489 = vmatmul.f32.gmra.mxu0 %v362
      %v490 = vpop.f32.mrf.mxu0
      %v491 = vadd.f32 0.0, %v490
      %492 = vmatmul.f32.gmra.mxu0 %v365
      %v493 = vpop.f32.mrf.mxu0
      %v494 = vadd.f32 0.0, %v493
      %495 = vmatmul.f32.gmra.mxu0 %v368
      %v496 = vpop.f32.mrf.mxu0
      %v497 = vadd.f32 0.0, %v496
      %498 = vmatmul.f32.gmra.mxu0 %v371
      %v499 = vpop.f32.mrf.mxu0
      %v500 = vadd.f32 0.0, %v499
      %501 = vmatmul.f32.gmra.mxu0 %v374
      %v502 = vpop.f32.mrf.mxu0
      %v503 = vadd.f32 0.0, %v502
      %504 = vmatmul.f32.gmra.mxu0 %v377
      %v505 = vpop.f32.mrf.mxu0
      %v506 = vadd.f32 0.0, %v505
      %507 = vmatmul.f32.gmra.mxu0 %v380
      %v508 = vpop.f32.mrf.mxu0
      %v509 = vadd.f32 0.0, %v508
      %510 = vdwg.mxu0
      %v512 = vsel %vm273, %v198, 0
      %v515 = vsel %vm273, %v199, 0
      %v518 = vsel %vm273, %v200, 0
      %v521 = vsel %vm273, %v201, 0
      %v524 = vsel %vm273, %v202, 0
      %v527 = vsel %vm273, %v203, 0
      %v530 = vsel %vm273, %v204, 0
      %v533 = vsel %vm273, %v205, 0
      %v536 = vsel %vm273, %v206, 0
      %v539 = vsel %vm273, %v207, 0
      %v542 = vsel %vm273, %v208, 0
      %v545 = vsel %vm273, %v209, 0
      %v548 = vsel %vm273, %v210, 0
      %v551 = vsel %vm273, %v211, 0
      %v554 = vsel %vm273, %v212, 0
      %v557 = vsel %vm273, %v213, 0
      %v560 = vsel %vm273, %v214, 0
      %v563 = vsel %vm273, %v215, 0
      %v566 = vsel %vm273, %v216, 0
      %v569 = vsel %vm273, %v217, 0
      %v572 = vsel %vm273, %v218, 0
      %v575 = vsel %vm273, %v219, 0
      %v578 = vsel %vm273, %v220, 0
      %v581 = vsel %vm273, %v221, 0
      %v584 = vsel %vm273, %v222, 0
      %v587 = vsel %vm273, %v223, 0
      %v590 = vsel %vm273, %v224, 0
      %v593 = vsel %vm273, %v225, 0
      %v596 = vsel %vm273, %v226, 0
      %v599 = vsel %vm273, %v227, 0
      %v602 = vsel %vm273, %v228, 0
      %v605 = vsel %vm273, %v229, 0
      %v608 = vsel %vm273, %v230, 0
      %v611 = vsel %vm273, %v231, 0
      %v614 = vsel %vm273, %v232, 0
      %v617 = vsel %vm273, %v233, 0
      %v620 = vsel %vm382, %v234, 0
      %622 = vmatpush.msra.mxu0 0.0
      %623 = vmatpush.msra.mxu0 0.0
      %624 = vmatpush.msra.mxu0 0.0
      %625 = vmatpush.msra.mxu0 0.0
      %626 = vmatpush.msra.mxu0 0.0
      %627 = vmatpush.msra.mxu0 0.0
      %628 = vmatpush.msra.mxu0 0.0
      %629 = vmatpush.msra.mxu0 0.0
      %630 = vmatpush.msra.mxu0 0.0
      %631 = vmatpush.msra.mxu0 0.0
      %632 = vmatpush.msra.mxu0 0.0
      %633 = vmatpush.msra.mxu0 0.0
      %634 = vmatpush.msra.mxu0 0.0
      %635 = vmatpush.msra.mxu0 0.0
      %636 = vmatpush.msra.mxu0 0.0
      %637 = vmatpush.msra.mxu0 %v620
      %638 = vmatmul.f32.gmra.mxu0 %v512
      %v639 = vpop.f32.mrf.mxu0
      %v640 = vadd.f32 %v404, %v639
      %641 = vmatmul.f32.gmra.mxu0 %v515
      %v642 = vpop.f32.mrf.mxu0
      %v643 = vadd.f32 %v407, %v642
      %644 = vmatmul.f32.gmra.mxu0 %v518
      %v645 = vpop.f32.mrf.mxu0
      %v646 = vadd.f32 %v410, %v645
      %647 = vmatmul.f32.gmra.mxu0 %v521
      %v648 = vpop.f32.mrf.mxu0
      %v649 = vadd.f32 %v413, %v648
      %650 = vmatmul.f32.gmra.mxu0 %v524
      %v651 = vpop.f32.mrf.mxu0
      %v652 = vadd.f32 %v416, %v651
      %653 = vmatmul.f32.gmra.mxu0 %v527
      %v654 = vpop.f32.mrf.mxu0
      %v655 = vadd.f32 %v419, %v654
      %656 = vmatmul.f32.gmra.mxu0 %v530
      %v657 = vpop.f32.mrf.mxu0
      %v658 = vadd.f32 %v422, %v657
      %659 = vmatmul.f32.gmra.mxu0 %v533
      %v660 = vpop.f32.mrf.mxu0
      %v661 = vadd.f32 %v425, %v660
      %662 = vmatmul.f32.gmra.mxu0 %v536
      %v663 = vpop.f32.mrf.mxu0
      %v664 = vadd.f32 %v428, %v663
      %665 = vmatmul.f32.gmra.mxu0 %v539
      %v666 = vpop.f32.mrf.mxu0
      %v667 = vadd.f32 %v431, %v666
      %668 = vmatmul.f32.gmra.mxu0 %v542
      %v669 = vpop.f32.mrf.mxu0
      %v670 = vadd.f32 %v434, %v669
      %671 = vmatmul.f32.gmra.mxu0 %v545
      %v672 = vpop.f32.mrf.mxu0
      %v673 = vadd.f32 %v437, %v672
      %674 = vmatmul.f32.gmra.mxu0 %v548
      %v675 = vpop.f32.mrf.mxu0
      %v676 = vadd.f32 %v440, %v675
      %677 = vmatmul.f32.gmra.mxu0 %v551
      %v678 = vpop.f32.mrf.mxu0
      %v679 = vadd.f32 %v443, %v678
      %680 = vmatmul.f32.gmra.mxu0 %v554
      %v681 = vpop.f32.mrf.mxu0
      %v682 = vadd.f32 %v446, %v681
      %683 = vmatmul.f32.gmra.mxu0 %v557
      %v684 = vpop.f32.mrf.mxu0
      %v685 = vadd.f32 %v449, %v684
      %686 = vmatmul.f32.gmra.mxu0 %v560
      %v687 = vpop.f32.mrf.mxu0
      %v688 = vadd.f32 %v452, %v687
      %689 = vmatmul.f32.gmra.mxu0 %v563
      %v690 = vpop.f32.mrf.mxu0
      %v691 = vadd.f32 %v455, %v690
      %692 = vmatmul.f32.gmra.mxu0 %v566
      %v693 = vpop.f32.mrf.mxu0
      %v694 = vadd.f32 %v458, %v693
      %695 = vmatmul.f32.gmra.mxu0 %v569
      %v696 = vpop.f32.mrf.mxu0
      %v697 = vadd.f32 %v461, %v696
      %698 = vmatmul.f32.gmra.mxu0 %v572
      %v699 = vpop.f32.mrf.mxu0
      %v700 = vadd.f32 %v464, %v699
      %701 = vmatmul.f32.gmra.mxu0 %v575
      %v702 = vpop.f32.mrf.mxu0
      %v703 = vadd.f32 %v467, %v702
      %704 = vmatmul.f32.gmra.mxu0 %v578
      %v705 = vpop.f32.mrf.mxu0
      %v706 = vadd.f32 %v470, %v705
      %707 = vmatmul.f32.gmra.mxu0 %v581
      %v708 = vpop.f32.mrf.mxu0
      %v709 = vadd.f32 %v473, %v708
      %710 = vmatmul.f32.gmra.mxu0 %v584
      %v711 = vpop.f32.mrf.mxu0
      %v712 = vadd.f32 %v476, %v711
      %713 = vmatmul.f32.gmra.mxu0 %v587
      %v714 = vpop.f32.mrf.mxu0
      %v715 = vadd.f32 %v479, %v714
      %716 = vmatmul.f32.gmra.mxu0 %v590
      %v717 = vpop.f32.mrf.mxu0
      %v718 = vadd.f32 %v482, %v717
      %719 = vmatmul.f32.gmra.mxu0 %v593
      %v720 = vpop.f32.mrf.mxu0
      %v721 = vadd.f32 %v485, %v720
      %722 = vmatmul.f32.gmra.mxu0 %v596
      %v723 = vpop.f32.mrf.mxu0
      %v724 = vadd.f32 %v488, %v723
      %725 = vmatmul.f32.gmra.mxu0 %v599
      %v726 = vpop.f32.mrf.mxu0
      %v727 = vadd.f32 %v491, %v726
      %728 = vmatmul.f32.gmra.mxu0 %v602
      %v729 = vpop.f32.mrf.mxu0
      %v730 = vadd.f32 %v494, %v729
      %731 = vmatmul.f32.gmra.mxu0 %v605
      %v732 = vpop.f32.mrf.mxu0
      %v733 = vadd.f32 %v497, %v732
      %734 = vmatmul.f32.gmra.mxu0 %v608
      %v735 = vpop.f32.mrf.mxu0
      %v736 = vadd.f32 %v500, %v735
      %737 = vmatmul.f32.gmra.mxu0 %v611
      %v738 = vpop.f32.mrf.mxu0
      %v739 = vadd.f32 %v503, %v738
      %740 = vmatmul.f32.gmra.mxu0 %v614
      %v741 = vpop.f32.mrf.mxu0
      %v742 = vadd.f32 %v506, %v741
      %743 = vmatmul.f32.gmra.mxu0 %v617
      %v744 = vpop.f32.mrf.mxu0
      %v745 = vadd.f32 %v509, %v744
      %746 = vdwg.mxu0
      %v747 = vld [vmem:[%s192 + $0x2] sm:$0xff]
      %v748 = vld [vmem:[%s192 + $0xa] sm:$0xff]
      %v749 = vld [vmem:[%s192 + $0x12] sm:$0xff]
      %v750 = vld [vmem:[%s192 + $0x1a] sm:$0xff]
      %v751 = vld [vmem:[%s192 + $0x22] sm:$0xff]
      %v752 = vld [vmem:[%s192 + $0x2a] sm:$0xff]
      %v753 = vld [vmem:[%s192 + $0x32] sm:$0xff]
      %v754 = vld [vmem:[%s192 + $0x3a] sm:$0xff]
      %v755 = vld [vmem:[%s192 + $0x42] sm:$0xff]
      %v756 = vld [vmem:[%s192 + $0x4a] sm:$0xff]
      %v757 = vld [vmem:[%s192 + $0x52] sm:$0xff]
      %v758 = vld [vmem:[%s192 + $0x5a] sm:$0xff]
      %v759 = vld [vmem:[%s192 + $0x62] sm:$0xff]
      %v760 = vld [vmem:[%s192 + $0x6a] sm:$0xff]
      %v761 = vld [vmem:[%s192 + $0x72] sm:$0xff]
      %v762 = vld [vmem:[%s192 + $0x7a] sm:$0xff]
      %v763 = vld [vmem:[%s192 + $0x82] sm:$0xff]
      %v764 = vld [vmem:[%s192 + $0x8a] sm:$0xff]
      %v765 = vld [vmem:[%s192 + $0x92] sm:$0xff]
      %v766 = vld [vmem:[%s192 + $0x9a] sm:$0xff]
      %v767 = vld [vmem:[%s192 + $0xa2] sm:$0xff]
      %v768 = vld [vmem:[%s192 + $0xaa] sm:$0xff]
      %v769 = vld [vmem:[%s192 + $0xb2] sm:$0xff]
      %v770 = vld [vmem:[%s192 + $0xba] sm:$0xff]
      %v771 = vld [vmem:[%s192 + $0xc2] sm:$0xff]
      %v772 = vld [vmem:[%s192 + $0xca] sm:$0xff]
      %v773 = vld [vmem:[%s192 + $0xd2] sm:$0xff]
      %v774 = vld [vmem:[%s192 + $0xda] sm:$0xff]
      %v775 = vld [vmem:[%s192 + $0xe2] sm:$0xff]
      %v776 = vld [vmem:[%s192 + $0xea] sm:$0xff]
      %v777 = vld [vmem:[%s192 + $0xf2] sm:$0xff]
      %v778 = vld [vmem:[%s192 + $0xfa] sm:$0xff]
      %v779 = vld [vmem:[%s192 + $0x102] sm:$0xff]
      %v780 = vld [vmem:[%s192 + $0x10a] sm:$0xff]
      %v781 = vld [vmem:[%s192 + $0x112] sm:$0xff]
      %v782 = vld [vmem:[%s192 + $0x11a] sm:$0xff]
      %s783 = scalar_lea.vmem %s1, 8
      %v784 = vld [vmem:[%s783] sm:$0xf]
      %v786 = vsel %vm273, %v747, 0
      %v789 = vsel %vm273, %v748, 0
      %v792 = vsel %vm273, %v749, 0
      %v795 = vsel %vm273, %v750, 0
      %v798 = vsel %vm273, %v751, 0
      %v801 = vsel %vm273, %v752, 0
      %v804 = vsel %vm273, %v753, 0
      %v807 = vsel %vm273, %v754, 0
      %v810 = vsel %vm273, %v755, 0
      %v813 = vsel %vm273, %v756, 0
      %v816 = vsel %vm273, %v757, 0
      %v819 = vsel %vm273, %v758, 0
      %v822 = vsel %vm273, %v759, 0
      %v825 = vsel %vm273, %v760, 0
      %v828 = vsel %vm273, %v761, 0
      %v831 = vsel %vm273, %v762, 0
      %v834 = vsel %vm273, %v763, 0
      %v837 = vsel %vm273, %v764, 0
      %v840 = vsel %vm273, %v765, 0
      %v843 = vsel %vm273, %v766, 0
      %v846 = vsel %vm273, %v767, 0
      %v849 = vsel %vm273, %v768, 0
      %v852 = vsel %vm273, %v769, 0
      %v855 = vsel %vm273, %v770, 0
      %v858 = vsel %vm273, %v771, 0
      %v861 = vsel %vm273, %v772, 0
      %v864 = vsel %vm273, %v773, 0
      %v867 = vsel %vm273, %v774, 0
      %v870 = vsel %vm273, %v775, 0
      %v873 = vsel %vm273, %v776, 0
      %v876 = vsel %vm273, %v777, 0
      %v879 = vsel %vm273, %v778, 0
      %v882 = vsel %vm273, %v779, 0
      %v885 = vsel %vm273, %v780, 0
      %v888 = vsel %vm273, %v781, 0
      %v891 = vsel %vm273, %v782, 0
      %v894 = vsel %vm382, %v784, 0
      %896 = vmatpush.msra.mxu0 0.0
      %897 = vmatpush.msra.mxu0 0.0
      %898 = vmatpush.msra.mxu0 0.0
      %899 = vmatpush.msra.mxu0 0.0
      %900 = vmatpush.msra.mxu0 0.0
      %901 = vmatpush.msra.mxu0 0.0
      %902 = vmatpush.msra.mxu0 0.0
      %903 = vmatpush.msra.mxu0 0.0
      %904 = vmatpush.msra.mxu0 0.0
      %905 = vmatpush.msra.mxu0 0.0
      %906 = vmatpush.msra.mxu0 0.0
      %907 = vmatpush.msra.mxu0 0.0
      %908 = vmatpush.msra.mxu0 0.0
      %909 = vmatpush.msra.mxu0 0.0
      %910 = vmatpush.msra.mxu0 0.0
      %911 = vmatpush.msra.mxu0 %v894
      %912 = vmatmul.f32.gmra.mxu0 %v786
      %v913 = vpop.f32.mrf.mxu0
      %v914 = vadd.f32 0.0, %v913
      %915 = vmatmul.f32.gmra.mxu0 %v789
      %v916 = vpop.f32.mrf.mxu0
      %v917 = vadd.f32 0.0, %v916
      %918 = vmatmul.f32.gmra.mxu0 %v792
      %v919 = vpop.f32.mrf.mxu0
      %v920 = vadd.f32 0.0, %v919
      %921 = vmatmul.f32.gmra.mxu0 %v795
      %v922 = vpop.f32.mrf.mxu0
      %v923 = vadd.f32 0.0, %v922
      %924 = vmatmul.f32.gmra.mxu0 %v798
      %v925 = vpop.f32.mrf.mxu0
      %v926 = vadd.f32 0.0, %v925
      %927 = vmatmul.f32.gmra.mxu0 %v801
      %v928 = vpop.f32.mrf.mxu0
      %v929 = vadd.f32 0.0, %v928
      %930 = vmatmul.f32.gmra.mxu0 %v804
      %v931 = vpop.f32.mrf.mxu0
      %v932 = vadd.f32 0.0, %v931
      %933 = vmatmul.f32.gmra.mxu0 %v807
      %v934 = vpop.f32.mrf.mxu0
      %v935 = vadd.f32 0.0, %v934
      %936 = vmatmul.f32.gmra.mxu0 %v810
      %v937 = vpop.f32.mrf.mxu0
      %v938 = vadd.f32 0.0, %v937
      %939 = vmatmul.f32.gmra.mxu0 %v813
      %v940 = vpop.f32.mrf.mxu0
      %v941 = vadd.f32 0.0, %v940
      %942 = vmatmul.f32.gmra.mxu0 %v816
      %v943 = vpop.f32.mrf.mxu0
      %v944 = vadd.f32 0.0, %v943
      %945 = vmatmul.f32.gmra.mxu0 %v819
      %v946 = vpop.f32.mrf.mxu0
      %v947 = vadd.f32 0.0, %v946
      %948 = vmatmul.f32.gmra.mxu0 %v822
      %v949 = vpop.f32.mrf.mxu0
      %v950 = vadd.f32 0.0, %v949
      %951 = vmatmul.f32.gmra.mxu0 %v825
      %v952 = vpop.f32.mrf.mxu0
      %v953 = vadd.f32 0.0, %v952
      %954 = vmatmul.f32.gmra.mxu0 %v828
      %v955 = vpop.f32.mrf.mxu0
      %v956 = vadd.f32 0.0, %v955
      %957 = vmatmul.f32.gmra.mxu0 %v831
      %v958 = vpop.f32.mrf.mxu0
      %v959 = vadd.f32 0.0, %v958
      %960 = vmatmul.f32.gmra.mxu0 %v834
      %v961 = vpop.f32.mrf.mxu0
      %v962 = vadd.f32 0.0, %v961
      %963 = vmatmul.f32.gmra.mxu0 %v837
      %v964 = vpop.f32.mrf.mxu0
      %v965 = vadd.f32 0.0, %v964
      %966 = vmatmul.f32.gmra.mxu0 %v840
      %v967 = vpop.f32.mrf.mxu0
      %v968 = vadd.f32 0.0, %v967
      %969 = vmatmul.f32.gmra.mxu0 %v843
      %v970 = vpop.f32.mrf.mxu0
      %v971 = vadd.f32 0.0, %v970
      %972 = vmatmul.f32.gmra.mxu0 %v846
      %v973 = vpop.f32.mrf.mxu0
      %v974 = vadd.f32 0.0, %v973
      %975 = vmatmul.f32.gmra.mxu0 %v849
      %v976 = vpop.f32.mrf.mxu0
      %v977 = vadd.f32 0.0, %v976
      %978 = vmatmul.f32.gmra.mxu0 %v852
      %v979 = vpop.f32.mrf.mxu0
      %v980 = vadd.f32 0.0, %v979
      %981 = vmatmul.f32.gmra.mxu0 %v855
      %v982 = vpop.f32.mrf.mxu0
      %v983 = vadd.f32 0.0, %v982
      %984 = vmatmul.f32.gmra.mxu0 %v858
      %v985 = vpop.f32.mrf.mxu0
      %v986 = vadd.f32 0.0, %v985
      %987 = vmatmul.f32.gmra.mxu0 %v861
      %v988 = vpop.f32.mrf.mxu0
      %v989 = vadd.f32 0.0, %v988
      %990 = vmatmul.f32.gmra.mxu0 %v864
      %v991 = vpop.f32.mrf.mxu0
      %v992 = vadd.f32 0.0, %v991
      %993 = vmatmul.f32.gmra.mxu0 %v867
      %v994 = vpop.f32.mrf.mxu0
      %v995 = vadd.f32 0.0, %v994
      %996 = vmatmul.f32.gmra.mxu0 %v870
      %v997 = vpop.f32.mrf.mxu0
      %v998 = vadd.f32 0.0, %v997
      %999 = vmatmul.f32.gmra.mxu0 %v873
      %v1000 = vpop.f32.mrf.mxu0
      %v1001 = vadd.f32 0.0, %v1000
      %1002 = vmatmul.f32.gmra.mxu0 %v876
      %v1003 = vpop.f32.mrf.mxu0
      %v1004 = vadd.f32 0.0, %v1003
      %1005 = vmatmul.f32.gmra.mxu0 %v879
      %v1006 = vpop.f32.mrf.mxu0
      %v1007 = vadd.f32 0.0, %v1006
      %1008 = vmatmul.f32.gmra.mxu0 %v882
      %v1009 = vpop.f32.mrf.mxu0
      %v1010 = vadd.f32 0.0, %v1009
      %1011 = vmatmul.f32.gmra.mxu0 %v885
      %v1012 = vpop.f32.mrf.mxu0
      %v1013 = vadd.f32 0.0, %v1012
      %1014 = vmatmul.f32.gmra.mxu0 %v888
      %v1015 = vpop.f32.mrf.mxu0
      %v1016 = vadd.f32 0.0, %v1015
      %1017 = vmatmul.f32.gmra.mxu0 %v891
      %v1018 = vpop.f32.mrf.mxu0
      %v1019 = vadd.f32 0.0, %v1018
      %1020 = vdwg.mxu0
      %v1021 = vadd.f32 %v640, %v914
      %v1022 = vadd.f32 %v643, %v917
      %v1023 = vadd.f32 %v646, %v920
      %v1024 = vadd.f32 %v649, %v923
      %v1025 = vadd.f32 %v652, %v926
      %v1026 = vadd.f32 %v655, %v929
      %v1027 = vadd.f32 %v658, %v932
      %v1028 = vadd.f32 %v661, %v935
      %v1029 = vadd.f32 %v664, %v938
      %v1030 = vadd.f32 %v667, %v941
      %v1031 = vadd.f32 %v670, %v944
      %v1032 = vadd.f32 %v673, %v947
      %v1033 = vadd.f32 %v676, %v950
      %v1034 = vadd.f32 %v679, %v953
      %v1035 = vadd.f32 %v682, %v956
      %v1036 = vadd.f32 %v685, %v959
      %v1037 = vadd.f32 %v688, %v962
      %v1038 = vadd.f32 %v691, %v965
      %v1039 = vadd.f32 %v694, %v968
      %v1040 = vadd.f32 %v697, %v971
      %v1041 = vadd.f32 %v700, %v974
      %v1042 = vadd.f32 %v703, %v977
      %v1043 = vadd.f32 %v706, %v980
      %v1044 = vadd.f32 %v709, %v983
      %v1045 = vadd.f32 %v712, %v986
      %v1046 = vadd.f32 %v715, %v989
      %v1047 = vadd.f32 %v718, %v992
      %v1048 = vadd.f32 %v721, %v995
      %v1049 = vadd.f32 %v724, %v998
      %v1050 = vadd.f32 %v727, %v1001
      %v1051 = vadd.f32 %v730, %v1004
      %v1052 = vadd.f32 %v733, %v1007
      %v1053 = vadd.f32 %v736, %v1010
      %v1054 = vadd.f32 %v739, %v1013
      %v1055 = vadd.f32 %v742, %v1016
      %v1056 = vadd.f32 %v745, %v1019
      %v1057 = vld [vmem:[%s192 + $0x12] sm:$0xff]
      %v1058 = vld [vmem:[%s192 + $0x1a] sm:$0xff]
      %v1059 = vld [vmem:[%s192 + $0x22] sm:$0xff]
      %v1060 = vld [vmem:[%s192 + $0x2a] sm:$0xff]
      %v1061 = vld [vmem:[%s192 + $0x32] sm:$0xff]
      %v1062 = vld [vmem:[%s192 + $0x3a] sm:$0xff]
      %v1063 = vld [vmem:[%s192 + $0x42] sm:$0xff]
      %v1064 = vld [vmem:[%s192 + $0x4a] sm:$0xff]
      %v1065 = vld [vmem:[%s192 + $0x52] sm:$0xff]
      %v1066 = vld [vmem:[%s192 + $0x5a] sm:$0xff]
      %v1067 = vld [vmem:[%s192 + $0x62] sm:$0xff]
      %v1068 = vld [vmem:[%s192 + $0x6a] sm:$0xff]
      %v1069 = vld [vmem:[%s192 + $0x72] sm:$0xff]
      %v1070 = vld [vmem:[%s192 + $0x7a] sm:$0xff]
      %v1071 = vld [vmem:[%s192 + $0x82] sm:$0xff]
      %v1072 = vld [vmem:[%s192 + $0x8a] sm:$0xff]
      %v1073 = vld [vmem:[%s192 + $0x92] sm:$0xff]
      %v1074 = vld [vmem:[%s192 + $0x9a] sm:$0xff]
      %v1075 = vld [vmem:[%s192 + $0xa2] sm:$0xff]
      %v1076 = vld [vmem:[%s192 + $0xaa] sm:$0xff]
      %v1077 = vld [vmem:[%s192 + $0xb2] sm:$0xff]
      %v1078 = vld [vmem:[%s192 + $0xba] sm:$0xff]
      %v1079 = vld [vmem:[%s192 + $0xc2] sm:$0xff]
      %v1080 = vld [vmem:[%s192 + $0xca] sm:$0xff]
      %v1081 = vld [vmem:[%s192 + $0xd2] sm:$0xff]
      %v1082 = vld [vmem:[%s192 + $0xda] sm:$0xff]
      %v1083 = vld [vmem:[%s192 + $0xe2] sm:$0xff]
      %v1084 = vld [vmem:[%s192 + $0xea] sm:$0xff]
      %v1085 = vld [vmem:[%s192 + $0xf2] sm:$0xff]
      %v1086 = vld [vmem:[%s192 + $0xfa] sm:$0xff]
      %v1087 = vld [vmem:[%s192 + $0x102] sm:$0xff]
      %v1088 = vld [vmem:[%s192 + $0x10a] sm:$0xff]
      %v1089 = vld [vmem:[%s192 + $0x112] sm:$0xff]
      %v1090 = vld [vmem:[%s192 + $0x11a] sm:$0xff]
      %v1091 = vld [vmem:[%s192 + $0x122] sm:$0xff]
      %v1092 = vld [vmem:[%s192 + $0x12a] sm:$0xff]
      %s1093 = scalar_lea.vmem %s1, 12
      %v1094 = vld [vmem:[%s1093] sm:$0xf]
      %v1096 = vsel %vm273, %v1057, 0
      %v1099 = vsel %vm273, %v1058, 0
      %v1102 = vsel %vm273, %v1059, 0
      %v1105 = vsel %vm273, %v1060, 0
      %v1108 = vsel %vm273, %v1061, 0
      %v1111 = vsel %vm273, %v1062, 0
      %v1114 = vsel %vm273, %v1063, 0
      %v1117 = vsel %vm273, %v1064, 0
      %v1120 = vsel %vm273, %v1065, 0
      %v1123 = vsel %vm273, %v1066, 0
      %v1126 = vsel %vm273, %v1067, 0
      %v1129 = vsel %vm273, %v1068, 0
      %v1132 = vsel %vm273, %v1069, 0
      %v1135 = vsel %vm273, %v1070, 0
      %v1138 = vsel %vm273, %v1071, 0
      %v1141 = vsel %vm273, %v1072, 0
      %v1144 = vsel %vm273, %v1073, 0
      %v1147 = vsel %vm273, %v1074, 0
      %v1150 = vsel %vm273, %v1075, 0
      %v1153 = vsel %vm273, %v1076, 0
      %v1156 = vsel %vm273, %v1077, 0
      %v1159 = vsel %vm273, %v1078, 0
      %v1162 = vsel %vm273, %v1079, 0
      %v1165 = vsel %vm273, %v1080, 0
      %v1168 = vsel %vm273, %v1081, 0
      %v1171 = vsel %vm273, %v1082, 0
      %v1174 = vsel %vm273, %v1083, 0
      %v1177 = vsel %vm273, %v1084, 0
      %v1180 = vsel %vm273, %v1085, 0
      %v1183 = vsel %vm273, %v1086, 0
      %v1186 = vsel %vm273, %v1087, 0
      %v1189 = vsel %vm273, %v1088, 0
      %v1192 = vsel %vm273, %v1089, 0
      %v1195 = vsel %vm273, %v1090, 0
      %v1198 = vsel %vm273, %v1091, 0
      %v1201 = vsel %vm273, %v1092, 0
      %v1204 = vsel %vm382, %v1094, 0
      %1206 = vmatpush.msra.mxu0 0.0
      %1207 = vmatpush.msra.mxu0 0.0
      %1208 = vmatpush.msra.mxu0 0.0
      %1209 = vmatpush.msra.mxu0 0.0
      %1210 = vmatpush.msra.mxu0 0.0
      %1211 = vmatpush.msra.mxu0 0.0
      %1212 = vmatpush.msra.mxu0 0.0
      %1213 = vmatpush.msra.mxu0 0.0
      %1214 = vmatpush.msra.mxu0 0.0
      %1215 = vmatpush.msra.mxu0 0.0
      %1216 = vmatpush.msra.mxu0 0.0
      %1217 = vmatpush.msra.mxu0 0.0
      %1218 = vmatpush.msra.mxu0 0.0
      %1219 = vmatpush.msra.mxu0 0.0
      %1220 = vmatpush.msra.mxu0 0.0
      %1221 = vmatpush.msra.mxu0 %v1204
      %1222 = vmatmul.f32.gmra.mxu0 %v1096
      %v1223 = vpop.f32.mrf.mxu0
      %v1224 = vadd.f32 0.0, %v1223
      %1225 = vmatmul.f32.gmra.mxu0 %v1099
      %v1226 = vpop.f32.mrf.mxu0
      %v1227 = vadd.f32 0.0, %v1226
      %1228 = vmatmul.f32.gmra.mxu0 %v1102
      %v1229 = vpop.f32.mrf.mxu0
      %v1230 = vadd.f32 0.0, %v1229
      %1231 = vmatmul.f32.gmra.mxu0 %v1105
      %v1232 = vpop.f32.mrf.mxu0
      %v1233 = vadd.f32 0.0, %v1232
      %1234 = vmatmul.f32.gmra.mxu0 %v1108
      %v1235 = vpop.f32.mrf.mxu0
      %v1236 = vadd.f32 0.0, %v1235
      %1237 = vmatmul.f32.gmra.mxu0 %v1111
      %v1238 = vpop.f32.mrf.mxu0
      %v1239 = vadd.f32 0.0, %v1238
      %1240 = vmatmul.f32.gmra.mxu0 %v1114
      %v1241 = vpop.f32.mrf.mxu0
      %v1242 = vadd.f32 0.0, %v1241
      %1243 = vmatmul.f32.gmra.mxu0 %v1117
      %v1244 = vpop.f32.mrf.mxu0
      %v1245 = vadd.f32 0.0, %v1244
      %1246 = vmatmul.f32.gmra.mxu0 %v1120
      %v1247 = vpop.f32.mrf.mxu0
      %v1248 = vadd.f32 0.0, %v1247
      %1249 = vmatmul.f32.gmra.mxu0 %v1123
      %v1250 = vpop.f32.mrf.mxu0
      %v1251 = vadd.f32 0.0, %v1250
      %1252 = vmatmul.f32.gmra.mxu0 %v1126
      %v1253 = vpop.f32.mrf.mxu0
      %v1254 = vadd.f32 0.0, %v1253
      %1255 = vmatmul.f32.gmra.mxu0 %v1129
      %v1256 = vpop.f32.mrf.mxu0
      %v1257 = vadd.f32 0.0, %v1256
      %1258 = vmatmul.f32.gmra.mxu0 %v1132
      %v1259 = vpop.f32.mrf.mxu0
      %v1260 = vadd.f32 0.0, %v1259
      %1261 = vmatmul.f32.gmra.mxu0 %v1135
      %v1262 = vpop.f32.mrf.mxu0
      %v1263 = vadd.f32 0.0, %v1262
      %1264 = vmatmul.f32.gmra.mxu0 %v1138
      %v1265 = vpop.f32.mrf.mxu0
      %v1266 = vadd.f32 0.0, %v1265
      %1267 = vmatmul.f32.gmra.mxu0 %v1141
      %v1268 = vpop.f32.mrf.mxu0
      %v1269 = vadd.f32 0.0, %v1268
      %1270 = vmatmul.f32.gmra.mxu0 %v1144
      %v1271 = vpop.f32.mrf.mxu0
      %v1272 = vadd.f32 0.0, %v1271
      %1273 = vmatmul.f32.gmra.mxu0 %v1147
      %v1274 = vpop.f32.mrf.mxu0
      %v1275 = vadd.f32 0.0, %v1274
      %1276 = vmatmul.f32.gmra.mxu0 %v1150
      %v1277 = vpop.f32.mrf.mxu0
      %v1278 = vadd.f32 0.0, %v1277
      %1279 = vmatmul.f32.gmra.mxu0 %v1153
      %v1280 = vpop.f32.mrf.mxu0
      %v1281 = vadd.f32 0.0, %v1280
      %1282 = vmatmul.f32.gmra.mxu0 %v1156
      %v1283 = vpop.f32.mrf.mxu0
      %v1284 = vadd.f32 0.0, %v1283
      %1285 = vmatmul.f32.gmra.mxu0 %v1159
      %v1286 = vpop.f32.mrf.mxu0
      %v1287 = vadd.f32 0.0, %v1286
      %1288 = vmatmul.f32.gmra.mxu0 %v1162
      %v1289 = vpop.f32.mrf.mxu0
      %v1290 = vadd.f32 0.0, %v1289
      %1291 = vmatmul.f32.gmra.mxu0 %v1165
      %v1292 = vpop.f32.mrf.mxu0
      %v1293 = vadd.f32 0.0, %v1292
      %1294 = vmatmul.f32.gmra.mxu0 %v1168
      %v1295 = vpop.f32.mrf.mxu0
      %v1296 = vadd.f32 0.0, %v1295
      %1297 = vmatmul.f32.gmra.mxu0 %v1171
      %v1298 = vpop.f32.mrf.mxu0
      %v1299 = vadd.f32 0.0, %v1298
      %1300 = vmatmul.f32.gmra.mxu0 %v1174
      %v1301 = vpop.f32.mrf.mxu0
      %v1302 = vadd.f32 0.0, %v1301
      %1303 = vmatmul.f32.gmra.mxu0 %v1177
      %v1304 = vpop.f32.mrf.mxu0
      %v1305 = vadd.f32 0.0, %v1304
      %1306 = vmatmul.f32.gmra.mxu0 %v1180
      %v1307 = vpop.f32.mrf.mxu0
      %v1308 = vadd.f32 0.0, %v1307
      %1309 = vmatmul.f32.gmra.mxu0 %v1183
      %v1310 = vpop.f32.mrf.mxu0
      %v1311 = vadd.f32 0.0, %v1310
      %1312 = vmatmul.f32.gmra.mxu0 %v1186
      %v1313 = vpop.f32.mrf.mxu0
      %v1314 = vadd.f32 0.0, %v1313
      %1315 = vmatmul.f32.gmra.mxu0 %v1189
      %v1316 = vpop.f32.mrf.mxu0
      %v1317 = vadd.f32 0.0, %v1316
      %1318 = vmatmul.f32.gmra.mxu0 %v1192
      %v1319 = vpop.f32.mrf.mxu0
      %v1320 = vadd.f32 0.0, %v1319
      %1321 = vmatmul.f32.gmra.mxu0 %v1195
      %v1322 = vpop.f32.mrf.mxu0
      %v1323 = vadd.f32 0.0, %v1322
      %1324 = vmatmul.f32.gmra.mxu0 %v1198
      %v1325 = vpop.f32.mrf.mxu0
      %v1326 = vadd.f32 0.0, %v1325
      %1327 = vmatmul.f32.gmra.mxu0 %v1201
      %v1328 = vpop.f32.mrf.mxu0
      %v1329 = vadd.f32 0.0, %v1328
      %1330 = vdwg.mxu0
      %v1331 = vadd.f32 %v1021, %v1224
      %v1332 = vadd.f32 %v1022, %v1227
      %v1333 = vadd.f32 %v1023, %v1230
      %v1334 = vadd.f32 %v1024, %v1233
      %v1335 = vadd.f32 %v1025, %v1236
      %v1336 = vadd.f32 %v1026, %v1239
      %v1337 = vadd.f32 %v1027, %v1242
      %v1338 = vadd.f32 %v1028, %v1245
      %v1339 = vadd.f32 %v1029, %v1248
      %v1340 = vadd.f32 %v1030, %v1251
      %v1341 = vadd.f32 %v1031, %v1254
      %v1342 = vadd.f32 %v1032, %v1257
      %v1343 = vadd.f32 %v1033, %v1260
      %v1344 = vadd.f32 %v1034, %v1263
      %v1345 = vadd.f32 %v1035, %v1266
      %v1346 = vadd.f32 %v1036, %v1269
      %v1347 = vadd.f32 %v1037, %v1272
      %v1348 = vadd.f32 %v1038, %v1275
      %v1349 = vadd.f32 %v1039, %v1278
      %v1350 = vadd.f32 %v1040, %v1281
      %v1351 = vadd.f32 %v1041, %v1284
      %v1352 = vadd.f32 %v1042, %v1287
      %v1353 = vadd.f32 %v1043, %v1290
      %v1354 = vadd.f32 %v1044, %v1293
      %v1355 = vadd.f32 %v1045, %v1296
      %v1356 = vadd.f32 %v1046, %v1299
      %v1357 = vadd.f32 %v1047, %v1302
      %v1358 = vadd.f32 %v1048, %v1305
      %v1359 = vadd.f32 %v1049, %v1308
      %v1360 = vadd.f32 %v1050, %v1311
      %v1361 = vadd.f32 %v1051, %v1314
      %v1362 = vadd.f32 %v1052, %v1317
      %v1363 = vadd.f32 %v1053, %v1320
      %v1364 = vadd.f32 %v1054, %v1323
      %v1365 = vadd.f32 %v1055, %v1326
      %v1366 = vadd.f32 %v1056, %v1329
      %v1367 = vld [vmem:[%s192 + $0x13] sm:$0xff]
      %v1368 = vld [vmem:[%s192 + $0x1b] sm:$0xff]
      %v1369 = vld [vmem:[%s192 + $0x23] sm:$0xff]
      %v1370 = vld [vmem:[%s192 + $0x2b] sm:$0xff]
      %v1371 = vld [vmem:[%s192 + $0x33] sm:$0xff]
      %v1372 = vld [vmem:[%s192 + $0x3b] sm:$0xff]
      %v1373 = vld [vmem:[%s192 + $0x43] sm:$0xff]
      %v1374 = vld [vmem:[%s192 + $0x4b] sm:$0xff]
      %v1375 = vld [vmem:[%s192 + $0x53] sm:$0xff]
      %v1376 = vld [vmem:[%s192 + $0x5b] sm:$0xff]
      %v1377 = vld [vmem:[%s192 + $0x63] sm:$0xff]
      %v1378 = vld [vmem:[%s192 + $0x6b] sm:$0xff]
      %v1379 = vld [vmem:[%s192 + $0x73] sm:$0xff]
      %v1380 = vld [vmem:[%s192 + $0x7b] sm:$0xff]
      %v1381 = vld [vmem:[%s192 + $0x83] sm:$0xff]
      %v1382 = vld [vmem:[%s192 + $0x8b] sm:$0xff]
      %v1383 = vld [vmem:[%s192 + $0x93] sm:$0xff]
      %v1384 = vld [vmem:[%s192 + $0x9b] sm:$0xff]
      %v1385 = vld [vmem:[%s192 + $0xa3] sm:$0xff]
      %v1386 = vld [vmem:[%s192 + $0xab] sm:$0xff]
      %v1387 = vld [vmem:[%s192 + $0xb3] sm:$0xff]
      %v1388 = vld [vmem:[%s192 + $0xbb] sm:$0xff]
      %v1389 = vld [vmem:[%s192 + $0xc3] sm:$0xff]
      %v1390 = vld [vmem:[%s192 + $0xcb] sm:$0xff]
      %v1391 = vld [vmem:[%s192 + $0xd3] sm:$0xff]
      %v1392 = vld [vmem:[%s192 + $0xdb] sm:$0xff]
      %v1393 = vld [vmem:[%s192 + $0xe3] sm:$0xff]
      %v1394 = vld [vmem:[%s192 + $0xeb] sm:$0xff]
      %v1395 = vld [vmem:[%s192 + $0xf3] sm:$0xff]
      %v1396 = vld [vmem:[%s192 + $0xfb] sm:$0xff]
      %v1397 = vld [vmem:[%s192 + $0x103] sm:$0xff]
      %v1398 = vld [vmem:[%s192 + $0x10b] sm:$0xff]
      %v1399 = vld [vmem:[%s192 + $0x113] sm:$0xff]
      %v1400 = vld [vmem:[%s192 + $0x11b] sm:$0xff]
      %v1401 = vld [vmem:[%s192 + $0x123] sm:$0xff]
      %v1402 = vld [vmem:[%s192 + $0x12b] sm:$0xff]
      %s1403 = scalar_lea.vmem %s1, 16
      %v1404 = vld [vmem:[%s1403] sm:$0xf]
      %v1406 = vsel %vm273, %v1367, 0
      %v1409 = vsel %vm273, %v1368, 0
      %v1412 = vsel %vm273, %v1369, 0
      %v1415 = vsel %vm273, %v1370, 0
      %v1418 = vsel %vm273, %v1371, 0
      %v1421 = vsel %vm273, %v1372, 0
      %v1424 = vsel %vm273, %v1373, 0
      %v1427 = vsel %vm273, %v1374, 0
      %v1430 = vsel %vm273, %v1375, 0
      %v1433 = vsel %vm273, %v1376, 0
      %v1436 = vsel %vm273, %v1377, 0
      %v1439 = vsel %vm273, %v1378, 0
      %v1442 = vsel %vm273, %v1379, 0
      %v1445 = vsel %vm273, %v1380, 0
      %v1448 = vsel %vm273, %v1381, 0
      %v1451 = vsel %vm273, %v1382, 0
      %v1454 = vsel %vm273, %v1383, 0
      %v1457 = vsel %vm273, %v1384, 0
      %v1460 = vsel %vm273, %v1385, 0
      %v1463 = vsel %vm273, %v1386, 0
      %v1466 = vsel %vm273, %v1387, 0
      %v1469 = vsel %vm273, %v1388, 0
      %v1472 = vsel %vm273, %v1389, 0
      %v1475 = vsel %vm273, %v1390, 0
      %v1478 = vsel %vm273, %v1391, 0
      %v1481 = vsel %vm273, %v1392, 0
      %v1484 = vsel %vm273, %v1393, 0
      %v1487 = vsel %vm273, %v1394, 0
      %v1490 = vsel %vm273, %v1395, 0
      %v1493 = vsel %vm273, %v1396, 0
      %v1496 = vsel %vm273, %v1397, 0
      %v1499 = vsel %vm273, %v1398, 0
      %v1502 = vsel %vm273, %v1399, 0
      %v1505 = vsel %vm273, %v1400, 0
      %v1508 = vsel %vm273, %v1401, 0
      %v1511 = vsel %vm273, %v1402, 0
      %v1514 = vsel %vm382, %v1404, 0
      %1516 = vmatpush.msra.mxu0 0.0
      %1517 = vmatpush.msra.mxu0 0.0
      %1518 = vmatpush.msra.mxu0 0.0
      %1519 = vmatpush.msra.mxu0 0.0
      %1520 = vmatpush.msra.mxu0 0.0
      %1521 = vmatpush.msra.mxu0 0.0
      %1522 = vmatpush.msra.mxu0 0.0
      %1523 = vmatpush.msra.mxu0 0.0
      %1524 = vmatpush.msra.mxu0 0.0
      %1525 = vmatpush.msra.mxu0 0.0
      %1526 = vmatpush.msra.mxu0 0.0
      %1527 = vmatpush.msra.mxu0 0.0
      %1528 = vmatpush.msra.mxu0 0.0
      %1529 = vmatpush.msra.mxu0 0.0
      %1530 = vmatpush.msra.mxu0 0.0
      %1531 = vmatpush.msra.mxu0 %v1514
      %1532 = vmatmul.f32.gmra.mxu0 %v1406
      %v1533 = vpop.f32.mrf.mxu0
      %v1534 = vadd.f32 0.0, %v1533
      %1535 = vmatmul.f32.gmra.mxu0 %v1409
      %v1536 = vpop.f32.mrf.mxu0
      %v1537 = vadd.f32 0.0, %v1536
      %1538 = vmatmul.f32.gmra.mxu0 %v1412
      %v1539 = vpop.f32.mrf.mxu0
      %v1540 = vadd.f32 0.0, %v1539
      %1541 = vmatmul.f32.gmra.mxu0 %v1415
      %v1542 = vpop.f32.mrf.mxu0
      %v1543 = vadd.f32 0.0, %v1542
      %1544 = vmatmul.f32.gmra.mxu0 %v1418
      %v1545 = vpop.f32.mrf.mxu0
      %v1546 = vadd.f32 0.0, %v1545
      %1547 = vmatmul.f32.gmra.mxu0 %v1421
      %v1548 = vpop.f32.mrf.mxu0
      %v1549 = vadd.f32 0.0, %v1548
      %1550 = vmatmul.f32.gmra.mxu0 %v1424
      %v1551 = vpop.f32.mrf.mxu0
      %v1552 = vadd.f32 0.0, %v1551
      %1553 = vmatmul.f32.gmra.mxu0 %v1427
      %v1554 = vpop.f32.mrf.mxu0
      %v1555 = vadd.f32 0.0, %v1554
      %1556 = vmatmul.f32.gmra.mxu0 %v1430
      %v1557 = vpop.f32.mrf.mxu0
      %v1558 = vadd.f32 0.0, %v1557
      %1559 = vmatmul.f32.gmra.mxu0 %v1433
      %v1560 = vpop.f32.mrf.mxu0
      %v1561 = vadd.f32 0.0, %v1560
      %1562 = vmatmul.f32.gmra.mxu0 %v1436
      %v1563 = vpop.f32.mrf.mxu0
      %v1564 = vadd.f32 0.0, %v1563
      %1565 = vmatmul.f32.gmra.mxu0 %v1439
      %v1566 = vpop.f32.mrf.mxu0
      %v1567 = vadd.f32 0.0, %v1566
      %1568 = vmatmul.f32.gmra.mxu0 %v1442
      %v1569 = vpop.f32.mrf.mxu0
      %v1570 = vadd.f32 0.0, %v1569
      %1571 = vmatmul.f32.gmra.mxu0 %v1445
      %v1572 = vpop.f32.mrf.mxu0
      %v1573 = vadd.f32 0.0, %v1572
      %1574 = vmatmul.f32.gmra.mxu0 %v1448
      %v1575 = vpop.f32.mrf.mxu0
      %v1576 = vadd.f32 0.0, %v1575
      %1577 = vmatmul.f32.gmra.mxu0 %v1451
      %v1578 = vpop.f32.mrf.mxu0
      %v1579 = vadd.f32 0.0, %v1578
      %1580 = vmatmul.f32.gmra.mxu0 %v1454
      %v1581 = vpop.f32.mrf.mxu0
      %v1582 = vadd.f32 0.0, %v1581
      %1583 = vmatmul.f32.gmra.mxu0 %v1457
      %v1584 = vpop.f32.mrf.mxu0
      %v1585 = vadd.f32 0.0, %v1584
      %1586 = vmatmul.f32.gmra.mxu0 %v1460
      %v1587 = vpop.f32.mrf.mxu0
      %v1588 = vadd.f32 0.0, %v1587
      %1589 = vmatmul.f32.gmra.mxu0 %v1463
      %v1590 = vpop.f32.mrf.mxu0
      %v1591 = vadd.f32 0.0, %v1590
      %1592 = vmatmul.f32.gmra.mxu0 %v1466
      %v1593 = vpop.f32.mrf.mxu0
      %v1594 = vadd.f32 0.0, %v1593
      %1595 = vmatmul.f32.gmra.mxu0 %v1469
      %v1596 = vpop.f32.mrf.mxu0
      %v1597 = vadd.f32 0.0, %v1596
      %1598 = vmatmul.f32.gmra.mxu0 %v1472
      %v1599 = vpop.f32.mrf.mxu0
      %v1600 = vadd.f32 0.0, %v1599
      %1601 = vmatmul.f32.gmra.mxu0 %v1475
      %v1602 = vpop.f32.mrf.mxu0
      %v1603 = vadd.f32 0.0, %v1602
      %1604 = vmatmul.f32.gmra.mxu0 %v1478
      %v1605 = vpop.f32.mrf.mxu0
      %v1606 = vadd.f32 0.0, %v1605
      %1607 = vmatmul.f32.gmra.mxu0 %v1481
      %v1608 = vpop.f32.mrf.mxu0
      %v1609 = vadd.f32 0.0, %v1608
      %1610 = vmatmul.f32.gmra.mxu0 %v1484
      %v1611 = vpop.f32.mrf.mxu0
      %v1612 = vadd.f32 0.0, %v1611
      %1613 = vmatmul.f32.gmra.mxu0 %v1487
      %v1614 = vpop.f32.mrf.mxu0
      %v1615 = vadd.f32 0.0, %v1614
      %1616 = vmatmul.f32.gmra.mxu0 %v1490
      %v1617 = vpop.f32.mrf.mxu0
      %v1618 = vadd.f32 0.0, %v1617
      %1619 = vmatmul.f32.gmra.mxu0 %v1493
      %v1620 = vpop.f32.mrf.mxu0
      %v1621 = vadd.f32 0.0, %v1620
      %1622 = vmatmul.f32.gmra.mxu0 %v1496
      %v1623 = vpop.f32.mrf.mxu0
      %v1624 = vadd.f32 0.0, %v1623
      %1625 = vmatmul.f32.gmra.mxu0 %v1499
      %v1626 = vpop.f32.mrf.mxu0
      %v1627 = vadd.f32 0.0, %v1626
      %1628 = vmatmul.f32.gmra.mxu0 %v1502
      %v1629 = vpop.f32.mrf.mxu0
      %v1630 = vadd.f32 0.0, %v1629
      %1631 = vmatmul.f32.gmra.mxu0 %v1505
      %v1632 = vpop.f32.mrf.mxu0
      %v1633 = vadd.f32 0.0, %v1632
      %1634 = vmatmul.f32.gmra.mxu0 %v1508
      %v1635 = vpop.f32.mrf.mxu0
      %v1636 = vadd.f32 0.0, %v1635
      %1637 = vmatmul.f32.gmra.mxu0 %v1511
      %v1638 = vpop.f32.mrf.mxu0
      %v1639 = vadd.f32 0.0, %v1638
      %1640 = vdwg.mxu0
      %v1641 = vadd.f32 %v1331, %v1534
      %v1642 = vadd.f32 %v1332, %v1537
      %v1643 = vadd.f32 %v1333, %v1540
      %v1644 = vadd.f32 %v1334, %v1543
      %v1645 = vadd.f32 %v1335, %v1546
      %v1646 = vadd.f32 %v1336, %v1549
      %v1647 = vadd.f32 %v1337, %v1552
      %v1648 = vadd.f32 %v1338, %v1555
      %v1649 = vadd.f32 %v1339, %v1558
      %v1650 = vadd.f32 %v1340, %v1561
      %v1651 = vadd.f32 %v1341, %v1564
      %v1652 = vadd.f32 %v1342, %v1567
      %v1653 = vadd.f32 %v1343, %v1570
      %v1654 = vadd.f32 %v1344, %v1573
      %v1655 = vadd.f32 %v1345, %v1576
      %v1656 = vadd.f32 %v1346, %v1579
      %v1657 = vadd.f32 %v1347, %v1582
      %v1658 = vadd.f32 %v1348, %v1585
      %v1659 = vadd.f32 %v1349, %v1588
      %v1660 = vadd.f32 %v1350, %v1591
      %v1661 = vadd.f32 %v1351, %v1594
      %v1662 = vadd.f32 %v1352, %v1597
      %v1663 = vadd.f32 %v1353, %v1600
      %v1664 = vadd.f32 %v1354, %v1603
      %v1665 = vadd.f32 %v1355, %v1606
      %v1666 = vadd.f32 %v1356, %v1609
      %v1667 = vadd.f32 %v1357, %v1612
      %v1668 = vadd.f32 %v1358, %v1615
      %v1669 = vadd.f32 %v1359, %v1618
      %v1670 = vadd.f32 %v1360, %v1621
      %v1671 = vadd.f32 %v1361, %v1624
      %v1672 = vadd.f32 %v1362, %v1627
      %v1673 = vadd.f32 %v1363, %v1630
      %v1674 = vadd.f32 %v1364, %v1633
      %v1675 = vadd.f32 %v1365, %v1636
      %v1676 = vadd.f32 %v1366, %v1639
      %v1677 = vld [vmem:[%s192 + $0x14] sm:$0xff]
      %v1678 = vld [vmem:[%s192 + $0x1c] sm:$0xff]
      %v1679 = vld [vmem:[%s192 + $0x24] sm:$0xff]
      %v1680 = vld [vmem:[%s192 + $0x2c] sm:$0xff]
      %v1681 = vld [vmem:[%s192 + $0x34] sm:$0xff]
      %v1682 = vld [vmem:[%s192 + $0x3c] sm:$0xff]
      %v1683 = vld [vmem:[%s192 + $0x44] sm:$0xff]
      %v1684 = vld [vmem:[%s192 + $0x4c] sm:$0xff]
      %v1685 = vld [vmem:[%s192 + $0x54] sm:$0xff]
      %v1686 = vld [vmem:[%s192 + $0x5c] sm:$0xff]
      %v1687 = vld [vmem:[%s192 + $0x64] sm:$0xff]
      %v1688 = vld [vmem:[%s192 + $0x6c] sm:$0xff]
      %v1689 = vld [vmem:[%s192 + $0x74] sm:$0xff]
      %v1690 = vld [vmem:[%s192 + $0x7c] sm:$0xff]
      %v1691 = vld [vmem:[%s192 + $0x84] sm:$0xff]
      %v1692 = vld [vmem:[%s192 + $0x8c] sm:$0xff]
      %v1693 = vld [vmem:[%s192 + $0x94] sm:$0xff]
      %v1694 = vld [vmem:[%s192 + $0x9c] sm:$0xff]
      %v1695 = vld [vmem:[%s192 + $0xa4] sm:$0xff]
      %v1696 = vld [vmem:[%s192 + $0xac] sm:$0xff]
      %v1697 = vld [vmem:[%s192 + $0xb4] sm:$0xff]
      %v1698 = vld [vmem:[%s192 + $0xbc] sm:$0xff]
      %v1699 = vld [vmem:[%s192 + $0xc4] sm:$0xff]
      %v1700 = vld [vmem:[%s192 + $0xcc] sm:$0xff]
      %v1701 = vld [vmem:[%s192 + $0xd4] sm:$0xff]
      %v1702 = vld [vmem:[%s192 + $0xdc] sm:$0xff]
      %v1703 = vld [vmem:[%s192 + $0xe4] sm:$0xff]
      %v1704 = vld [vmem:[%s192 + $0xec] sm:$0xff]
      %v1705 = vld [vmem:[%s192 + $0xf4] sm:$0xff]
      %v1706 = vld [vmem:[%s192 + $0xfc] sm:$0xff]
      %v1707 = vld [vmem:[%s192 + $0x104] sm:$0xff]
      %v1708 = vld [vmem:[%s192 + $0x10c] sm:$0xff]
      %v1709 = vld [vmem:[%s192 + $0x114] sm:$0xff]
      %v1710 = vld [vmem:[%s192 + $0x11c] sm:$0xff]
      %v1711 = vld [vmem:[%s192 + $0x124] sm:$0xff]
      %v1712 = vld [vmem:[%s192 + $0x12c] sm:$0xff]
      %s1713 = scalar_lea.vmem %s1, 20
      %v1714 = vld [vmem:[%s1713] sm:$0xf]
      %v1716 = vsel %vm273, %v1677, 0
      %v1719 = vsel %vm273, %v1678, 0
      %v1722 = vsel %vm273, %v1679, 0
      %v1725 = vsel %vm273, %v1680, 0
      %v1728 = vsel %vm273, %v1681, 0
      %v1731 = vsel %vm273, %v1682, 0
      %v1734 = vsel %vm273, %v1683, 0
      %v1737 = vsel %vm273, %v1684, 0
      %v1740 = vsel %vm273, %v1685, 0
      %v1743 = vsel %vm273, %v1686, 0
      %v1746 = vsel %vm273, %v1687, 0
      %v1749 = vsel %vm273, %v1688, 0
      %v1752 = vsel %vm273, %v1689, 0
      %v1755 = vsel %vm273, %v1690, 0
      %v1758 = vsel %vm273, %v1691, 0
      %v1761 = vsel %vm273, %v1692, 0
      %v1764 = vsel %vm273, %v1693, 0
      %v1767 = vsel %vm273, %v1694, 0
      %v1770 = vsel %vm273, %v1695, 0
      %v1773 = vsel %vm273, %v1696, 0
      %v1776 = vsel %vm273, %v1697, 0
      %v1779 = vsel %vm273, %v1698, 0
      %v1782 = vsel %vm273, %v1699, 0
      %v1785 = vsel %vm273, %v1700, 0
      %v1788 = vsel %vm273, %v1701, 0
      %v1791 = vsel %vm273, %v1702, 0
      %v1794 = vsel %vm273, %v1703, 0
      %v1797 = vsel %vm273, %v1704, 0
      %v1800 = vsel %vm273, %v1705, 0
      %v1803 = vsel %vm273, %v1706, 0
      %v1806 = vsel %vm273, %v1707, 0
      %v1809 = vsel %vm273, %v1708, 0
      %v1812 = vsel %vm273, %v1709, 0
      %v1815 = vsel %vm273, %v1710, 0
      %v1818 = vsel %vm273, %v1711, 0
      %v1821 = vsel %vm273, %v1712, 0
      %v1824 = vsel %vm382, %v1714, 0
      %1826 = vmatpush.msra.mxu0 0.0
      %1827 = vmatpush.msra.mxu0 0.0
      %1828 = vmatpush.msra.mxu0 0.0
      %1829 = vmatpush.msra.mxu0 0.0
      %1830 = vmatpush.msra.mxu0 0.0
      %1831 = vmatpush.msra.mxu0 0.0
      %1832 = vmatpush.msra.mxu0 0.0
      %1833 = vmatpush.msra.mxu0 0.0
      %1834 = vmatpush.msra.mxu0 0.0
      %1835 = vmatpush.msra.mxu0 0.0
      %1836 = vmatpush.msra.mxu0 0.0
      %1837 = vmatpush.msra.mxu0 0.0
      %1838 = vmatpush.msra.mxu0 0.0
      %1839 = vmatpush.msra.mxu0 0.0
      %1840 = vmatpush.msra.mxu0 0.0
      %1841 = vmatpush.msra.mxu0 %v1824
      %1842 = vmatmul.f32.gmra.mxu0 %v1716
      %v1843 = vpop.f32.mrf.mxu0
      %v1844 = vadd.f32 0.0, %v1843
      %1845 = vmatmul.f32.gmra.mxu0 %v1719
      %v1846 = vpop.f32.mrf.mxu0
      %v1847 = vadd.f32 0.0, %v1846
      %1848 = vmatmul.f32.gmra.mxu0 %v1722
      %v1849 = vpop.f32.mrf.mxu0
      %v1850 = vadd.f32 0.0, %v1849
      %1851 = vmatmul.f32.gmra.mxu0 %v1725
      %v1852 = vpop.f32.mrf.mxu0
      %v1853 = vadd.f32 0.0, %v1852
      %1854 = vmatmul.f32.gmra.mxu0 %v1728
      %v1855 = vpop.f32.mrf.mxu0
      %v1856 = vadd.f32 0.0, %v1855
      %1857 = vmatmul.f32.gmra.mxu0 %v1731
      %v1858 = vpop.f32.mrf.mxu0
      %v1859 = vadd.f32 0.0, %v1858
      %1860 = vmatmul.f32.gmra.mxu0 %v1734
      %v1861 = vpop.f32.mrf.mxu0
      %v1862 = vadd.f32 0.0, %v1861
      %1863 = vmatmul.f32.gmra.mxu0 %v1737
      %v1864 = vpop.f32.mrf.mxu0
      %v1865 = vadd.f32 0.0, %v1864
      %1866 = vmatmul.f32.gmra.mxu0 %v1740
      %v1867 = vpop.f32.mrf.mxu0
      %v1868 = vadd.f32 0.0, %v1867
      %1869 = vmatmul.f32.gmra.mxu0 %v1743
      %v1870 = vpop.f32.mrf.mxu0
      %v1871 = vadd.f32 0.0, %v1870
      %1872 = vmatmul.f32.gmra.mxu0 %v1746
      %v1873 = vpop.f32.mrf.mxu0
      %v1874 = vadd.f32 0.0, %v1873
      %1875 = vmatmul.f32.gmra.mxu0 %v1749
      %v1876 = vpop.f32.mrf.mxu0
      %v1877 = vadd.f32 0.0, %v1876
      %1878 = vmatmul.f32.gmra.mxu0 %v1752
      %v1879 = vpop.f32.mrf.mxu0
      %v1880 = vadd.f32 0.0, %v1879
      %1881 = vmatmul.f32.gmra.mxu0 %v1755
      %v1882 = vpop.f32.mrf.mxu0
      %v1883 = vadd.f32 0.0, %v1882
      %1884 = vmatmul.f32.gmra.mxu0 %v1758
      %v1885 = vpop.f32.mrf.mxu0
      %v1886 = vadd.f32 0.0, %v1885
      %1887 = vmatmul.f32.gmra.mxu0 %v1761
      %v1888 = vpop.f32.mrf.mxu0
      %v1889 = vadd.f32 0.0, %v1888
      %1890 = vmatmul.f32.gmra.mxu0 %v1764
      %v1891 = vpop.f32.mrf.mxu0
      %v1892 = vadd.f32 0.0, %v1891
      %1893 = vmatmul.f32.gmra.mxu0 %v1767
      %v1894 = vpop.f32.mrf.mxu0
      %v1895 = vadd.f32 0.0, %v1894
      %1896 = vmatmul.f32.gmra.mxu0 %v1770
      %v1897 = vpop.f32.mrf.mxu0
      %v1898 = vadd.f32 0.0, %v1897
      %1899 = vmatmul.f32.gmra.mxu0 %v1773
      %v1900 = vpop.f32.mrf.mxu0
      %v1901 = vadd.f32 0.0, %v1900
      %1902 = vmatmul.f32.gmra.mxu0 %v1776
      %v1903 = vpop.f32.mrf.mxu0
      %v1904 = vadd.f32 0.0, %v1903
      %1905 = vmatmul.f32.gmra.mxu0 %v1779
      %v1906 = vpop.f32.mrf.mxu0
      %v1907 = vadd.f32 0.0, %v1906
      %1908 = vmatmul.f32.gmra.mxu0 %v1782
      %v1909 = vpop.f32.mrf.mxu0
      %v1910 = vadd.f32 0.0, %v1909
      %1911 = vmatmul.f32.gmra.mxu0 %v1785
      %v1912 = vpop.f32.mrf.mxu0
      %v1913 = vadd.f32 0.0, %v1912
      %1914 = vmatmul.f32.gmra.mxu0 %v1788
      %v1915 = vpop.f32.mrf.mxu0
      %v1916 = vadd.f32 0.0, %v1915
      %1917 = vmatmul.f32.gmra.mxu0 %v1791
      %v1918 = vpop.f32.mrf.mxu0
      %v1919 = vadd.f32 0.0, %v1918
      %1920 = vmatmul.f32.gmra.mxu0 %v1794
      %v1921 = vpop.f32.mrf.mxu0
      %v1922 = vadd.f32 0.0, %v1921
      %1923 = vmatmul.f32.gmra.mxu0 %v1797
      %v1924 = vpop.f32.mrf.mxu0
      %v1925 = vadd.f32 0.0, %v1924
      %1926 = vmatmul.f32.gmra.mxu0 %v1800
      %v1927 = vpop.f32.mrf.mxu0
      %v1928 = vadd.f32 0.0, %v1927
      %1929 = vmatmul.f32.gmra.mxu0 %v1803
      %v1930 = vpop.f32.mrf.mxu0
      %v1931 = vadd.f32 0.0, %v1930
      %1932 = vmatmul.f32.gmra.mxu0 %v1806
      %v1933 = vpop.f32.mrf.mxu0
      %v1934 = vadd.f32 0.0, %v1933
      %1935 = vmatmul.f32.gmra.mxu0 %v1809
      %v1936 = vpop.f32.mrf.mxu0
      %v1937 = vadd.f32 0.0, %v1936
      %1938 = vmatmul.f32.gmra.mxu0 %v1812
      %v1939 = vpop.f32.mrf.mxu0
      %v1940 = vadd.f32 0.0, %v1939
      %1941 = vmatmul.f32.gmra.mxu0 %v1815
      %v1942 = vpop.f32.mrf.mxu0
      %v1943 = vadd.f32 0.0, %v1942
      %1944 = vmatmul.f32.gmra.mxu0 %v1818
      %v1945 = vpop.f32.mrf.mxu0
      %v1946 = vadd.f32 0.0, %v1945
      %1947 = vmatmul.f32.gmra.mxu0 %v1821
      %v1948 = vpop.f32.mrf.mxu0
      %v1949 = vadd.f32 0.0, %v1948
      %1950 = vdwg.mxu0
      %v1951 = vadd.f32 %v1641, %v1844
      %v1952 = vadd.f32 %v1642, %v1847
      %v1953 = vadd.f32 %v1643, %v1850
      %v1954 = vadd.f32 %v1644, %v1853
      %v1955 = vadd.f32 %v1645, %v1856
      %v1956 = vadd.f32 %v1646, %v1859
      %v1957 = vadd.f32 %v1647, %v1862
      %v1958 = vadd.f32 %v1648, %v1865
      %v1959 = vadd.f32 %v1649, %v1868
      %v1960 = vadd.f32 %v1650, %v1871
      %v1961 = vadd.f32 %v1651, %v1874
      %v1962 = vadd.f32 %v1652, %v1877
      %v1963 = vadd.f32 %v1653, %v1880
      %v1964 = vadd.f32 %v1654, %v1883
      %v1965 = vadd.f32 %v1655, %v1886
      %v1966 = vadd.f32 %v1656, %v1889
      %v1967 = vadd.f32 %v1657, %v1892
      %v1968 = vadd.f32 %v1658, %v1895
      %v1969 = vadd.f32 %v1659, %v1898
      %v1970 = vadd.f32 %v1660, %v1901
      %v1971 = vadd.f32 %v1661, %v1904
      %v1972 = vadd.f32 %v1662, %v1907
      %v1973 = vadd.f32 %v1663, %v1910
      %v1974 = vadd.f32 %v1664, %v1913
      %v1975 = vadd.f32 %v1665, %v1916
      %v1976 = vadd.f32 %v1666, %v1919
      %v1977 = vadd.f32 %v1667, %v1922
      %v1978 = vadd.f32 %v1668, %v1925
      %v1979 = vadd.f32 %v1669, %v1928
      %v1980 = vadd.f32 %v1670, %v1931
      %v1981 = vadd.f32 %v1671, %v1934
      %v1982 = vadd.f32 %v1672, %v1937
      %v1983 = vadd.f32 %v1673, %v1940
      %v1984 = vadd.f32 %v1674, %v1943
      %v1985 = vadd.f32 %v1675, %v1946
      %v1986 = vadd.f32 %v1676, %v1949
      %v1987 = vld [vmem:[%s192 + $0x24] sm:$0xff]
      %v1988 = vld [vmem:[%s192 + $0x2c] sm:$0xff]
      %v1989 = vld [vmem:[%s192 + $0x34] sm:$0xff]
      %v1990 = vld [vmem:[%s192 + $0x3c] sm:$0xff]
      %v1991 = vld [vmem:[%s192 + $0x44] sm:$0xff]
      %v1992 = vld [vmem:[%s192 + $0x4c] sm:$0xff]
      %v1993 = vld [vmem:[%s192 + $0x54] sm:$0xff]
      %v1994 = vld [vmem:[%s192 + $0x5c] sm:$0xff]
      %v1995 = vld [vmem:[%s192 + $0x64] sm:$0xff]
      %v1996 = vld [vmem:[%s192 + $0x6c] sm:$0xff]
      %v1997 = vld [vmem:[%s192 + $0x74] sm:$0xff]
      %v1998 = vld [vmem:[%s192 + $0x7c] sm:$0xff]
      %v1999 = vld [vmem:[%s192 + $0x84] sm:$0xff]
      %v2000 = vld [vmem:[%s192 + $0x8c] sm:$0xff]
      %v2001 = vld [vmem:[%s192 + $0x94] sm:$0xff]
      %v2002 = vld [vmem:[%s192 + $0x9c] sm:$0xff]
      %v2003 = vld [vmem:[%s192 + $0xa4] sm:$0xff]
      %v2004 = vld [vmem:[%s192 + $0xac] sm:$0xff]
      %v2005 = vld [vmem:[%s192 + $0xb4] sm:$0xff]
      %v2006 = vld [vmem:[%s192 + $0xbc] sm:$0xff]
      %v2007 = vld [vmem:[%s192 + $0xc4] sm:$0xff]
      %v2008 = vld [vmem:[%s192 + $0xcc] sm:$0xff]
      %v2009 = vld [vmem:[%s192 + $0xd4] sm:$0xff]
      %v2010 = vld [vmem:[%s192 + $0xdc] sm:$0xff]
      %v2011 = vld [vmem:[%s192 + $0xe4] sm:$0xff]
      %v2012 = vld [vmem:[%s192 + $0xec] sm:$0xff]
      %v2013 = vld [vmem:[%s192 + $0xf4] sm:$0xff]
      %v2014 = vld [vmem:[%s192 + $0xfc] sm:$0xff]
      %v2015 = vld [vmem:[%s192 + $0x104] sm:$0xff]
      %v2016 = vld [vmem:[%s192 + $0x10c] sm:$0xff]
      %v2017 = vld [vmem:[%s192 + $0x114] sm:$0xff]
      %v2018 = vld [vmem:[%s192 + $0x11c] sm:$0xff]
      %v2019 = vld [vmem:[%s192 + $0x124] sm:$0xff]
      %v2020 = vld [vmem:[%s192 + $0x12c] sm:$0xff]
      %v2021 = vld [vmem:[%s192 + $0x134] sm:$0xff]
      %v2022 = vld [vmem:[%s192 + $0x13c] sm:$0xff]
      %s2023 = scalar_lea.vmem %s1, 24
      %v2024 = vld [vmem:[%s2023] sm:$0xf]
      %v2026 = vsel %vm273, %v1987, 0
      %v2029 = vsel %vm273, %v1988, 0
      %v2032 = vsel %vm273, %v1989, 0
      %v2035 = vsel %vm273, %v1990, 0
      %v2038 = vsel %vm273, %v1991, 0
      %v2041 = vsel %vm273, %v1992, 0
      %v2044 = vsel %vm273, %v1993, 0
      %v2047 = vsel %vm273, %v1994, 0
      %v2050 = vsel %vm273, %v1995, 0
      %v2053 = vsel %vm273, %v1996, 0
      %v2056 = vsel %vm273, %v1997, 0
      %v2059 = vsel %vm273, %v1998, 0
      %v2062 = vsel %vm273, %v1999, 0
      %v2065 = vsel %vm273, %v2000, 0
      %v2068 = vsel %vm273, %v2001, 0
      %v2071 = vsel %vm273, %v2002, 0
      %v2074 = vsel %vm273, %v2003, 0
      %v2077 = vsel %vm273, %v2004, 0
      %v2080 = vsel %vm273, %v2005, 0
      %v2083 = vsel %vm273, %v2006, 0
      %v2086 = vsel %vm273, %v2007, 0
      %v2089 = vsel %vm273, %v2008, 0
      %v2092 = vsel %vm273, %v2009, 0
      %v2095 = vsel %vm273, %v2010, 0
      %v2098 = vsel %vm273, %v2011, 0
      %v2101 = vsel %vm273, %v2012, 0
      %v2104 = vsel %vm273, %v2013, 0
      %v2107 = vsel %vm273, %v2014, 0
      %v2110 = vsel %vm273, %v2015, 0
      %v2113 = vsel %vm273, %v2016, 0
      %v2116 = vsel %vm273, %v2017, 0
      %v2119 = vsel %vm273, %v2018, 0
      %v2122 = vsel %vm273, %v2019, 0
      %v2125 = vsel %vm273, %v2020, 0
      %v2128 = vsel %vm273, %v2021, 0
      %v2131 = vsel %vm273, %v2022, 0
      %v2134 = vsel %vm382, %v2024, 0
      %2136 = vmatpush.msra.mxu0 0.0
      %2137 = vmatpush.msra.mxu0 0.0
      %2138 = vmatpush.msra.mxu0 0.0
      %2139 = vmatpush.msra.mxu0 0.0
      %2140 = vmatpush.msra.mxu0 0.0
      %2141 = vmatpush.msra.mxu0 0.0
      %2142 = vmatpush.msra.mxu0 0.0
      %2143 = vmatpush.msra.mxu0 0.0
      %2144 = vmatpush.msra.mxu0 0.0
      %2145 = vmatpush.msra.mxu0 0.0
      %2146 = vmatpush.msra.mxu0 0.0
      %2147 = vmatpush.msra.mxu0 0.0
      %2148 = vmatpush.msra.mxu0 0.0
      %2149 = vmatpush.msra.mxu0 0.0
      %2150 = vmatpush.msra.mxu0 0.0
      %2151 = vmatpush.msra.mxu0 %v2134
      %2152 = vmatmul.f32.gmra.mxu0 %v2026
      %v2153 = vpop.f32.mrf.mxu0
      %v2154 = vadd.f32 0.0, %v2153
      %2155 = vmatmul.f32.gmra.mxu0 %v2029
      %v2156 = vpop.f32.mrf.mxu0
      %v2157 = vadd.f32 0.0, %v2156
      %2158 = vmatmul.f32.gmra.mxu0 %v2032
      %v2159 = vpop.f32.mrf.mxu0
      %v2160 = vadd.f32 0.0, %v2159
      %2161 = vmatmul.f32.gmra.mxu0 %v2035
      %v2162 = vpop.f32.mrf.mxu0
      %v2163 = vadd.f32 0.0, %v2162
      %2164 = vmatmul.f32.gmra.mxu0 %v2038
      %v2165 = vpop.f32.mrf.mxu0
      %v2166 = vadd.f32 0.0, %v2165
      %2167 = vmatmul.f32.gmra.mxu0 %v2041
      %v2168 = vpop.f32.mrf.mxu0
      %v2169 = vadd.f32 0.0, %v2168
      %2170 = vmatmul.f32.gmra.mxu0 %v2044
      %v2171 = vpop.f32.mrf.mxu0
      %v2172 = vadd.f32 0.0, %v2171
      %2173 = vmatmul.f32.gmra.mxu0 %v2047
      %v2174 = vpop.f32.mrf.mxu0
      %v2175 = vadd.f32 0.0, %v2174
      %2176 = vmatmul.f32.gmra.mxu0 %v2050
      %v2177 = vpop.f32.mrf.mxu0
      %v2178 = vadd.f32 0.0, %v2177
      %2179 = vmatmul.f32.gmra.mxu0 %v2053
      %v2180 = vpop.f32.mrf.mxu0
      %v2181 = vadd.f32 0.0, %v2180
      %2182 = vmatmul.f32.gmra.mxu0 %v2056
      %v2183 = vpop.f32.mrf.mxu0
      %v2184 = vadd.f32 0.0, %v2183
      %2185 = vmatmul.f32.gmra.mxu0 %v2059
      %v2186 = vpop.f32.mrf.mxu0
      %v2187 = vadd.f32 0.0, %v2186
      %2188 = vmatmul.f32.gmra.mxu0 %v2062
      %v2189 = vpop.f32.mrf.mxu0
      %v2190 = vadd.f32 0.0, %v2189
      %2191 = vmatmul.f32.gmra.mxu0 %v2065
      %v2192 = vpop.f32.mrf.mxu0
      %v2193 = vadd.f32 0.0, %v2192
      %2194 = vmatmul.f32.gmra.mxu0 %v2068
      %v2195 = vpop.f32.mrf.mxu0
      %v2196 = vadd.f32 0.0, %v2195
      %2197 = vmatmul.f32.gmra.mxu0 %v2071
      %v2198 = vpop.f32.mrf.mxu0
      %v2199 = vadd.f32 0.0, %v2198
      %2200 = vmatmul.f32.gmra.mxu0 %v2074
      %v2201 = vpop.f32.mrf.mxu0
      %v2202 = vadd.f32 0.0, %v2201
      %2203 = vmatmul.f32.gmra.mxu0 %v2077
      %v2204 = vpop.f32.mrf.mxu0
      %v2205 = vadd.f32 0.0, %v2204
      %2206 = vmatmul.f32.gmra.mxu0 %v2080
      %v2207 = vpop.f32.mrf.mxu0
      %v2208 = vadd.f32 0.0, %v2207
      %2209 = vmatmul.f32.gmra.mxu0 %v2083
      %v2210 = vpop.f32.mrf.mxu0
      %v2211 = vadd.f32 0.0, %v2210
      %2212 = vmatmul.f32.gmra.mxu0 %v2086
      %v2213 = vpop.f32.mrf.mxu0
      %v2214 = vadd.f32 0.0, %v2213
      %2215 = vmatmul.f32.gmra.mxu0 %v2089
      %v2216 = vpop.f32.mrf.mxu0
      %v2217 = vadd.f32 0.0, %v2216
      %2218 = vmatmul.f32.gmra.mxu0 %v2092
      %v2219 = vpop.f32.mrf.mxu0
      %v2220 = vadd.f32 0.0, %v2219
      %2221 = vmatmul.f32.gmra.mxu0 %v2095
      %v2222 = vpop.f32.mrf.mxu0
      %v2223 = vadd.f32 0.0, %v2222
      %2224 = vmatmul.f32.gmra.mxu0 %v2098
      %v2225 = vpop.f32.mrf.mxu0
      %v2226 = vadd.f32 0.0, %v2225
      %2227 = vmatmul.f32.gmra.mxu0 %v2101
      %v2228 = vpop.f32.mrf.mxu0
      %v2229 = vadd.f32 0.0, %v2228
      %2230 = vmatmul.f32.gmra.mxu0 %v2104
      %v2231 = vpop.f32.mrf.mxu0
      %v2232 = vadd.f32 0.0, %v2231
      %2233 = vmatmul.f32.gmra.mxu0 %v2107
      %v2234 = vpop.f32.mrf.mxu0
      %v2235 = vadd.f32 0.0, %v2234
      %2236 = vmatmul.f32.gmra.mxu0 %v2110
      %v2237 = vpop.f32.mrf.mxu0
      %v2238 = vadd.f32 0.0, %v2237
      %2239 = vmatmul.f32.gmra.mxu0 %v2113
      %v2240 = vpop.f32.mrf.mxu0
      %v2241 = vadd.f32 0.0, %v2240
      %2242 = vmatmul.f32.gmra.mxu0 %v2116
      %v2243 = vpop.f32.mrf.mxu0
      %v2244 = vadd.f32 0.0, %v2243
      %2245 = vmatmul.f32.gmra.mxu0 %v2119
      %v2246 = vpop.f32.mrf.mxu0
      %v2247 = vadd.f32 0.0, %v2246
      %2248 = vmatmul.f32.gmra.mxu0 %v2122
      %v2249 = vpop.f32.mrf.mxu0
      %v2250 = vadd.f32 0.0, %v2249
      %2251 = vmatmul.f32.gmra.mxu0 %v2125
      %v2252 = vpop.f32.mrf.mxu0
      %v2253 = vadd.f32 0.0, %v2252
      %2254 = vmatmul.f32.gmra.mxu0 %v2128
      %v2255 = vpop.f32.mrf.mxu0
      %v2256 = vadd.f32 0.0, %v2255
      %2257 = vmatmul.f32.gmra.mxu0 %v2131
      %v2258 = vpop.f32.mrf.mxu0
      %v2259 = vadd.f32 0.0, %v2258
      %2260 = vdwg.mxu0
      %v2261 = vadd.f32 %v1951, %v2154
      %v2262 = vadd.f32 %v1952, %v2157
      %v2263 = vadd.f32 %v1953, %v2160
      %v2264 = vadd.f32 %v1954, %v2163
      %v2265 = vadd.f32 %v1955, %v2166
      %v2266 = vadd.f32 %v1956, %v2169
      %v2267 = vadd.f32 %v1957, %v2172
      %v2268 = vadd.f32 %v1958, %v2175
      %v2269 = vadd.f32 %v1959, %v2178
      %v2270 = vadd.f32 %v1960, %v2181
      %v2271 = vadd.f32 %v1961, %v2184
      %v2272 = vadd.f32 %v1962, %v2187
      %v2273 = vadd.f32 %v1963, %v2190
      %v2274 = vadd.f32 %v1964, %v2193
      %v2275 = vadd.f32 %v1965, %v2196
      %v2276 = vadd.f32 %v1966, %v2199
      %v2277 = vadd.f32 %v1967, %v2202
      %v2278 = vadd.f32 %v1968, %v2205
      %v2279 = vadd.f32 %v1969, %v2208
      %v2280 = vadd.f32 %v1970, %v2211
      %v2281 = vadd.f32 %v1971, %v2214
      %v2282 = vadd.f32 %v1972, %v2217
      %v2283 = vadd.f32 %v1973, %v2220
      %v2284 = vadd.f32 %v1974, %v2223
      %v2285 = vadd.f32 %v1975, %v2226
      %v2286 = vadd.f32 %v1976, %v2229
      %v2287 = vadd.f32 %v1977, %v2232
      %v2288 = vadd.f32 %v1978, %v2235
      %v2289 = vadd.f32 %v1979, %v2238
      %v2290 = vadd.f32 %v1980, %v2241
      %v2291 = vadd.f32 %v1981, %v2244
      %v2292 = vadd.f32 %v1982, %v2247
      %v2293 = vadd.f32 %v1983, %v2250
      %v2294 = vadd.f32 %v1984, %v2253
      %v2295 = vadd.f32 %v1985, %v2256
      %v2296 = vadd.f32 %v1986, %v2259
      %v2297 = vld [vmem:[%s192 + $0x25] sm:$0xff]
      %v2298 = vld [vmem:[%s192 + $0x2d] sm:$0xff]
      %v2299 = vld [vmem:[%s192 + $0x35] sm:$0xff]
      %v2300 = vld [vmem:[%s192 + $0x3d] sm:$0xff]
      %v2301 = vld [vmem:[%s192 + $0x45] sm:$0xff]
      %v2302 = vld [vmem:[%s192 + $0x4d] sm:$0xff]
      %v2303 = vld [vmem:[%s192 + $0x55] sm:$0xff]
      %v2304 = vld [vmem:[%s192 + $0x5d] sm:$0xff]
      %v2305 = vld [vmem:[%s192 + $0x65] sm:$0xff]
      %v2306 = vld [vmem:[%s192 + $0x6d] sm:$0xff]
      %v2307 = vld [vmem:[%s192 + $0x75] sm:$0xff]
      %v2308 = vld [vmem:[%s192 + $0x7d] sm:$0xff]
      %v2309 = vld [vmem:[%s192 + $0x85] sm:$0xff]
      %v2310 = vld [vmem:[%s192 + $0x8d] sm:$0xff]
      %v2311 = vld [vmem:[%s192 + $0x95] sm:$0xff]
      %v2312 = vld [vmem:[%s192 + $0x9d] sm:$0xff]
      %v2313 = vld [vmem:[%s192 + $0xa5] sm:$0xff]
      %v2314 = vld [vmem:[%s192 + $0xad] sm:$0xff]
      %v2315 = vld [vmem:[%s192 + $0xb5] sm:$0xff]
      %v2316 = vld [vmem:[%s192 + $0xbd] sm:$0xff]
      %v2317 = vld [vmem:[%s192 + $0xc5] sm:$0xff]
      %v2318 = vld [vmem:[%s192 + $0xcd] sm:$0xff]
      %v2319 = vld [vmem:[%s192 + $0xd5] sm:$0xff]
      %v2320 = vld [vmem:[%s192 + $0xdd] sm:$0xff]
      %v2321 = vld [vmem:[%s192 + $0xe5] sm:$0xff]
      %v2322 = vld [vmem:[%s192 + $0xed] sm:$0xff]
      %v2323 = vld [vmem:[%s192 + $0xf5] sm:$0xff]
      %v2324 = vld [vmem:[%s192 + $0xfd] sm:$0xff]
      %v2325 = vld [vmem:[%s192 + $0x105] sm:$0xff]
      %v2326 = vld [vmem:[%s192 + $0x10d] sm:$0xff]
      %v2327 = vld [vmem:[%s192 + $0x115] sm:$0xff]
      %v2328 = vld [vmem:[%s192 + $0x11d] sm:$0xff]
      %v2329 = vld [vmem:[%s192 + $0x125] sm:$0xff]
      %v2330 = vld [vmem:[%s192 + $0x12d] sm:$0xff]
      %v2331 = vld [vmem:[%s192 + $0x135] sm:$0xff]
      %v2332 = vld [vmem:[%s192 + $0x13d] sm:$0xff]
      %s2333 = scalar_lea.vmem %s1, 28
      %v2334 = vld [vmem:[%s2333] sm:$0xf]
      %v2336 = vsel %vm273, %v2297, 0
      %v2339 = vsel %vm273, %v2298, 0
      %v2342 = vsel %vm273, %v2299, 0
      %v2345 = vsel %vm273, %v2300, 0
      %v2348 = vsel %vm273, %v2301, 0
      %v2351 = vsel %vm273, %v2302, 0
      %v2354 = vsel %vm273, %v2303, 0
      %v2357 = vsel %vm273, %v2304, 0
      %v2360 = vsel %vm273, %v2305, 0
      %v2363 = vsel %vm273, %v2306, 0
      %v2366 = vsel %vm273, %v2307, 0
      %v2369 = vsel %vm273, %v2308, 0
      %v2372 = vsel %vm273, %v2309, 0
      %v2375 = vsel %vm273, %v2310, 0
      %v2378 = vsel %vm273, %v2311, 0
      %v2381 = vsel %vm273, %v2312, 0
      %v2384 = vsel %vm273, %v2313, 0
      %v2387 = vsel %vm273, %v2314, 0
      %v2390 = vsel %vm273, %v2315, 0
      %v2393 = vsel %vm273, %v2316, 0
      %v2396 = vsel %vm273, %v2317, 0
      %v2399 = vsel %vm273, %v2318, 0
      %v2402 = vsel %vm273, %v2319, 0
      %v2405 = vsel %vm273, %v2320, 0
      %v2408 = vsel %vm273, %v2321, 0
      %v2411 = vsel %vm273, %v2322, 0
      %v2414 = vsel %vm273, %v2323, 0
      %v2417 = vsel %vm273, %v2324, 0
      %v2420 = vsel %vm273, %v2325, 0
      %v2423 = vsel %vm273, %v2326, 0
      %v2426 = vsel %vm273, %v2327, 0
      %v2429 = vsel %vm273, %v2328, 0
      %v2432 = vsel %vm273, %v2329, 0
      %v2435 = vsel %vm273, %v2330, 0
      %v2438 = vsel %vm273, %v2331, 0
      %v2441 = vsel %vm273, %v2332, 0
      %v2444 = vsel %vm382, %v2334, 0
      %2446 = vmatpush.msra.mxu0 0.0
      %2447 = vmatpush.msra.mxu0 0.0
      %2448 = vmatpush.msra.mxu0 0.0
      %2449 = vmatpush.msra.mxu0 0.0
      %2450 = vmatpush.msra.mxu0 0.0
      %2451 = vmatpush.msra.mxu0 0.0
      %2452 = vmatpush.msra.mxu0 0.0
      %2453 = vmatpush.msra.mxu0 0.0
      %2454 = vmatpush.msra.mxu0 0.0
      %2455 = vmatpush.msra.mxu0 0.0
      %2456 = vmatpush.msra.mxu0 0.0
      %2457 = vmatpush.msra.mxu0 0.0
      %2458 = vmatpush.msra.mxu0 0.0
      %2459 = vmatpush.msra.mxu0 0.0
      %2460 = vmatpush.msra.mxu0 0.0
      %2461 = vmatpush.msra.mxu0 %v2444
      %2462 = vmatmul.f32.gmra.mxu0 %v2336
      %v2463 = vpop.f32.mrf.mxu0
      %v2464 = vadd.f32 0.0, %v2463
      %2465 = vmatmul.f32.gmra.mxu0 %v2339
      %v2466 = vpop.f32.mrf.mxu0
      %v2467 = vadd.f32 0.0, %v2466
      %2468 = vmatmul.f32.gmra.mxu0 %v2342
      %v2469 = vpop.f32.mrf.mxu0
      %v2470 = vadd.f32 0.0, %v2469
      %2471 = vmatmul.f32.gmra.mxu0 %v2345
      %v2472 = vpop.f32.mrf.mxu0
      %v2473 = vadd.f32 0.0, %v2472
      %2474 = vmatmul.f32.gmra.mxu0 %v2348
      %v2475 = vpop.f32.mrf.mxu0
      %v2476 = vadd.f32 0.0, %v2475
      %2477 = vmatmul.f32.gmra.mxu0 %v2351
      %v2478 = vpop.f32.mrf.mxu0
      %v2479 = vadd.f32 0.0, %v2478
      %2480 = vmatmul.f32.gmra.mxu0 %v2354
      %v2481 = vpop.f32.mrf.mxu0
      %v2482 = vadd.f32 0.0, %v2481
      %2483 = vmatmul.f32.gmra.mxu0 %v2357
      %v2484 = vpop.f32.mrf.mxu0
      %v2485 = vadd.f32 0.0, %v2484
      %2486 = vmatmul.f32.gmra.mxu0 %v2360
      %v2487 = vpop.f32.mrf.mxu0
      %v2488 = vadd.f32 0.0, %v2487
      %2489 = vmatmul.f32.gmra.mxu0 %v2363
      %v2490 = vpop.f32.mrf.mxu0
      %v2491 = vadd.f32 0.0, %v2490
      %2492 = vmatmul.f32.gmra.mxu0 %v2366
      %v2493 = vpop.f32.mrf.mxu0
      %v2494 = vadd.f32 0.0, %v2493
      %2495 = vmatmul.f32.gmra.mxu0 %v2369
      %v2496 = vpop.f32.mrf.mxu0
      %v2497 = vadd.f32 0.0, %v2496
      %2498 = vmatmul.f32.gmra.mxu0 %v2372
      %v2499 = vpop.f32.mrf.mxu0
      %v2500 = vadd.f32 0.0, %v2499
      %2501 = vmatmul.f32.gmra.mxu0 %v2375
      %v2502 = vpop.f32.mrf.mxu0
      %v2503 = vadd.f32 0.0, %v2502
      %2504 = vmatmul.f32.gmra.mxu0 %v2378
      %v2505 = vpop.f32.mrf.mxu0
      %v2506 = vadd.f32 0.0, %v2505
      %2507 = vmatmul.f32.gmra.mxu0 %v2381
      %v2508 = vpop.f32.mrf.mxu0
      %v2509 = vadd.f32 0.0, %v2508
      %2510 = vmatmul.f32.gmra.mxu0 %v2384
      %v2511 = vpop.f32.mrf.mxu0
      %v2512 = vadd.f32 0.0, %v2511
      %2513 = vmatmul.f32.gmra.mxu0 %v2387
      %v2514 = vpop.f32.mrf.mxu0
      %v2515 = vadd.f32 0.0, %v2514
      %2516 = vmatmul.f32.gmra.mxu0 %v2390
      %v2517 = vpop.f32.mrf.mxu0
      %v2518 = vadd.f32 0.0, %v2517
      %2519 = vmatmul.f32.gmra.mxu0 %v2393
      %v2520 = vpop.f32.mrf.mxu0
      %v2521 = vadd.f32 0.0, %v2520
      %2522 = vmatmul.f32.gmra.mxu0 %v2396
      %v2523 = vpop.f32.mrf.mxu0
      %v2524 = vadd.f32 0.0, %v2523
      %2525 = vmatmul.f32.gmra.mxu0 %v2399
      %v2526 = vpop.f32.mrf.mxu0
      %v2527 = vadd.f32 0.0, %v2526
      %2528 = vmatmul.f32.gmra.mxu0 %v2402
      %v2529 = vpop.f32.mrf.mxu0
      %v2530 = vadd.f32 0.0, %v2529
      %2531 = vmatmul.f32.gmra.mxu0 %v2405
      %v2532 = vpop.f32.mrf.mxu0
      %v2533 = vadd.f32 0.0, %v2532
      %2534 = vmatmul.f32.gmra.mxu0 %v2408
      %v2535 = vpop.f32.mrf.mxu0
      %v2536 = vadd.f32 0.0, %v2535
      %2537 = vmatmul.f32.gmra.mxu0 %v2411
      %v2538 = vpop.f32.mrf.mxu0
      %v2539 = vadd.f32 0.0, %v2538
      %2540 = vmatmul.f32.gmra.mxu0 %v2414
      %v2541 = vpop.f32.mrf.mxu0
      %v2542 = vadd.f32 0.0, %v2541
      %2543 = vmatmul.f32.gmra.mxu0 %v2417
      %v2544 = vpop.f32.mrf.mxu0
      %v2545 = vadd.f32 0.0, %v2544
      %2546 = vmatmul.f32.gmra.mxu0 %v2420
      %v2547 = vpop.f32.mrf.mxu0
      %v2548 = vadd.f32 0.0, %v2547
      %2549 = vmatmul.f32.gmra.mxu0 %v2423
      %v2550 = vpop.f32.mrf.mxu0
      %v2551 = vadd.f32 0.0, %v2550
      %2552 = vmatmul.f32.gmra.mxu0 %v2426
      %v2553 = vpop.f32.mrf.mxu0
      %v2554 = vadd.f32 0.0, %v2553
      %2555 = vmatmul.f32.gmra.mxu0 %v2429
      %v2556 = vpop.f32.mrf.mxu0
      %v2557 = vadd.f32 0.0, %v2556
      %2558 = vmatmul.f32.gmra.mxu0 %v2432
      %v2559 = vpop.f32.mrf.mxu0
      %v2560 = vadd.f32 0.0, %v2559
      %2561 = vmatmul.f32.gmra.mxu0 %v2435
      %v2562 = vpop.f32.mrf.mxu0
      %v2563 = vadd.f32 0.0, %v2562
      %2564 = vmatmul.f32.gmra.mxu0 %v2438
      %v2565 = vpop.f32.mrf.mxu0
      %v2566 = vadd.f32 0.0, %v2565
      %2567 = vmatmul.f32.gmra.mxu0 %v2441
      %v2568 = vpop.f32.mrf.mxu0
      %v2569 = vadd.f32 0.0, %v2568
      %2570 = vdwg.mxu0
      %v2571 = vadd.f32 %v2261, %v2464
      %v2572 = vadd.f32 %v2262, %v2467
      %v2573 = vadd.f32 %v2263, %v2470
      %v2574 = vadd.f32 %v2264, %v2473
      %v2575 = vadd.f32 %v2265, %v2476
      %v2576 = vadd.f32 %v2266, %v2479
      %v2577 = vadd.f32 %v2267, %v2482
      %v2578 = vadd.f32 %v2268, %v2485
      %v2579 = vadd.f32 %v2269, %v2488
      %v2580 = vadd.f32 %v2270, %v2491
      %v2581 = vadd.f32 %v2271, %v2494
      %v2582 = vadd.f32 %v2272, %v2497
      %v2583 = vadd.f32 %v2273, %v2500
      %v2584 = vadd.f32 %v2274, %v2503
      %v2585 = vadd.f32 %v2275, %v2506
      %v2586 = vadd.f32 %v2276, %v2509
      %v2587 = vadd.f32 %v2277, %v2512
      %v2588 = vadd.f32 %v2278, %v2515
      %v2589 = vadd.f32 %v2279, %v2518
      %v2590 = vadd.f32 %v2280, %v2521
      %v2591 = vadd.f32 %v2281, %v2524
      %v2592 = vadd.f32 %v2282, %v2527
      %v2593 = vadd.f32 %v2283, %v2530
      %v2594 = vadd.f32 %v2284, %v2533
      %v2595 = vadd.f32 %v2285, %v2536
      %v2596 = vadd.f32 %v2286, %v2539
      %v2597 = vadd.f32 %v2287, %v2542
      %v2598 = vadd.f32 %v2288, %v2545
      %v2599 = vadd.f32 %v2289, %v2548
      %v2600 = vadd.f32 %v2290, %v2551
      %v2601 = vadd.f32 %v2291, %v2554
      %v2602 = vadd.f32 %v2292, %v2557
      %v2603 = vadd.f32 %v2293, %v2560
      %v2604 = vadd.f32 %v2294, %v2563
      %v2605 = vadd.f32 %v2295, %v2566
      %v2606 = vadd.f32 %v2296, %v2569
      %v2607 = vld [vmem:[%s192 + $0x26] sm:$0xff]
      %v2608 = vld [vmem:[%s192 + $0x2e] sm:$0xff]
      %v2609 = vld [vmem:[%s192 + $0x36] sm:$0xff]
      %v2610 = vld [vmem:[%s192 + $0x3e] sm:$0xff]
      %v2611 = vld [vmem:[%s192 + $0x46] sm:$0xff]
      %v2612 = vld [vmem:[%s192 + $0x4e] sm:$0xff]
      %v2613 = vld [vmem:[%s192 + $0x56] sm:$0xff]
      %v2614 = vld [vmem:[%s192 + $0x5e] sm:$0xff]
      %v2615 = vld [vmem:[%s192 + $0x66] sm:$0xff]
      %v2616 = vld [vmem:[%s192 + $0x6e] sm:$0xff]
      %v2617 = vld [vmem:[%s192 + $0x76] sm:$0xff]
      %v2618 = vld [vmem:[%s192 + $0x7e] sm:$0xff]
      %v2619 = vld [vmem:[%s192 + $0x86] sm:$0xff]
      %v2620 = vld [vmem:[%s192 + $0x8e] sm:$0xff]
      %v2621 = vld [vmem:[%s192 + $0x96] sm:$0xff]
      %v2622 = vld [vmem:[%s192 + $0x9e] sm:$0xff]
      %v2623 = vld [vmem:[%s192 + $0xa6] sm:$0xff]
      %v2624 = vld [vmem:[%s192 + $0xae] sm:$0xff]
      %v2625 = vld [vmem:[%s192 + $0xb6] sm:$0xff]
      %v2626 = vld [vmem:[%s192 + $0xbe] sm:$0xff]
      %v2627 = vld [vmem:[%s192 + $0xc6] sm:$0xff]
      %v2628 = vld [vmem:[%s192 + $0xce] sm:$0xff]
      %v2629 = vld [vmem:[%s192 + $0xd6] sm:$0xff]
      %v2630 = vld [vmem:[%s192 + $0xde] sm:$0xff]
      %v2631 = vld [vmem:[%s192 + $0xe6] sm:$0xff]
      %v2632 = vld [vmem:[%s192 + $0xee] sm:$0xff]
      %v2633 = vld [vmem:[%s192 + $0xf6] sm:$0xff]
      %v2634 = vld [vmem:[%s192 + $0xfe] sm:$0xff]
      %v2635 = vld [vmem:[%s192 + $0x106] sm:$0xff]
      %v2636 = vld [vmem:[%s192 + $0x10e] sm:$0xff]
      %v2637 = vld [vmem:[%s192 + $0x116] sm:$0xff]
      %v2638 = vld [vmem:[%s192 + $0x11e] sm:$0xff]
      %v2639 = vld [vmem:[%s192 + $0x126] sm:$0xff]
      %v2640 = vld [vmem:[%s192 + $0x12e] sm:$0xff]
      %v2641 = vld [vmem:[%s192 + $0x136] sm:$0xff]
      %v2642 = vld [vmem:[%s192 + $0x13e] sm:$0xff]
      %s2643 = scalar_lea.vmem %s1, 32
      %v2644 = vld [vmem:[%s2643] sm:$0xf]
      %v2646 = vsel %vm273, %v2607, 0
      %v2649 = vsel %vm273, %v2608, 0
      %v2652 = vsel %vm273, %v2609, 0
      %v2655 = vsel %vm273, %v2610, 0
      %v2658 = vsel %vm273, %v2611, 0
      %v2661 = vsel %vm273, %v2612, 0
      %v2664 = vsel %vm273, %v2613, 0
      %v2667 = vsel %vm273, %v2614, 0
      %v2670 = vsel %vm273, %v2615, 0
      %v2673 = vsel %vm273, %v2616, 0
      %v2676 = vsel %vm273, %v2617, 0
      %v2679 = vsel %vm273, %v2618, 0
      %v2682 = vsel %vm273, %v2619, 0
      %v2685 = vsel %vm273, %v2620, 0
      %v2688 = vsel %vm273, %v2621, 0
      %v2691 = vsel %vm273, %v2622, 0
      %v2694 = vsel %vm273, %v2623, 0
      %v2697 = vsel %vm273, %v2624, 0
      %v2700 = vsel %vm273, %v2625, 0
      %v2703 = vsel %vm273, %v2626, 0
      %v2706 = vsel %vm273, %v2627, 0
      %v2709 = vsel %vm273, %v2628, 0
      %v2712 = vsel %vm273, %v2629, 0
      %v2715 = vsel %vm273, %v2630, 0
      %v2718 = vsel %vm273, %v2631, 0
      %v2721 = vsel %vm273, %v2632, 0
      %v2724 = vsel %vm273, %v2633, 0
      %v2727 = vsel %vm273, %v2634, 0
      %v2730 = vsel %vm273, %v2635, 0
      %v2733 = vsel %vm273, %v2636, 0
      %v2736 = vsel %vm273, %v2637, 0
      %v2739 = vsel %vm273, %v2638, 0
      %v2742 = vsel %vm273, %v2639, 0
      %v2745 = vsel %vm273, %v2640, 0
      %v2748 = vsel %vm273, %v2641, 0
      %v2751 = vsel %vm273, %v2642, 0
      %v2754 = vsel %vm382, %v2644, 0
      %2756 = vmatpush.msra.mxu0 0.0
      %2757 = vmatpush.msra.mxu0 0.0
      %2758 = vmatpush.msra.mxu0 0.0
      %2759 = vmatpush.msra.mxu0 0.0
      %2760 = vmatpush.msra.mxu0 0.0
      %2761 = vmatpush.msra.mxu0 0.0
      %2762 = vmatpush.msra.mxu0 0.0
      %2763 = vmatpush.msra.mxu0 0.0
      %2764 = vmatpush.msra.mxu0 0.0
      %2765 = vmatpush.msra.mxu0 0.0
      %2766 = vmatpush.msra.mxu0 0.0
      %2767 = vmatpush.msra.mxu0 0.0
      %2768 = vmatpush.msra.mxu0 0.0
      %2769 = vmatpush.msra.mxu0 0.0
      %2770 = vmatpush.msra.mxu0 0.0
      %2771 = vmatpush.msra.mxu0 %v2754
      %2772 = vmatmul.f32.gmra.mxu0 %v2646
      %v2773 = vpop.f32.mrf.mxu0
      %v2774 = vadd.f32 0.0, %v2773
      %2775 = vmatmul.f32.gmra.mxu0 %v2649
      %v2776 = vpop.f32.mrf.mxu0
      %v2777 = vadd.f32 0.0, %v2776
      %2778 = vmatmul.f32.gmra.mxu0 %v2652
      %v2779 = vpop.f32.mrf.mxu0
      %v2780 = vadd.f32 0.0, %v2779
      %2781 = vmatmul.f32.gmra.mxu0 %v2655
      %v2782 = vpop.f32.mrf.mxu0
      %v2783 = vadd.f32 0.0, %v2782
      %2784 = vmatmul.f32.gmra.mxu0 %v2658
      %v2785 = vpop.f32.mrf.mxu0
      %v2786 = vadd.f32 0.0, %v2785
      %2787 = vmatmul.f32.gmra.mxu0 %v2661
      %v2788 = vpop.f32.mrf.mxu0
      %v2789 = vadd.f32 0.0, %v2788
      %2790 = vmatmul.f32.gmra.mxu0 %v2664
      %v2791 = vpop.f32.mrf.mxu0
      %v2792 = vadd.f32 0.0, %v2791
      %2793 = vmatmul.f32.gmra.mxu0 %v2667
      %v2794 = vpop.f32.mrf.mxu0
      %v2795 = vadd.f32 0.0, %v2794
      %2796 = vmatmul.f32.gmra.mxu0 %v2670
      %v2797 = vpop.f32.mrf.mxu0
      %v2798 = vadd.f32 0.0, %v2797
      %2799 = vmatmul.f32.gmra.mxu0 %v2673
      %v2800 = vpop.f32.mrf.mxu0
      %v2801 = vadd.f32 0.0, %v2800
      %2802 = vmatmul.f32.gmra.mxu0 %v2676
      %v2803 = vpop.f32.mrf.mxu0
      %v2804 = vadd.f32 0.0, %v2803
      %2805 = vmatmul.f32.gmra.mxu0 %v2679
      %v2806 = vpop.f32.mrf.mxu0
      %v2807 = vadd.f32 0.0, %v2806
      %2808 = vmatmul.f32.gmra.mxu0 %v2682
      %v2809 = vpop.f32.mrf.mxu0
      %v2810 = vadd.f32 0.0, %v2809
      %2811 = vmatmul.f32.gmra.mxu0 %v2685
      %v2812 = vpop.f32.mrf.mxu0
      %v2813 = vadd.f32 0.0, %v2812
      %2814 = vmatmul.f32.gmra.mxu0 %v2688
      %v2815 = vpop.f32.mrf.mxu0
      %v2816 = vadd.f32 0.0, %v2815
      %2817 = vmatmul.f32.gmra.mxu0 %v2691
      %v2818 = vpop.f32.mrf.mxu0
      %v2819 = vadd.f32 0.0, %v2818
      %2820 = vmatmul.f32.gmra.mxu0 %v2694
      %v2821 = vpop.f32.mrf.mxu0
      %v2822 = vadd.f32 0.0, %v2821
      %2823 = vmatmul.f32.gmra.mxu0 %v2697
      %v2824 = vpop.f32.mrf.mxu0
      %v2825 = vadd.f32 0.0, %v2824
      %2826 = vmatmul.f32.gmra.mxu0 %v2700
      %v2827 = vpop.f32.mrf.mxu0
      %v2828 = vadd.f32 0.0, %v2827
      %2829 = vmatmul.f32.gmra.mxu0 %v2703
      %v2830 = vpop.f32.mrf.mxu0
      %v2831 = vadd.f32 0.0, %v2830
      %2832 = vmatmul.f32.gmra.mxu0 %v2706
      %v2833 = vpop.f32.mrf.mxu0
      %v2834 = vadd.f32 0.0, %v2833
      %2835 = vmatmul.f32.gmra.mxu0 %v2709
      %v2836 = vpop.f32.mrf.mxu0
      %v2837 = vadd.f32 0.0, %v2836
      %2838 = vmatmul.f32.gmra.mxu0 %v2712
      %v2839 = vpop.f32.mrf.mxu0
      %v2840 = vadd.f32 0.0, %v2839
      %2841 = vmatmul.f32.gmra.mxu0 %v2715
      %v2842 = vpop.f32.mrf.mxu0
      %v2843 = vadd.f32 0.0, %v2842
      %2844 = vmatmul.f32.gmra.mxu0 %v2718
      %v2845 = vpop.f32.mrf.mxu0
      %v2846 = vadd.f32 0.0, %v2845
      %2847 = vmatmul.f32.gmra.mxu0 %v2721
      %v2848 = vpop.f32.mrf.mxu0
      %v2849 = vadd.f32 0.0, %v2848
      %2850 = vmatmul.f32.gmra.mxu0 %v2724
      %v2851 = vpop.f32.mrf.mxu0
      %v2852 = vadd.f32 0.0, %v2851
      %2853 = vmatmul.f32.gmra.mxu0 %v2727
      %v2854 = vpop.f32.mrf.mxu0
      %v2855 = vadd.f32 0.0, %v2854
      %2856 = vmatmul.f32.gmra.mxu0 %v2730
      %v2857 = vpop.f32.mrf.mxu0
      %v2858 = vadd.f32 0.0, %v2857
      %2859 = vmatmul.f32.gmra.mxu0 %v2733
      %v2860 = vpop.f32.mrf.mxu0
      %v2861 = vadd.f32 0.0, %v2860
      %2862 = vmatmul.f32.gmra.mxu0 %v2736
      %v2863 = vpop.f32.mrf.mxu0
      %v2864 = vadd.f32 0.0, %v2863
      %2865 = vmatmul.f32.gmra.mxu0 %v2739
      %v2866 = vpop.f32.mrf.mxu0
      %v2867 = vadd.f32 0.0, %v2866
      %2868 = vmatmul.f32.gmra.mxu0 %v2742
      %v2869 = vpop.f32.mrf.mxu0
      %v2870 = vadd.f32 0.0, %v2869
      %2871 = vmatmul.f32.gmra.mxu0 %v2745
      %v2872 = vpop.f32.mrf.mxu0
      %v2873 = vadd.f32 0.0, %v2872
      %2874 = vmatmul.f32.gmra.mxu0 %v2748
      %v2875 = vpop.f32.mrf.mxu0
      %v2876 = vadd.f32 0.0, %v2875
      %2877 = vmatmul.f32.gmra.mxu0 %v2751
      %v2878 = vpop.f32.mrf.mxu0
      %v2879 = vadd.f32 0.0, %v2878
      %2880 = vdwg.mxu0
      %v2881 = vadd.f32 %v2571, %v2774
      %v2882 = vadd.f32 %v2572, %v2777
      %v2883 = vadd.f32 %v2573, %v2780
      %v2884 = vadd.f32 %v2574, %v2783
      %v2885 = vadd.f32 %v2575, %v2786
      %v2886 = vadd.f32 %v2576, %v2789
      %v2887 = vadd.f32 %v2577, %v2792
      %v2888 = vadd.f32 %v2578, %v2795
      %v2889 = vadd.f32 %v2579, %v2798
      %v2890 = vadd.f32 %v2580, %v2801
      %v2891 = vadd.f32 %v2581, %v2804
      %v2892 = vadd.f32 %v2582, %v2807
      %v2893 = vadd.f32 %v2583, %v2810
      %v2894 = vadd.f32 %v2584, %v2813
      %v2895 = vadd.f32 %v2585, %v2816
      %v2896 = vadd.f32 %v2586, %v2819
      %v2897 = vadd.f32 %v2587, %v2822
      %v2898 = vadd.f32 %v2588, %v2825
      %v2899 = vadd.f32 %v2589, %v2828
      %v2900 = vadd.f32 %v2590, %v2831
      %v2901 = vadd.f32 %v2591, %v2834
      %v2902 = vadd.f32 %v2592, %v2837
      %v2903 = vadd.f32 %v2593, %v2840
      %v2904 = vadd.f32 %v2594, %v2843
      %v2905 = vadd.f32 %v2595, %v2846
      %v2906 = vadd.f32 %v2596, %v2849
      %v2907 = vadd.f32 %v2597, %v2852
      %v2908 = vadd.f32 %v2598, %v2855
      %v2909 = vadd.f32 %v2599, %v2858
      %v2910 = vadd.f32 %v2600, %v2861
      %v2911 = vadd.f32 %v2601, %v2864
      %v2912 = vadd.f32 %v2602, %v2867
      %v2913 = vadd.f32 %v2603, %v2870
      %v2914 = vadd.f32 %v2604, %v2873
      %v2915 = vadd.f32 %v2605, %v2876
      %v2916 = vadd.f32 %v2606, %v2879
      %v2917 = vld [vmem:[%s2] sm:$0x1]
      %v2919 = vperm.slane %v2917, 0
      %v2921 = vmul.f32 %v2881, %v2919
      %v2922 = vmul.f32 %v2882, %v2919
      %v2923 = vmul.f32 %v2883, %v2919
      %v2924 = vmul.f32 %v2884, %v2919
      %v2925 = vmul.f32 %v2885, %v2919
      %v2926 = vmul.f32 %v2886, %v2919
      %v2927 = vmul.f32 %v2887, %v2919
      %v2928 = vmul.f32 %v2888, %v2919
      %v2929 = vmul.f32 %v2889, %v2919
      %v2930 = vmul.f32 %v2890, %v2919
      %v2931 = vmul.f32 %v2891, %v2919
      %v2932 = vmul.f32 %v2892, %v2919
      %v2933 = vmul.f32 %v2893, %v2919
      %v2934 = vmul.f32 %v2894, %v2919
      %v2935 = vmul.f32 %v2895, %v2919
      %v2936 = vmul.f32 %v2896, %v2919
      %v2937 = vmul.f32 %v2897, %v2919
      %v2938 = vmul.f32 %v2898, %v2919
      %v2939 = vmul.f32 %v2899, %v2919
      %v2940 = vmul.f32 %v2900, %v2919
      %v2941 = vmul.f32 %v2901, %v2919
      %v2942 = vmul.f32 %v2902, %v2919
      %v2943 = vmul.f32 %v2903, %v2919
      %v2944 = vmul.f32 %v2904, %v2919
      %v2945 = vmul.f32 %v2905, %v2919
      %v2946 = vmul.f32 %v2906, %v2919
      %v2947 = vmul.f32 %v2907, %v2919
      %v2948 = vmul.f32 %v2908, %v2919
      %v2949 = vmul.f32 %v2909, %v2919
      %v2950 = vmul.f32 %v2910, %v2919
      %v2951 = vmul.f32 %v2911, %v2919
      %v2952 = vmul.f32 %v2912, %v2919
      %v2953 = vmul.f32 %v2913, %v2919
      %v2954 = vmul.f32 %v2914, %v2919
      %v2955 = vmul.f32 %v2915, %v2919
      %v2956 = vmul.f32 %v2916, %v2919
      %v2957 = vld [vmem:[%s3] sm:$0x1]
      %v2959 = vperm.slane %v2957, 0
      %v2961 = vadd.f32 %v2921, %v2959
      %v2962 = vadd.f32 %v2922, %v2959
      %v2963 = vadd.f32 %v2923, %v2959
      %v2964 = vadd.f32 %v2924, %v2959
      %v2965 = vadd.f32 %v2925, %v2959
      %v2966 = vadd.f32 %v2926, %v2959
      %v2967 = vadd.f32 %v2927, %v2959
      %v2968 = vadd.f32 %v2928, %v2959
      %v2969 = vadd.f32 %v2929, %v2959
      %v2970 = vadd.f32 %v2930, %v2959
      %v2971 = vadd.f32 %v2931, %v2959
      %v2972 = vadd.f32 %v2932, %v2959
      %v2973 = vadd.f32 %v2933, %v2959
      %v2974 = vadd.f32 %v2934, %v2959
      %v2975 = vadd.f32 %v2935, %v2959
      %v2976 = vadd.f32 %v2936, %v2959
      %v2977 = vadd.f32 %v2937, %v2959
      %v2978 = vadd.f32 %v2938, %v2959
      %v2979 = vadd.f32 %v2939, %v2959
      %v2980 = vadd.f32 %v2940, %v2959
      %v2981 = vadd.f32 %v2941, %v2959
      %v2982 = vadd.f32 %v2942, %v2959
      %v2983 = vadd.f32 %v2943, %v2959
      %v2984 = vadd.f32 %v2944, %v2959
      %v2985 = vadd.f32 %v2945, %v2959
      %v2986 = vadd.f32 %v2946, %v2959
      %v2987 = vadd.f32 %v2947, %v2959
      %v2988 = vadd.f32 %v2948, %v2959
      %v2989 = vadd.f32 %v2949, %v2959
      %v2990 = vadd.f32 %v2950, %v2959
      %v2991 = vadd.f32 %v2951, %v2959
      %v2992 = vadd.f32 %v2952, %v2959
      %v2993 = vadd.f32 %v2953, %v2959
      %v2994 = vadd.f32 %v2954, %v2959
      %v2995 = vadd.f32 %v2955, %v2959
      %v2996 = vadd.f32 %v2956, %v2959
      %v2997 = vmax.f32 %v2961, 0.0
      %v2998 = vmax.f32 %v2962, 0.0
      %v2999 = vmax.f32 %v2963, 0.0
      %v3000 = vmax.f32 %v2964, 0.0
      %v3001 = vmax.f32 %v2965, 0.0
      %v3002 = vmax.f32 %v2966, 0.0
      %v3003 = vmax.f32 %v2967, 0.0
      %v3004 = vmax.f32 %v2968, 0.0
      %v3005 = vmax.f32 %v2969, 0.0
      %v3006 = vmax.f32 %v2970, 0.0
      %v3007 = vmax.f32 %v2971, 0.0
      %v3008 = vmax.f32 %v2972, 0.0
      %v3009 = vmax.f32 %v2973, 0.0
      %v3010 = vmax.f32 %v2974, 0.0
      %v3011 = vmax.f32 %v2975, 0.0
      %v3012 = vmax.f32 %v2976, 0.0
      %v3013 = vmax.f32 %v2977, 0.0
      %v3014 = vmax.f32 %v2978, 0.0
      %v3015 = vmax.f32 %v2979, 0.0
      %v3016 = vmax.f32 %v2980, 0.0
      %v3017 = vmax.f32 %v2981, 0.0
      %v3018 = vmax.f32 %v2982, 0.0
      %v3019 = vmax.f32 %v2983, 0.0
      %v3020 = vmax.f32 %v2984, 0.0
      %v3021 = vmax.f32 %v2985, 0.0
      %v3022 = vmax.f32 %v2986, 0.0
      %v3023 = vmax.f32 %v2987, 0.0
      %v3024 = vmax.f32 %v2988, 0.0
      %v3025 = vmax.f32 %v2989, 0.0
      %v3026 = vmax.f32 %v2990, 0.0
      %v3027 = vmax.f32 %v2991, 0.0
      %v3028 = vmax.f32 %v2992, 0.0
      %v3029 = vmax.f32 %v2993, 0.0
      %v3030 = vmax.f32 %v2994, 0.0
      %v3031 = vmax.f32 %v2995, 0.0
      %v3032 = vmax.f32 %v2996, 0.0
      %3033 = vst.msk [vmem:[%s197] sm:$0xff] %vm273, %v2997
      %3034 = vst.msk [vmem:[%s197 + $0x8] sm:$0xff] %vm273, %v2998
      %3035 = vst.msk [vmem:[%s197 + $0x10] sm:$0xff] %vm273, %v2999
      %3036 = vst.msk [vmem:[%s197 + $0x18] sm:$0xff] %vm273, %v3000
      %3037 = vst.msk [vmem:[%s197 + $0x20] sm:$0xff] %vm273, %v3001
      %3038 = vst.msk [vmem:[%s197 + $0x28] sm:$0xff] %vm273, %v3002
      %3039 = vst.msk [vmem:[%s197 + $0x30] sm:$0xff] %vm273, %v3003
      %3040 = vst.msk [vmem:[%s197 + $0x38] sm:$0xff] %vm273, %v3004
      %3041 = vst.msk [vmem:[%s197 + $0x40] sm:$0xff] %vm273, %v3005
      %3042 = vst.msk [vmem:[%s197 + $0x48] sm:$0xff] %vm273, %v3006
      %3043 = vst.msk [vmem:[%s197 + $0x50] sm:$0xff] %vm273, %v3007
      %3044 = vst.msk [vmem:[%s197 + $0x58] sm:$0xff] %vm273, %v3008
      %3045 = vst.msk [vmem:[%s197 + $0x60] sm:$0xff] %vm273, %v3009
      %3046 = vst.msk [vmem:[%s197 + $0x68] sm:$0xff] %vm273, %v3010
      %3047 = vst.msk [vmem:[%s197 + $0x70] sm:$0xff] %vm273, %v3011
      %3048 = vst.msk [vmem:[%s197 + $0x78] sm:$0xff] %vm273, %v3012
      %3049 = vst.msk [vmem:[%s197 + $0x80] sm:$0xff] %vm273, %v3013
      %3050 = vst.msk [vmem:[%s197 + $0x88] sm:$0xff] %vm273, %v3014
      %3051 = vst.msk [vmem:[%s197 + $0x90] sm:$0xff] %vm273, %v3015
      %3052 = vst.msk [vmem:[%s197 + $0x98] sm:$0xff] %vm273, %v3016
      %3053 = vst.msk [vmem:[%s197 + $0xa0] sm:$0xff] %vm273, %v3017
      %3054 = vst.msk [vmem:[%s197 + $0xa8] sm:$0xff] %vm273, %v3018
      %3055 = vst.msk [vmem:[%s197 + $0xb0] sm:$0xff] %vm273, %v3019
      %3056 = vst.msk [vmem:[%s197 + $0xb8] sm:$0xff] %vm273, %v3020
      %3057 = vst.msk [vmem:[%s197 + $0xc0] sm:$0xff] %vm273, %v3021
      %3058 = vst.msk [vmem:[%s197 + $0xc8] sm:$0xff] %vm273, %v3022
      %3059 = vst.msk [vmem:[%s197 + $0xd0] sm:$0xff] %vm273, %v3023
      %3060 = vst.msk [vmem:[%s197 + $0xd8] sm:$0xff] %vm273, %v3024
      %3061 = vst.msk [vmem:[%s197 + $0xe0] sm:$0xff] %vm273, %v3025
      %3062 = vst.msk [vmem:[%s197 + $0xe8] sm:$0xff] %vm273, %v3026
      %3063 = vst.msk [vmem:[%s197 + $0xf0] sm:$0xff] %vm273, %v3027
      %3064 = vst.msk [vmem:[%s197 + $0xf8] sm:$0xff] %vm273, %v3028
      %3065 = vst.msk [vmem:[%s197 + $0x100] sm:$0xff] %vm273, %v3029
      %3066 = vst.msk [vmem:[%s197 + $0x108] sm:$0xff] %vm273, %v3030
      %3067 = vst.msk [vmem:[%s197 + $0x110] sm:$0xff] %vm273, %v3031
      %3068 = vst.msk [vmem:[%s197 + $0x118] sm:$0xff] %vm273, %v3032
      %p3069 = scmp.lt.s32.totalorder %s15, 1
      %s3070 = scalar_select %p3069, %s15, 1
      %s3071 = smul.addr %s3070, 36
      %s3072 = smul.addr %s3071, 8
      %s3073 = scalar_lea.vmem %s4, %s3072
      // Predicated region
      $region37: #{residual_forward.2} parent=35 // pred_check
        %p3074 = pneg %p122
      $region38: #{residual_forward.2} parent=35 // pred_check_branch
        %3076 = sbr.rel (%p3074) target = $region40
      $region39: #{residual_forward.2} parent=35 // pred_region
        _
      $region40: #{residual_forward.2} parent=35 // pred_fallthru
        _
    $region36: #{residual_forward.2} parent=5 // pred_fallthru
      _
    %p3077 = scmp.le.s32.totalorder 2, %s10
    // Predicated region
    $region41: #{residual_forward.2} parent=5 // pred_check
      %p3078 = pneg %p3077
    $region42: #{residual_forward.2} parent=5 // pred_check_branch
      %3080 = sbr.rel (%p3078) target = $region44
    $region43: #{residual_forward.2} parent=5 // pred_region
      %s3081 = ssub.s32 %s10, 2
      // Predicated region
      $region45: #{residual_forward.2} parent=43 // pred_check
        %p3082 = pneg %p128
      $region46: #{residual_forward.2} parent=43 // pred_check_branch
        %3084 = sbr.rel (%p3082) target = $region48
      $region47: #{residual_forward.2} parent=43 // pred_region
        %p3085 = scmp.lt.s32.totalorder %s16, 1
        %s3086 = scalar_select %p3085, %s16, 1
        %s3087 = smul.addr %s3086, 36
        %s3088 = smul.addr %s3087, 8
        %s3089 = scalar_lea.vmem %s4, %s3088
      $region48: #{residual_forward.2} parent=43 // pred_fallthru
        _
    $region44: #{residual_forward.2} parent=5 // pred_fallthru
      _
  $region6: #{residual_forward.2} parent=0 // loop_footer
    %s14 = sadd.s32 1, %s10
  $region7: #{residual_forward.2} parent=0 // loop_footer_branch
    %9 = sbr.rel target = $region3
  $region8: #{residual_forward.2} parent=0 // loop_exit
    _

// kernel: residual_forward.3
$region0: #{residual_forward.3}
  #allocation0 [shape = 'u32[]', space=smem, size = 0x4, offset = 0x4, fixed_abs, tag = 'smem constant byte address 0x4 - core index']
  #allocation1 [shape = 'u32[72,128]{1,0:T(1,128)}', space=vmem, size = 0x9000, scoped, tag = 'internal scratch']
  %s0 = inlined_call_operand.vmem [shape: f32[2,342,4], index: 0, kind: input, shape index: {}]
  %s1 = inlined_call_operand.vmem [shape: f32[9,4,4], index: 1, kind: input, shape index: {}]
  %s2 = inlined_call_operand.vmem [shape: f32[1,4], index: 2, kind: input, shape index: {}]
  %s3 = inlined_call_operand.vmem [shape: f32[1,4], index: 3, kind: input, shape index: {}]
  %s4 = inlined_call_operand.vmem [shape: f32[2,288,4], index: 4, kind: input, shape index: {}]
  %s5 = inlined_call_operand.vmem [shape: f32[2,288,4], index: 5, kind: output, shape index: {}]
  %s6 = sld [smem:[#allocation0]]
  $region53: #{residual_forward.3} parent=0
    _
  %s8 = ssub.s32 1, %s6
  %s9 = scalar_select 0, %s8, %s6
  loop: start=0, step=1, limit=4
  $region2: #{residual_forward.3} parent=0 // loop_pre_header
    _
  $region3: #{residual_forward.3} parent=0 // loop_header
    %s11 = sphi 0, %s15
    %p12 = scmp.ge.s32.totalorder %s11, 4
    %s21 = sphi 0, %s23
    %s24 = sphi 0, %s21
    %s25 = sphi 0, %s24
    %s41 = sphi 0, %s25
    %s45 = sphi 0, %s45
    %s47 = sphi 0, %s45
    %s48 = sphi 0, %s47
    %s62 = sphi 0, %s48
    %s66 = sphi 0, %s66
    %s68 = sphi 0, %s66
    %s69 = sphi 0, %s68
    %s83 = sphi 0, %s69
    %s87 = sphi 0, %s87
    %s89 = sphi 0, %s87
    %s90 = sphi 0, %s89
    %s104 = sphi 0, %s90
    %s110 = sphi 0, %s112
    %s113 = sphi 0, %s110
    %s114 = sphi 0, %s113
    %s130 = sphi 0, %s114
    %s136 = sphi 0, %s138
    %s139 = sphi 0, %s136
    %s140 = sphi 0, %s139
    %s156 = sphi 0, %s140
  $region4: #{residual_forward.3} parent=0 // loop_header_branch
    %14 = sbr.rel (%p12) target = $region8
  $region5: #{residual_forward.3} parent=0 // loop_body
    %s16 = ssub.s32 %s11, 1
    %s17 = ssub.s32 %s11, 2
    %s18 = sadd.s32 %s11, 1
    %s19 = ssub.s32 %s11, %s18
    %p20 = scmp.eq.s32.totalorder %s19, 0
    %s22 = sadd.s32 %s21, 1
    %s23 = scalar_select %p20, %s21, %s22
    %p26 = pneg %p20
    %p27 = scmp.eq.s32.totalorder %s11, 1
    %p28 = por %p26, %p27
    %p29 = scmp.ne.s32.totalorder %s21, %s24
    %p30 = scmp.eq.s32.totalorder %s11, 0
    %p31 = por %p29, %p30
    %p32 = scmp.ne.s32.totalorder %s21, %s24
    %p33 = scmp.eq.s32.totalorder %s16, 1
    %p34 = por %p32, %p33
    %p35 = scmp.ne.s32.totalorder %s24, %s25
    %p36 = scmp.eq.s32.totalorder %s16, 0
    %p37 = por %p35, %p36
    %p38 = scmp.ne.s32.totalorder %s24, %s25
    %p39 = scmp.eq.s32.totalorder %s17, 1
    %p40 = por %p38, %p39
    %p42 = scmp.ne.s32.totalorder %s25, %s41
    %p43 = scmp.eq.s32.totalorder %s17, 0
    %p44 = por %p42, %p43
    %s46 = sadd.s32 %s45, 1
    %p49 = scmp.eq.s32.totalorder %s11, 1
    %p50 = scmp.ne.s32.totalorder %s45, %s47
    %p51 = scmp.eq.s32.totalorder %s11, 0
    %p52 = por %p50, %p51
    %p53 = scmp.ne.s32.totalorder %s45, %s47
    %p54 = scmp.eq.s32.totalorder %s16, 1
    %p55 = por %p53, %p54
    %p56 = scmp.ne.s32.totalorder %s47, %s48
    %p57 = scmp.eq.s32.totalorder %s16, 0
    %p58 = por %p56, %p57
    %p59 = scmp.ne.s32.totalorder %s47, %s48
    %p60 = scmp.eq.s32.totalorder %s17, 1
    %p61 = por %p59, %p60
    %p63 = scmp.ne.s32.totalorder %s48, %s62
    %p64 = scmp.eq.s32.totalorder %s17, 0
    %p65 = por %p63, %p64
    %s67 = sadd.s32 %s66, 1
    %p70 = scmp.eq.s32.totalorder %s11, 1
    %p71 = scmp.ne.s32.totalorder %s66, %s68
    %p72 = scmp.eq.s32.totalorder %s11, 0
    %p73 = por %p71, %p72
    %p74 = scmp.ne.s32.totalorder %s66, %s68
    %p75 = scmp.eq.s32.totalorder %s16, 1
    %p76 = por %p74, %p75
    %p77 = scmp.ne.s32.totalorder %s68, %s69
    %p78 = scmp.eq.s32.totalorder %s16, 0
    %p79 = por %p77, %p78
    %p80 = scmp.ne.s32.totalorder %s68, %s69
    %p81 = scmp.eq.s32.totalorder %s17, 1
    %p82 = por %p80, %p81
    %p84 = scmp.ne.s32.totalorder %s69, %s83
    %p85 = scmp.eq.s32.totalorder %s17, 0
    %p86 = por %p84, %p85
    %s88 = sadd.s32 %s87, 1
    %p91 = scmp.eq.s32.totalorder %s11, 1
    %p92 = scmp.ne.s32.totalorder %s87, %s89
    %p93 = scmp.eq.s32.totalorder %s11, 0
    %p94 = por %p92, %p93
    %p95 = scmp.ne.s32.totalorder %s87, %s89
    %p96 = scmp.eq.s32.totalorder %s16, 1
    %p97 = por %p95, %p96
    %p98 = scmp.ne.s32.totalorder %s89, %s90
    %p99 = scmp.eq.s32.totalorder %s16, 0
    %p100 = por %p98, %p99
    %p101 = scmp.ne.s32.totalorder %s89, %s90
    %p102 = scmp.eq.s32.totalorder %s17, 1
    %p103 = por %p101, %p102
    %p105 = scmp.ne.s32.totalorder %s90, %s104
    %p106 = scmp.eq.s32.totalorder %s17, 0
    %p107 = por %p105, %p106
    %s108 = ssub.s32 %s11, %s18
    %p109 = scmp.eq.s32.totalorder %s108, 0
    %s111 = sadd.s32 %s110, 1
    %s112 = scalar_select %p109, %s110, %s111
    %p115 = pneg %p109
    %p116 = scmp.eq.s32.totalorder %s11, 1
    %p117 = por %p115, %p116
    %p118 = scmp.ne.s32.totalorder %s110, %s113
    %p119 = scmp.eq.s32.totalorder %s11, 0
    %p120 = por %p118, %p119
    %p121 = scmp.ne.s32.totalorder %s110, %s113
    %p122 = scmp.eq.s32.totalorder %s16, 1
    %p123 = por %p121, %p122
    %p124 = scmp.ne.s32.totalorder %s113, %s114
    %p125 = scmp.eq.s32.totalorder %s16, 0
    %p126 = por %p124, %p125
    %p127 = scmp.ne.s32.totalorder %s113, %s114
    %p128 = scmp.eq.s32.totalorder %s17, 1
    %p129 = por %p127, %p128
    %p131 = scmp.ne.s32.totalorder %s114, %s130
    %p132 = scmp.eq.s32.totalorder %s17, 0
    %p133 = por %p131, %p132
    %s134 = ssub.s32 %s11, %s18
    %p135 = scmp.eq.s32.totalorder %s134, 0
    %s137 = sadd.s32 %s136, 1
    %s138 = scalar_select %p135, %s136, %s137
    %p141 = pneg %p135
    %p142 = scmp.eq.s32.totalorder %s11, 1
    %p143 = por %p141, %p142
    %p144 = scmp.ne.s32.totalorder %s136, %s139
    %p145 = scmp.eq.s32.totalorder %s11, 0
    %p146 = por %p144, %p145
    %p147 = scmp.ne.s32.totalorder %s136, %s139
    %p148 = scmp.eq.s32.totalorder %s16, 1
    %p149 = por %p147, %p148
    %p150 = scmp.ne.s32.totalorder %s139, %s140
    %p151 = scmp.eq.s32.totalorder %s16, 0
    %p152 = por %p150, %p151
    %p153 = scmp.ne.s32.totalorder %s139, %s140
    %p154 = scmp.eq.s32.totalorder %s17, 1
    %p155 = por %p153, %p154
    %p157 = scmp.ne.s32.totalorder %s140, %s156
    %p158 = scmp.eq.s32.totalorder %s17, 0
    %p159 = por %p157, %p158
    %p160 = scmp.le.s32.totalorder 1, %s11
    %p161 = scmp.lt.s32.totalorder %s11, 3
    %p162 = pnand %p160, %p161
    %p163 = pneg %p162
    // Predicated region
    $region9: #{residual_forward.3} parent=5 // pred_check
      _
    $region10: #{residual_forward.3} parent=5 // pred_check_branch
      %165 = sbr.rel (%p162) target = $region12
    $region11: #{residual_forward.3} parent=5 // pred_region
      %s166 = ssub.s32 %s11, 1
      // Predicated region
      $region13: #{residual_forward.3} parent=11 // pred_check
        %p167 = pneg %p58
      $region14: #{residual_forward.3} parent=11 // pred_check_branch
        %169 = sbr.rel (%p167) target = $region16
      $region15: #{residual_forward.3} parent=11 // pred_region
        _
      $region16: #{residual_forward.3} parent=11 // pred_fallthru
        _
      // Predicated region
      $region17: #{residual_forward.3} parent=11 // pred_check
        %p170 = pneg %p79
      $region18: #{residual_forward.3} parent=11 // pred_check_branch
        %172 = sbr.rel (%p170) target = $region20
      $region19: #{residual_forward.3} parent=11 // pred_region
        _
      $region20: #{residual_forward.3} parent=11 // pred_fallthru
        _
      // Predicated region
      $region21: #{residual_forward.3} parent=11 // pred_check
        %p173 = pneg %p100
      $region22: #{residual_forward.3} parent=11 // pred_check_branch
        %175 = sbr.rel (%p173) target = $region24
      $region23: #{residual_forward.3} parent=11 // pred_region
        _
      $region24: #{residual_forward.3} parent=11 // pred_fallthru
        _
    $region12: #{residual_forward.3} parent=5 // pred_fallthru
      _
    %p176 = scmp.lt.s32.totalorder %s11, 2
    // Predicated region
    $region25: #{residual_forward.3} parent=5 // pred_check
      %p177 = pneg %p176
    $region26: #{residual_forward.3} parent=5 // pred_check_branch
      %179 = sbr.rel (%p177) target = $region28
    $region27: #{residual_forward.3} parent=5 // pred_region
      // Predicated region
      $region29: #{residual_forward.3} parent=27 // pred_check
        %p180 = pneg %p31
      $region30: #{residual_forward.3} parent=27 // pred_check_branch
        %182 = sbr.rel (%p180) target = $region32
      $region31: #{residual_forward.3} parent=27 // pred_region
        %p183 = scmp.lt.s32.totalorder %s11, 1
        %s184 = scalar_select %p183, %s11, 1
        %s185 = smul.addr %s184, 43
        %s186 = smul.addr %s185, 8
        %s187 = scalar_lea.vmem %s0, %s186
      $region32: #{residual_forward.3} parent=27 // pred_fallthru
        _
      // Predicated region
      $region33: #{residual_forward.3} parent=27 // pred_check
        %p188 = pneg %p120
      $region34: #{residual_forward.3} parent=27 // pred_check_branch
        %190 = sbr.rel (%p188) target = $region36
      $region35: #{residual_forward.3} parent=27 // pred_region
        %p191 = scmp.lt.s32.totalorder %s11, 1
        %s192 = scalar_select %p191, %s11, 1
        %s193 = smul.addr %s192, 36
        %s194 = smul.addr %s193, 8
        %s195 = scalar_lea.vmem %s4, %s194
      $region36: #{residual_forward.3} parent=27 // pred_fallthru
        _
    $region28: #{residual_forward.3} parent=5 // pred_fallthru
      _
    %p196 = scmp.le.s32.totalorder 1, %s11
    %p197 = scmp.lt.s32.totalorder %s11, 3
    %p198 = pnand %p196, %p197
    %p199 = pneg %p198
    // Predicated region
    $region37: #{residual_forward.3} parent=5 // pred_check
      _
    $region38: #{residual_forward.3} parent=5 // pred_check_branch
      %201 = sbr.rel (%p198) target = $region40
    $region39: #{residual_forward.3} parent=5 // pred_region
      %s202 = ssub.s32 %s11, 1
      %p203 = scmp.lt.s32.totalorder %s16, 1
      %s204 = scalar_select %p203, %s16, 1
      %s205 = smul.addr %s204, 43
      %s206 = smul.addr %s205, 8
      %s207 = scalar_lea.vmem %s0, %s206
      %p208 = pneg %p37
      %p209 = pneg %p34
      %p210 = pneg %p58
      %p211 = pneg %p55
      %p212 = pneg %p79
      %p213 = pneg %p76
      %p214 = pneg %p100
      %p215 = pneg %p97
      %p216 = scmp.lt.s32.totalorder %s16, 1
      %s217 = scalar_select %p216, %s16, 1
      %s218 = smul.addr %s217, 36
      %s219 = smul.addr %s218, 8
      %s220 = scalar_lea.vmem %s4, %s219
      %p221 = pneg %p126
      %p222 = pneg %p123
      %p223 = pneg %p152
      %p224 = pneg %p149
      %p225 = scmp.lt.s32.totalorder %s16, 1
      %s226 = scalar_select %p225, %s16, 1
      %s227 = smul.addr %s226, 36
      %s228 = smul.addr %s227, 8
      %s229 = scalar_lea.vmem %s5, %s228
      %p230 = scmp.lt.s32.totalorder %s16, 1
      %s231 = scalar_select %p230, %s16, 1
      %s232 = smul.addr %s231, 43
      %s233 = smul.addr %s232, 8
      %s234 = scalar_lea.vmem %s0, %s233
      %p235 = scmp.lt.s32.totalorder %s16, 1
      %s236 = scalar_select %p235, %s16, 1
      %s237 = smul.addr %s236, 36
      %s238 = smul.addr %s237, 8
      %s239 = scalar_lea.vmem %s4, %s238
      %p240 = scmp.lt.s32.totalorder %s16, 1
      %s241 = scalar_select %p240, %s16, 1
      %s242 = smul.addr %s241, 36
      %s243 = smul.addr %s242, 8
      %s244 = scalar_lea.vmem %s5, %s243
      %v245 = vld [vmem:[%s234] sm:$0xff]
      %v246 = vld [vmem:[%s234 + $0x8] sm:$0xff]
      %v247 = vld [vmem:[%s234 + $0x10] sm:$0xff]
      %v248 = vld [vmem:[%s234 + $0x18] sm:$0xff]
      %v249 = vld [vmem:[%s234 + $0x20] sm:$0xff]
      %v250 = vld [vmem:[%s234 + $0x28] sm:$0xff]
      %v251 = vld [vmem:[%s234 + $0x30] sm:$0xff]
      %v252 = vld [vmem:[%s234 + $0x38] sm:$0xff]
      %v253 = vld [vmem:[%s234 + $0x40] sm:$0xff]
      %v254 = vld [vmem:[%s234 + $0x48] sm:$0xff]
      %v255 = vld [vmem:[%s234 + $0x50] sm:$0xff]
      %v256 = vld [vmem:[%s234 + $0x58] sm:$0xff]
      %v257 = vld [vmem:[%s234 + $0x60] sm:$0xff]
      %v258 = vld [vmem:[%s234 + $0x68] sm:$0xff]
      %v259 = vld [vmem:[%s234 + $0x70] sm:$0xff]
      %v260 = vld [vmem:[%s234 + $0x78] sm:$0xff]
      %v261 = vld [vmem:[%s234 + $0x80] sm:$0xff]
      %v262 = vld [vmem:[%s234 + $0x88] sm:$0xff]
      %v263 = vld [vmem:[%s234 + $0x90] sm:$0xff]
      %v264 = vld [vmem:[%s234 + $0x98] sm:$0xff]
      %v265 = vld [vmem:[%s234 + $0xa0] sm:$0xff]
      %v266 = vld [vmem:[%s234 + $0xa8] sm:$0xff]
      %v267 = vld [vmem:[%s234 + $0xb0] sm:$0xff]
      %v268 = vld [vmem:[%s234 + $0xb8] sm:$0xff]
      %v269 = vld [vmem:[%s234 + $0xc0] sm:$0xff]
      %v270 = vld [vmem:[%s234 + $0xc8] sm:$0xff]
      %v271 = vld [vmem:[%s234 + $0xd0] sm:$0xff]
      %v272 = vld [vmem:[%s234 + $0xd8] sm:$0xff]
      %v273 = vld [vmem:[%s234 + $0xe0] sm:$0xff]
      %v274 = vld [vmem:[%s234 + $0xe8] sm:$0xff]
      %v275 = vld [vmem:[%s234 + $0xf0] sm:$0xff]
      %v276 = vld [vmem:[%s234 + $0xf8] sm:$0xff]
      %v277 = vld [vmem:[%s234 + $0x100] sm:$0xff]
      %v278 = vld [vmem:[%s234 + $0x108] sm:$0xff]
      %v279 = vld [vmem:[%s234 + $0x110] sm:$0xff]
      %v280 = vld [vmem:[%s234 + $0x118] sm:$0xff]
      %v281 = vld [vmem:[%s1] sm:$0xf]
      %v282 = vld [vmem:[%s234 + $0x1] sm:$0xff]
      %v283 = vld [vmem:[%s234 + $0x9] sm:$0xff]
      %v284 = vld [vmem:[%s234 + $0x11] sm:$0xff]
      %v285 = vld [vmem:[%s234 + $0x19] sm:$0xff]
      %v286 = vld [vmem:[%s234 + $0x21] sm:$0xff]
      %v287 = vld [vmem:[%s234 + $0x29] sm:$0xff]
      %v288 = vld [vmem:[%s234 + $0x31] sm:$0xff]
      %v289 = vld [vmem:[%s234 + $0x39] sm:$0xff]
      %v290 = vld [vmem:[%s234 + $0x41] sm:$0xff]
      %v291 = vld [vmem:[%s234 + $0x49] sm:$0xff]
      %v292 = vld [vmem:[%s234 + $0x51] sm:$0xff]
      %v293 = vld [vmem:[%s234 + $0x59] sm:$0xff]
      %v294 = vld [vmem:[%s234 + $0x61] sm:$0xff]
      %v295 = vld [vmem:[%s234 + $0x69] sm:$0xff]
      %v296 = vld [vmem:[%s234 + $0x71] sm:$0xff]
      %v297 = vld [vmem:[%s234 + $0x79] sm:$0xff]
      %v298 = vld [vmem:[%s234 + $0x81] sm:$0xff]
      %v299 = vld [vmem:[%s234 + $0x89] sm:$0xff]
      %v300 = vld [vmem:[%s234 + $0x91] sm:$0xff]
      %v301 = vld [vmem:[%s234 + $0x99] sm:$0xff]
      %v302 = vld [vmem:[%s234 + $0xa1] sm:$0xff]
      %v303 = vld [vmem:[%s234 + $0xa9] sm:$0xff]
      %v304 = vld [vmem:[%s234 + $0xb1] sm:$0xff]
      %v305 = vld [vmem:[%s234 + $0xb9] sm:$0xff]
      %v306 = vld [vmem:[%s234 + $0xc1] sm:$0xff]
      %v307 = vld [vmem:[%s234 + $0xc9] sm:$0xff]
      %v308 = vld [vmem:[%s234 + $0xd1] sm:$0xff]
      %v309 = vld [vmem:[%s234 + $0xd9] sm:$0xff]
      %v310 = vld [vmem:[%s234 + $0xe1] sm:$0xff]
      %v311 = vld [vmem:[%s234 + $0xe9] sm:$0xff]
      %v312 = vld [vmem:[%s234 + $0xf1] sm:$0xff]
      %v313 = vld [vmem:[%s234 + $0xf9] sm:$0xff]
      %v314 = vld [vmem:[%s234 + $0x101] sm:$0xff]
      %v315 = vld [vmem:[%s234 + $0x109] sm:$0xff]
      %v316 = vld [vmem:[%s234 + $0x111] sm:$0xff]
      %v317 = vld [vmem:[%s234 + $0x119] sm:$0xff]
      %s318 = scalar_lea.vmem %s1, 4
      %v319 = vld [vmem:[%s318] sm:$0xf]
      %vm320 = vcmask 31744
      %v322 = vsel %vm320, %v282, 0
      %v325 = vsel %vm320, %v283, 0
      %v328 = vsel %vm320, %v284, 0
      %v331 = vsel %vm320, %v285, 0
      %v334 = vsel %vm320, %v286, 0
      %v337 = vsel %vm320, %v287, 0
      %v340 = vsel %vm320, %v288, 0
      %v343 = vsel %vm320, %v289, 0
      %v346 = vsel %vm320, %v290, 0
      %v349 = vsel %vm320, %v291, 0
      %v352 = vsel %vm320, %v292, 0
      %v355 = vsel %vm320, %v293, 0
      %v358 = vsel %vm320, %v294, 0
      %v361 = vsel %vm320, %v295, 0
      %v364 = vsel %vm320, %v296, 0
      %v367 = vsel %vm320, %v297, 0
      %v370 = vsel %vm320, %v298, 0
      %v373 = vsel %vm320, %v299, 0
      %v376 = vsel %vm320, %v300, 0
      %v379 = vsel %vm320, %v301, 0
      %v382 = vsel %vm320, %v302, 0
      %v385 = vsel %vm320, %v303, 0
      %v388 = vsel %vm320, %v304, 0
      %v391 = vsel %vm320, %v305, 0
      %v394 = vsel %vm320, %v306, 0
      %v397 = vsel %vm320, %v307, 0
      %v400 = vsel %vm320, %v308, 0
      %v403 = vsel %vm320, %v309, 0
      %v406 = vsel %vm320, %v310, 0
      %v409 = vsel %vm320, %v311, 0
      %v412 = vsel %vm320, %v312, 0
      %v415 = vsel %vm320, %v313, 0
      %v418 = vsel %vm320, %v314, 0
      %v421 = vsel %vm320, %v315, 0
      %v424 = vsel %vm320, %v316, 0
      %v427 = vsel %vm320, %v317, 0
      %vm429 = vcmask 1043456
      %v431 = vsel %vm429, %v319, 0
      %433 = vmatpush.msra.mxu0 0.0
      %434 = vmatpush.msra.mxu0 0.0
      %435 = vmatpush.msra.mxu0 0.0
      %436 = vmatpush.msra.mxu0 0.0
      %437 = vmatpush.msra.mxu0 0.0
      %438 = vmatpush.msra.mxu0 0.0
      %439 = vmatpush.msra.mxu0 0.0
      %440 = vmatpush.msra.mxu0 0.0
      %441 = vmatpush.msra.mxu0 0.0
      %442 = vmatpush.msra.mxu0 0.0
      %443 = vmatpush.msra.mxu0 0.0
      %444 = vmatpush.msra.mxu0 0.0
      %445 = vmatpush.msra.mxu0 0.0
      %446 = vmatpush.msra.mxu0 0.0
      %447 = vmatpush.msra.mxu0 0.0
      %448 = vmatpush.msra.mxu0 %v431
      %449 = vmatmul.f32.gmra.mxu0 %v322
      %v450 = vpop.f32.mrf.mxu0
      %v451 = vadd.f32 0.0, %v450
      %452 = vmatmul.f32.gmra.mxu0 %v325
      %v453 = vpop.f32.mrf.mxu0
      %v454 = vadd.f32 0.0, %v453
      %455 = vmatmul.f32.gmra.mxu0 %v328
      %v456 = vpop.f32.mrf.mxu0
      %v457 = vadd.f32 0.0, %v456
      %458 = vmatmul.f32.gmra.mxu0 %v331
      %v459 = vpop.f32.mrf.mxu0
      %v460 = vadd.f32 0.0, %v459
      %461 = vmatmul.f32.gmra.mxu0 %v334
      %v462 = vpop.f32.mrf.mxu0
      %v463 = vadd.f32 0.0, %v462
      %464 = vmatmul.f32.gmra.mxu0 %v337
      %v465 = vpop.f32.mrf.mxu0
      %v466 = vadd.f32 0.0, %v465
      %467 = vmatmul.f32.gmra.mxu0 %v340
      %v468 = vpop.f32.mrf.mxu0
      %v469 = vadd.f32 0.0, %v468
      %470 = vmatmul.f32.gmra.mxu0 %v343
      %v471 = vpop.f32.mrf.mxu0
      %v472 = vadd.f32 0.0, %v471
      %473 = vmatmul.f32.gmra.mxu0 %v346
      %v474 = vpop.f32.mrf.mxu0
      %v475 = vadd.f32 0.0, %v474
      %476 = vmatmul.f32.gmra.mxu0 %v349
      %v477 = vpop.f32.mrf.mxu0
      %v478 = vadd.f32 0.0, %v477
      %479 = vmatmul.f32.gmra.mxu0 %v352
      %v480 = vpop.f32.mrf.mxu0
      %v481 = vadd.f32 0.0, %v480
      %482 = vmatmul.f32.gmra.mxu0 %v355
      %v483 = vpop.f32.mrf.mxu0
      %v484 = vadd.f32 0.0, %v483
      %485 = vmatmul.f32.gmra.mxu0 %v358
      %v486 = vpop.f32.mrf.mxu0
      %v487 = vadd.f32 0.0, %v486
      %488 = vmatmul.f32.gmra.mxu0 %v361
      %v489 = vpop.f32.mrf.mxu0
      %v490 = vadd.f32 0.0, %v489
      %491 = vmatmul.f32.gmra.mxu0 %v364
      %v492 = vpop.f32.mrf.mxu0
      %v493 = vadd.f32 0.0, %v492
      %494 = vmatmul.f32.gmra.mxu0 %v367
      %v495 = vpop.f32.mrf.mxu0
      %v496 = vadd.f32 0.0, %v495
      %497 = vmatmul.f32.gmra.mxu0 %v370
      %v498 = vpop.f32.mrf.mxu0
      %v499 = vadd.f32 0.0, %v498
      %500 = vmatmul.f32.gmra.mxu0 %v373
      %v501 = vpop.f32.mrf.mxu0
      %v502 = vadd.f32 0.0, %v501
      %503 = vmatmul.f32.gmra.mxu0 %v376
      %v504 = vpop.f32.mrf.mxu0
      %v505 = vadd.f32 0.0, %v504
      %506 = vmatmul.f32.gmra.mxu0 %v379
      %v507 = vpop.f32.mrf.mxu0
      %v508 = vadd.f32 0.0, %v507
      %509 = vmatmul.f32.gmra.mxu0 %v382
      %v510 = vpop.f32.mrf.mxu0
      %v511 = vadd.f32 0.0, %v510
      %512 = vmatmul.f32.gmra.mxu0 %v385
      %v513 = vpop.f32.mrf.mxu0
      %v514 = vadd.f32 0.0, %v513
      %515 = vmatmul.f32.gmra.mxu0 %v388
      %v516 = vpop.f32.mrf.mxu0
      %v517 = vadd.f32 0.0, %v516
      %518 = vmatmul.f32.gmra.mxu0 %v391
      %v519 = vpop.f32.mrf.mxu0
      %v520 = vadd.f32 0.0, %v519
      %521 = vmatmul.f32.gmra.mxu0 %v394
      %v522 = vpop.f32.mrf.mxu0
      %v523 = vadd.f32 0.0, %v522
      %524 = vmatmul.f32.gmra.mxu0 %v397
      %v525 = vpop.f32.mrf.mxu0
      %v526 = vadd.f32 0.0, %v525
      %527 = vmatmul.f32.gmra.mxu0 %v400
      %v528 = vpop.f32.mrf.mxu0
      %v529 = vadd.f32 0.0, %v528
      %530 = vmatmul.f32.gmra.mxu0 %v403
      %v531 = vpop.f32.mrf.mxu0
      %v532 = vadd.f32 0.0, %v531
      %533 = vmatmul.f32.gmra.mxu0 %v406
      %v534 = vpop.f32.mrf.mxu0
      %v535 = vadd.f32 0.0, %v534
      %536 = vmatmul.f32.gmra.mxu0 %v409
      %v537 = vpop.f32.mrf.mxu0
      %v538 = vadd.f32 0.0, %v537
      %539 = vmatmul.f32.gmra.mxu0 %v412
      %v540 = vpop.f32.mrf.mxu0
      %v541 = vadd.f32 0.0, %v540
      %542 = vmatmul.f32.gmra.mxu0 %v415
      %v543 = vpop.f32.mrf.mxu0
      %v544 = vadd.f32 0.0, %v543
      %545 = vmatmul.f32.gmra.mxu0 %v418
      %v546 = vpop.f32.mrf.mxu0
      %v547 = vadd.f32 0.0, %v546
      %548 = vmatmul.f32.gmra.mxu0 %v421
      %v549 = vpop.f32.mrf.mxu0
      %v550 = vadd.f32 0.0, %v549
      %551 = vmatmul.f32.gmra.mxu0 %v424
      %v552 = vpop.f32.mrf.mxu0
      %v553 = vadd.f32 0.0, %v552
      %554 = vmatmul.f32.gmra.mxu0 %v427
      %v555 = vpop.f32.mrf.mxu0
      %v556 = vadd.f32 0.0, %v555
      %557 = vdwg.mxu0
      %v559 = vsel %vm320, %v245, 0
      %v562 = vsel %vm320, %v246, 0
      %v565 = vsel %vm320, %v247, 0
      %v568 = vsel %vm320, %v248, 0
      %v571 = vsel %vm320, %v249, 0
      %v574 = vsel %vm320, %v250, 0
      %v577 = vsel %vm320, %v251, 0
      %v580 = vsel %vm320, %v252, 0
      %v583 = vsel %vm320, %v253, 0
      %v586 = vsel %vm320, %v254, 0
      %v589 = vsel %vm320, %v255, 0
      %v592 = vsel %vm320, %v256, 0
      %v595 = vsel %vm320, %v257, 0
      %v598 = vsel %vm320, %v258, 0
      %v601 = vsel %vm320, %v259, 0
      %v604 = vsel %vm320, %v260, 0
      %v607 = vsel %vm320, %v261, 0
      %v610 = vsel %vm320, %v262, 0
      %v613 = vsel %vm320, %v263, 0
      %v616 = vsel %vm320, %v264, 0
      %v619 = vsel %vm320, %v265, 0
      %v622 = vsel %vm320, %v266, 0
      %v625 = vsel %vm320, %v267, 0
      %v628 = vsel %vm320, %v268, 0
      %v631 = vsel %vm320, %v269, 0
      %v634 = vsel %vm320, %v270, 0
      %v637 = vsel %vm320, %v271, 0
      %v640 = vsel %vm320, %v272, 0
      %v643 = vsel %vm320, %v273, 0
      %v646 = vsel %vm320, %v274, 0
      %v649 = vsel %vm320, %v275, 0
      %v652 = vsel %vm320, %v276, 0
      %v655 = vsel %vm320, %v277, 0
      %v658 = vsel %vm320, %v278, 0
      %v661 = vsel %vm320, %v279, 0
      %v664 = vsel %vm320, %v280, 0
      %v667 = vsel %vm429, %v281, 0
      %669 = vmatpush.msra.mxu0 0.0
      %670 = vmatpush.msra.mxu0 0.0
      %671 = vmatpush.msra.mxu0 0.0
      %672 = vmatpush.msra.mxu0 0.0
      %673 = vmatpush.msra.mxu0 0.0
      %674 = vmatpush.msra.mxu0 0.0
      %675 = vmatpush.msra.mxu0 0.0
      %676 = vmatpush.msra.mxu0 0.0
      %677 = vmatpush.msra.mxu0 0.0
      %678 = vmatpush.msra.mxu0 0.0
      %679 = vmatpush.msra.mxu0 0.0
      %680 = vmatpush.msra.mxu0 0.0
      %681 = vmatpush.msra.mxu0 0.0
      %682 = vmatpush.msra.mxu0 0.0
      %683 = vmatpush.msra.mxu0 0.0
      %684 = vmatpush.msra.mxu0 %v667
      %685 = vmatmul.f32.gmra.mxu0 %v559
      %v686 = vpop.f32.mrf.mxu0
      %v687 = vadd.f32 %v451, %v686
      %688 = vmatmul.f32.gmra.mxu0 %v562
      %v689 = vpop.f32.mrf.mxu0
      %v690 = vadd.f32 %v454, %v689
      %691 = vmatmul.f32.gmra.mxu0 %v565
      %v692 = vpop.f32.mrf.mxu0
      %v693 = vadd.f32 %v457, %v692
      %694 = vmatmul.f32.gmra.mxu0 %v568
      %v695 = vpop.f32.mrf.mxu0
      %v696 = vadd.f32 %v460, %v695
      %697 = vmatmul.f32.gmra.mxu0 %v571
      %v698 = vpop.f32.mrf.mxu0
      %v699 = vadd.f32 %v463, %v698
      %700 = vmatmul.f32.gmra.mxu0 %v574
      %v701 = vpop.f32.mrf.mxu0
      %v702 = vadd.f32 %v466, %v701
      %703 = vmatmul.f32.gmra.mxu0 %v577
      %v704 = vpop.f32.mrf.mxu0
      %v705 = vadd.f32 %v469, %v704
      %706 = vmatmul.f32.gmra.mxu0 %v580
      %v707 = vpop.f32.mrf.mxu0
      %v708 = vadd.f32 %v472, %v707
      %709 = vmatmul.f32.gmra.mxu0 %v583
      %v710 = vpop.f32.mrf.mxu0
      %v711 = vadd.f32 %v475, %v710
      %712 = vmatmul.f32.gmra.mxu0 %v586
      %v713 = vpop.f32.mrf.mxu0
      %v714 = vadd.f32 %v478, %v713
      %715 = vmatmul.f32.gmra.mxu0 %v589
      %v716 = vpop.f32.mrf.mxu0
      %v717 = vadd.f32 %v481, %v716
      %718 = vmatmul.f32.gmra.mxu0 %v592
      %v719 = vpop.f32.mrf.mxu0
      %v720 = vadd.f32 %v484, %v719
      %721 = vmatmul.f32.gmra.mxu0 %v595
      %v722 = vpop.f32.mrf.mxu0
      %v723 = vadd.f32 %v487, %v722
      %724 = vmatmul.f32.gmra.mxu0 %v598
      %v725 = vpop.f32.mrf.mxu0
      %v726 = vadd.f32 %v490, %v725
      %727 = vmatmul.f32.gmra.mxu0 %v601
      %v728 = vpop.f32.mrf.mxu0
      %v729 = vadd.f32 %v493, %v728
      %730 = vmatmul.f32.gmra.mxu0 %v604
      %v731 = vpop.f32.mrf.mxu0
      %v732 = vadd.f32 %v496, %v731
      %733 = vmatmul.f32.gmra.mxu0 %v607
      %v734 = vpop.f32.mrf.mxu0
      %v735 = vadd.f32 %v499, %v734
      %736 = vmatmul.f32.gmra.mxu0 %v610
      %v737 = vpop.f32.mrf.mxu0
      %v738 = vadd.f32 %v502, %v737
      %739 = vmatmul.f32.gmra.mxu0 %v613
      %v740 = vpop.f32.mrf.mxu0
      %v741 = vadd.f32 %v505, %v740
      %742 = vmatmul.f32.gmra.mxu0 %v616
      %v743 = vpop.f32.mrf.mxu0
      %v744 = vadd.f32 %v508, %v743
      %745 = vmatmul.f32.gmra.mxu0 %v619
      %v746 = vpop.f32.mrf.mxu0
      %v747 = vadd.f32 %v511, %v746
      %748 = vmatmul.f32.gmra.mxu0 %v622
      %v749 = vpop.f32.mrf.mxu0
      %v750 = vadd.f32 %v514, %v749
      %751 = vmatmul.f32.gmra.mxu0 %v625
      %v752 = vpop.f32.mrf.mxu0
      %v753 = vadd.f32 %v517, %v752
      %754 = vmatmul.f32.gmra.mxu0 %v628
      %v755 = vpop.f32.mrf.mxu0
      %v756 = vadd.f32 %v520, %v755
      %757 = vmatmul.f32.gmra.mxu0 %v631
      %v758 = vpop.f32.mrf.mxu0
      %v759 = vadd.f32 %v523, %v758
      %760 = vmatmul.f32.gmra.mxu0 %v634
      %v761 = vpop.f32.mrf.mxu0
      %v762 = vadd.f32 %v526, %v761
      %763 = vmatmul.f32.gmra.mxu0 %v637
      %v764 = vpop.f32.mrf.mxu0
      %v765 = vadd.f32 %v529, %v764
      %766 = vmatmul.f32.gmra.mxu0 %v640
      %v767 = vpop.f32.mrf.mxu0
      %v768 = vadd.f32 %v532, %v767
      %769 = vmatmul.f32.gmra.mxu0 %v643
      %v770 = vpop.f32.mrf.mxu0
      %v771 = vadd.f32 %v535, %v770
      %772 = vmatmul.f32.gmra.mxu0 %v646
      %v773 = vpop.f32.mrf.mxu0
      %v774 = vadd.f32 %v538, %v773
      %775 = vmatmul.f32.gmra.mxu0 %v649
      %v776 = vpop.f32.mrf.mxu0
      %v777 = vadd.f32 %v541, %v776
      %778 = vmatmul.f32.gmra.mxu0 %v652
      %v779 = vpop.f32.mrf.mxu0
      %v780 = vadd.f32 %v544, %v779
      %781 = vmatmul.f32.gmra.mxu0 %v655
      %v782 = vpop.f32.mrf.mxu0
      %v783 = vadd.f32 %v547, %v782
      %784 = vmatmul.f32.gmra.mxu0 %v658
      %v785 = vpop.f32.mrf.mxu0
      %v786 = vadd.f32 %v550, %v785
      %787 = vmatmul.f32.gmra.mxu0 %v661
      %v788 = vpop.f32.mrf.mxu0
      %v789 = vadd.f32 %v553, %v788
      %790 = vmatmul.f32.gmra.mxu0 %v664
      %v791 = vpop.f32.mrf.mxu0
      %v792 = vadd.f32 %v556, %v791
      %793 = vdwg.mxu0
      %v794 = vld [vmem:[%s234 + $0x2] sm:$0xff]
      %v795 = vld [vmem:[%s234 + $0xa] sm:$0xff]
      %v796 = vld [vmem:[%s234 + $0x12] sm:$0xff]
      %v797 = vld [vmem:[%s234 + $0x1a] sm:$0xff]
      %v798 = vld [vmem:[%s234 + $0x22] sm:$0xff]
      %v799 = vld [vmem:[%s234 + $0x2a] sm:$0xff]
      %v800 = vld [vmem:[%s234 + $0x32] sm:$0xff]
      %v801 = vld [vmem:[%s234 + $0x3a] sm:$0xff]
      %v802 = vld [vmem:[%s234 + $0x42] sm:$0xff]
      %v803 = vld [vmem:[%s234 + $0x4a] sm:$0xff]
      %v804 = vld [vmem:[%s234 + $0x52] sm:$0xff]
      %v805 = vld [vmem:[%s234 + $0x5a] sm:$0xff]
      %v806 = vld [vmem:[%s234 + $0x62] sm:$0xff]
      %v807 = vld [vmem:[%s234 + $0x6a] sm:$0xff]
      %v808 = vld [vmem:[%s234 + $0x72] sm:$0xff]
      %v809 = vld [vmem:[%s234 + $0x7a] sm:$0xff]
      %v810 = vld [vmem:[%s234 + $0x82] sm:$0xff]
      %v811 = vld [vmem:[%s234 + $0x8a] sm:$0xff]
      %v812 = vld [vmem:[%s234 + $0x92] sm:$0xff]
      %v813 = vld [vmem:[%s234 + $0x9a] sm:$0xff]
      %v814 = vld [vmem:[%s234 + $0xa2] sm:$0xff]
      %v815 = vld [vmem:[%s234 + $0xaa] sm:$0xff]
      %v816 = vld [vmem:[%s234 + $0xb2] sm:$0xff]
      %v817 = vld [vmem:[%s234 + $0xba] sm:$0xff]
      %v818 = vld [vmem:[%s234 + $0xc2] sm:$0xff]
      %v819 = vld [vmem:[%s234 + $0xca] sm:$0xff]
      %v820 = vld [vmem:[%s234 + $0xd2] sm:$0xff]
      %v821 = vld [vmem:[%s234 + $0xda] sm:$0xff]
      %v822 = vld [vmem:[%s234 + $0xe2] sm:$0xff]
      %v823 = vld [vmem:[%s234 + $0xea] sm:$0xff]
      %v824 = vld [vmem:[%s234 + $0xf2] sm:$0xff]
      %v825 = vld [vmem:[%s234 + $0xfa] sm:$0xff]
      %v826 = vld [vmem:[%s234 + $0x102] sm:$0xff]
      %v827 = vld [vmem:[%s234 + $0x10a] sm:$0xff]
      %v828 = vld [vmem:[%s234 + $0x112] sm:$0xff]
      %v829 = vld [vmem:[%s234 + $0x11a] sm:$0xff]
      %s830 = scalar_lea.vmem %s1, 8
      %v831 = vld [vmem:[%s830] sm:$0xf]
      %v833 = vsel %vm320, %v794, 0
      %v836 = vsel %vm320, %v795, 0
      %v839 = vsel %vm320, %v796, 0
      %v842 = vsel %vm320, %v797, 0
      %v845 = vsel %vm320, %v798, 0
      %v848 = vsel %vm320, %v799, 0
      %v851 = vsel %vm320, %v800, 0
      %v854 = vsel %vm320, %v801, 0
      %v857 = vsel %vm320, %v802, 0
      %v860 = vsel %vm320, %v803, 0
      %v863 = vsel %vm320, %v804, 0
      %v866 = vsel %vm320, %v805, 0
      %v869 = vsel %vm320, %v806, 0
      %v872 = vsel %vm320, %v807, 0
      %v875 = vsel %vm320, %v808, 0
      %v878 = vsel %vm320, %v809, 0
      %v881 = vsel %vm320, %v810, 0
      %v884 = vsel %vm320, %v811, 0
      %v887 = vsel %vm320, %v812, 0
      %v890 = vsel %vm320, %v813, 0
      %v893 = vsel %vm320, %v814, 0
      %v896 = vsel %vm320, %v815, 0
      %v899 = vsel %vm320, %v816, 0
      %v902 = vsel %vm320, %v817, 0
      %v905 = vsel %vm320, %v818, 0
      %v908 = vsel %vm320, %v819, 0
      %v911 = vsel %vm320, %v820, 0
      %v914 = vsel %vm320, %v821, 0
      %v917 = vsel %vm320, %v822, 0
      %v920 = vsel %vm320, %v823, 0
      %v923 = vsel %vm320, %v824, 0
      %v926 = vsel %vm320, %v825, 0
      %v929 = vsel %vm320, %v826, 0
      %v932 = vsel %vm320, %v827, 0
      %v935 = vsel %vm320, %v828, 0
      %v938 = vsel %vm320, %v829, 0
      %v941 = vsel %vm429, %v831, 0
      %943 = vmatpush.msra.mxu0 0.0
      %944 = vmatpush.msra.mxu0 0.0
      %945 = vmatpush.msra.mxu0 0.0
      %946 = vmatpush.msra.mxu0 0.0
      %947 = vmatpush.msra.mxu0 0.0
      %948 = vmatpush.msra.mxu0 0.0
      %949 = vmatpush.msra.mxu0 0.0
      %950 = vmatpush.msra.mxu0 0.0
      %951 = vmatpush.msra.mxu0 0.0
      %952 = vmatpush.msra.mxu0 0.0
      %953 = vmatpush.msra.mxu0 0.0
      %954 = vmatpush.msra.mxu0 0.0
      %955 = vmatpush.msra.mxu0 0.0
      %956 = vmatpush.msra.mxu0 0.0
      %957 = vmatpush.msra.mxu0 0.0
      %958 = vmatpush.msra.mxu0 %v941
      %959 = vmatmul.f32.gmra.mxu0 %v833
      %v960 = vpop.f32.mrf.mxu0
      %v961 = vadd.f32 0.0, %v960
      %962 = vmatmul.f32.gmra.mxu0 %v836
      %v963 = vpop.f32.mrf.mxu0
      %v964 = vadd.f32 0.0, %v963
      %965 = vmatmul.f32.gmra.mxu0 %v839
      %v966 = vpop.f32.mrf.mxu0
      %v967 = vadd.f32 0.0, %v966
      %968 = vmatmul.f32.gmra.mxu0 %v842
      %v969 = vpop.f32.mrf.mxu0
      %v970 = vadd.f32 0.0, %v969
      %971 = vmatmul.f32.gmra.mxu0 %v845
      %v972 = vpop.f32.mrf.mxu0
      %v973 = vadd.f32 0.0, %v972
      %974 = vmatmul.f32.gmra.mxu0 %v848
      %v975 = vpop.f32.mrf.mxu0
      %v976 = vadd.f32 0.0, %v975
      %977 = vmatmul.f32.gmra.mxu0 %v851
      %v978 = vpop.f32.mrf.mxu0
      %v979 = vadd.f32 0.0, %v978
      %980 = vmatmul.f32.gmra.mxu0 %v854
      %v981 = vpop.f32.mrf.mxu0
      %v982 = vadd.f32 0.0, %v981
      %983 = vmatmul.f32.gmra.mxu0 %v857
      %v984 = vpop.f32.mrf.mxu0
      %v985 = vadd.f32 0.0, %v984
      %986 = vmatmul.f32.gmra.mxu0 %v860
      %v987 = vpop.f32.mrf.mxu0
      %v988 = vadd.f32 0.0, %v987
      %989 = vmatmul.f32.gmra.mxu0 %v863
      %v990 = vpop.f32.mrf.mxu0
      %v991 = vadd.f32 0.0, %v990
      %992 = vmatmul.f32.gmra.mxu0 %v866
      %v993 = vpop.f32.mrf.mxu0
      %v994 = vadd.f32 0.0, %v993
      %995 = vmatmul.f32.gmra.mxu0 %v869
      %v996 = vpop.f32.mrf.mxu0
      %v997 = vadd.f32 0.0, %v996
      %998 = vmatmul.f32.gmra.mxu0 %v872
      %v999 = vpop.f32.mrf.mxu0
      %v1000 = vadd.f32 0.0, %v999
      %1001 = vmatmul.f32.gmra.mxu0 %v875
      %v1002 = vpop.f32.mrf.mxu0
      %v1003 = vadd.f32 0.0, %v1002
      %1004 = vmatmul.f32.gmra.mxu0 %v878
      %v1005 = vpop.f32.mrf.mxu0
      %v1006 = vadd.f32 0.0, %v1005
      %1007 = vmatmul.f32.gmra.mxu0 %v881
      %v1008 = vpop.f32.mrf.mxu0
      %v1009 = vadd.f32 0.0, %v1008
      %1010 = vmatmul.f32.gmra.mxu0 %v884
      %v1011 = vpop.f32.mrf.mxu0
      %v1012 = vadd.f32 0.0, %v1011
      %1013 = vmatmul.f32.gmra.mxu0 %v887
      %v1014 = vpop.f32.mrf.mxu0
      %v1015 = vadd.f32 0.0, %v1014
      %1016 = vmatmul.f32.gmra.mxu0 %v890
      %v1017 = vpop.f32.mrf.mxu0
      %v1018 = vadd.f32 0.0, %v1017
      %1019 = vmatmul.f32.gmra.mxu0 %v893
      %v1020 = vpop.f32.mrf.mxu0
      %v1021 = vadd.f32 0.0, %v1020
      %1022 = vmatmul.f32.gmra.mxu0 %v896
      %v1023 = vpop.f32.mrf.mxu0
      %v1024 = vadd.f32 0.0, %v1023
      %1025 = vmatmul.f32.gmra.mxu0 %v899
      %v1026 = vpop.f32.mrf.mxu0
      %v1027 = vadd.f32 0.0, %v1026
      %1028 = vmatmul.f32.gmra.mxu0 %v902
      %v1029 = vpop.f32.mrf.mxu0
      %v1030 = vadd.f32 0.0, %v1029
      %1031 = vmatmul.f32.gmra.mxu0 %v905
      %v1032 = vpop.f32.mrf.mxu0
      %v1033 = vadd.f32 0.0, %v1032
      %1034 = vmatmul.f32.gmra.mxu0 %v908
      %v1035 = vpop.f32.mrf.mxu0
      %v1036 = vadd.f32 0.0, %v1035
      %1037 = vmatmul.f32.gmra.mxu0 %v911
      %v1038 = vpop.f32.mrf.mxu0
      %v1039 = vadd.f32 0.0, %v1038
      %1040 = vmatmul.f32.gmra.mxu0 %v914
      %v1041 = vpop.f32.mrf.mxu0
      %v1042 = vadd.f32 0.0, %v1041
      %1043 = vmatmul.f32.gmra.mxu0 %v917
      %v1044 = vpop.f32.mrf.mxu0
      %v1045 = vadd.f32 0.0, %v1044
      %1046 = vmatmul.f32.gmra.mxu0 %v920
      %v1047 = vpop.f32.mrf.mxu0
      %v1048 = vadd.f32 0.0, %v1047
      %1049 = vmatmul.f32.gmra.mxu0 %v923
      %v1050 = vpop.f32.mrf.mxu0
      %v1051 = vadd.f32 0.0, %v1050
      %1052 = vmatmul.f32.gmra.mxu0 %v926
      %v1053 = vpop.f32.mrf.mxu0
      %v1054 = vadd.f32 0.0, %v1053
      %1055 = vmatmul.f32.gmra.mxu0 %v929
      %v1056 = vpop.f32.mrf.mxu0
      %v1057 = vadd.f32 0.0, %v1056
      %1058 = vmatmul.f32.gmra.mxu0 %v932
      %v1059 = vpop.f32.mrf.mxu0
      %v1060 = vadd.f32 0.0, %v1059
      %1061 = vmatmul.f32.gmra.mxu0 %v935
      %v1062 = vpop.f32.mrf.mxu0
      %v1063 = vadd.f32 0.0, %v1062
      %1064 = vmatmul.f32.gmra.mxu0 %v938
      %v1065 = vpop.f32.mrf.mxu0
      %v1066 = vadd.f32 0.0, %v1065
      %1067 = vdwg.mxu0
      %v1068 = vadd.f32 %v687, %v961
      %v1069 = vadd.f32 %v690, %v964
      %v1070 = vadd.f32 %v693, %v967
      %v1071 = vadd.f32 %v696, %v970
      %v1072 = vadd.f32 %v699, %v973
      %v1073 = vadd.f32 %v702, %v976
      %v1074 = vadd.f32 %v705, %v979
      %v1075 = vadd.f32 %v708, %v982
      %v1076 = vadd.f32 %v711, %v985
      %v1077 = vadd.f32 %v714, %v988
      %v1078 = vadd.f32 %v717, %v991
      %v1079 = vadd.f32 %v720, %v994
      %v1080 = vadd.f32 %v723, %v997
      %v1081 = vadd.f32 %v726, %v1000
      %v1082 = vadd.f32 %v729, %v1003
      %v1083 = vadd.f32 %v732, %v1006
      %v1084 = vadd.f32 %v735, %v1009
      %v1085 = vadd.f32 %v738, %v1012
      %v1086 = vadd.f32 %v741, %v1015
      %v1087 = vadd.f32 %v744, %v1018
      %v1088 = vadd.f32 %v747, %v1021
      %v1089 = vadd.f32 %v750, %v1024
      %v1090 = vadd.f32 %v753, %v1027
      %v1091 = vadd.f32 %v756, %v1030
      %v1092 = vadd.f32 %v759, %v1033
      %v1093 = vadd.f32 %v762, %v1036
      %v1094 = vadd.f32 %v765, %v1039
      %v1095 = vadd.f32 %v768, %v1042
      %v1096 = vadd.f32 %v771, %v1045
      %v1097 = vadd.f32 %v774, %v1048
      %v1098 = vadd.f32 %v777, %v1051
      %v1099 = vadd.f32 %v780, %v1054
      %v1100 = vadd.f32 %v783, %v1057
      %v1101 = vadd.f32 %v786, %v1060
      %v1102 = vadd.f32 %v789, %v1063
      %v1103 = vadd.f32 %v792, %v1066
      %v1104 = vld [vmem:[%s234 + $0x12] sm:$0xff]
      %v1105 = vld [vmem:[%s234 + $0x1a] sm:$0xff]
      %v1106 = vld [vmem:[%s234 + $0x22] sm:$0xff]
      %v1107 = vld [vmem:[%s234 + $0x2a] sm:$0xff]
      %v1108 = vld [vmem:[%s234 + $0x32] sm:$0xff]
      %v1109 = vld [vmem:[%s234 + $0x3a] sm:$0xff]
      %v1110 = vld [vmem:[%s234 + $0x42] sm:$0xff]
      %v1111 = vld [vmem:[%s234 + $0x4a] sm:$0xff]
      %v1112 = vld [vmem:[%s234 + $0x52] sm:$0xff]
      %v1113 = vld [vmem:[%s234 + $0x5a] sm:$0xff]
      %v1114 = vld [vmem:[%s234 + $0x62] sm:$0xff]
      %v1115 = vld [vmem:[%s234 + $0x6a] sm:$0xff]
      %v1116 = vld [vmem:[%s234 + $0x72] sm:$0xff]
      %v1117 = vld [vmem:[%s234 + $0x7a] sm:$0xff]
      %v1118 = vld [vmem:[%s234 + $0x82] sm:$0xff]
      %v1119 = vld [vmem:[%s234 + $0x8a] sm:$0xff]
      %v1120 = vld [vmem:[%s234 + $0x92] sm:$0xff]
      %v1121 = vld [vmem:[%s234 + $0x9a] sm:$0xff]
      %v1122 = vld [vmem:[%s234 + $0xa2] sm:$0xff]
      %v1123 = vld [vmem:[%s234 + $0xaa] sm:$0xff]
      %v1124 = vld [vmem:[%s234 + $0xb2] sm:$0xff]
      %v1125 = vld [vmem:[%s234 + $0xba] sm:$0xff]
      %v1126 = vld [vmem:[%s234 + $0xc2] sm:$0xff]
      %v1127 = vld [vmem:[%s234 + $0xca] sm:$0xff]
      %v1128 = vld [vmem:[%s234 + $0xd2] sm:$0xff]
      %v1129 = vld [vmem:[%s234 + $0xda] sm:$0xff]
      %v1130 = vld [vmem:[%s234 + $0xe2] sm:$0xff]
      %v1131 = vld [vmem:[%s234 + $0xea] sm:$0xff]
      %v1132 = vld [vmem:[%s234 + $0xf2] sm:$0xff]
      %v1133 = vld [vmem:[%s234 + $0xfa] sm:$0xff]
      %v1134 = vld [vmem:[%s234 + $0x102] sm:$0xff]
      %v1135 = vld [vmem:[%s234 + $0x10a] sm:$0xff]
      %v1136 = vld [vmem:[%s234 + $0x112] sm:$0xff]
      %v1137 = vld [vmem:[%s234 + $0x11a] sm:$0xff]
      %v1138 = vld [vmem:[%s234 + $0x122] sm:$0xff]
      %v1139 = vld [vmem:[%s234 + $0x12a] sm:$0xff]
      %s1140 = scalar_lea.vmem %s1, 12
      %v1141 = vld [vmem:[%s1140] sm:$0xf]
      %v1143 = vsel %vm320, %v1104, 0
      %v1146 = vsel %vm320, %v1105, 0
      %v1149 = vsel %vm320, %v1106, 0
      %v1152 = vsel %vm320, %v1107, 0
      %v1155 = vsel %vm320, %v1108, 0
      %v1158 = vsel %vm320, %v1109, 0
      %v1161 = vsel %vm320, %v1110, 0
      %v1164 = vsel %vm320, %v1111, 0
      %v1167 = vsel %vm320, %v1112, 0
      %v1170 = vsel %vm320, %v1113, 0
      %v1173 = vsel %vm320, %v1114, 0
      %v1176 = vsel %vm320, %v1115, 0
      %v1179 = vsel %vm320, %v1116, 0
      %v1182 = vsel %vm320, %v1117, 0
      %v1185 = vsel %vm320, %v1118, 0
      %v1188 = vsel %vm320, %v1119, 0
      %v1191 = vsel %vm320, %v1120, 0
      %v1194 = vsel %vm320, %v1121, 0
      %v1197 = vsel %vm320, %v1122, 0
      %v1200 = vsel %vm320, %v1123, 0
      %v1203 = vsel %vm320, %v1124, 0
      %v1206 = vsel %vm320, %v1125, 0
      %v1209 = vsel %vm320, %v1126, 0
      %v1212 = vsel %vm320, %v1127, 0
      %v1215 = vsel %vm320, %v1128, 0
      %v1218 = vsel %vm320, %v1129, 0
      %v1221 = vsel %vm320, %v1130, 0
      %v1224 = vsel %vm320, %v1131, 0
      %v1227 = vsel %vm320, %v1132, 0
      %v1230 = vsel %vm320, %v1133, 0
      %v1233 = vsel %vm320, %v1134, 0
      %v1236 = vsel %vm320, %v1135, 0
      %v1239 = vsel %vm320, %v1136, 0
      %v1242 = vsel %vm320, %v1137, 0
      %v1245 = vsel %vm320, %v1138, 0
      %v1248 = vsel %vm320, %v1139, 0
      %v1251 = vsel %vm429, %v1141, 0
      %1253 = vmatpush.msra.mxu0 0.0
      %1254 = vmatpush.msra.mxu0 0.0
      %1255 = vmatpush.msra.mxu0 0.0
      %1256 = vmatpush.msra.mxu0 0.0
      %1257 = vmatpush.msra.mxu0 0.0
      %1258 = vmatpush.msra.mxu0 0.0
      %1259 = vmatpush.msra.mxu0 0.0
      %1260 = vmatpush.msra.mxu0 0.0
      %1261 = vmatpush.msra.mxu0 0.0
      %1262 = vmatpush.msra.mxu0 0.0
      %1263 = vmatpush.msra.mxu0 0.0
      %1264 = vmatpush.msra.mxu0 0.0
      %1265 = vmatpush.msra.mxu0 0.0
      %1266 = vmatpush.msra.mxu0 0.0
      %1267 = vmatpush.msra.mxu0 0.0
      %1268 = vmatpush.msra.mxu0 %v1251
      %1269 = vmatmul.f32.gmra.mxu0 %v1143
      %v1270 = vpop.f32.mrf.mxu0
      %v1271 = vadd.f32 0.0, %v1270
      %1272 = vmatmul.f32.gmra.mxu0 %v1146
      %v1273 = vpop.f32.mrf.mxu0
      %v1274 = vadd.f32 0.0, %v1273
      %1275 = vmatmul.f32.gmra.mxu0 %v1149
      %v1276 = vpop.f32.mrf.mxu0
      %v1277 = vadd.f32 0.0, %v1276
      %1278 = vmatmul.f32.gmra.mxu0 %v1152
      %v1279 = vpop.f32.mrf.mxu0
      %v1280 = vadd.f32 0.0, %v1279
      %1281 = vmatmul.f32.gmra.mxu0 %v1155
      %v1282 = vpop.f32.mrf.mxu0
      %v1283 = vadd.f32 0.0, %v1282
      %1284 = vmatmul.f32.gmra.mxu0 %v1158
      %v1285 = vpop.f32.mrf.mxu0
      %v1286 = vadd.f32 0.0, %v1285
      %1287 = vmatmul.f32.gmra.mxu0 %v1161
      %v1288 = vpop.f32.mrf.mxu0
      %v1289 = vadd.f32 0.0, %v1288
      %1290 = vmatmul.f32.gmra.mxu0 %v1164
      %v1291 = vpop.f32.mrf.mxu0
      %v1292 = vadd.f32 0.0, %v1291
      %1293 = vmatmul.f32.gmra.mxu0 %v1167
      %v1294 = vpop.f32.mrf.mxu0
      %v1295 = vadd.f32 0.0, %v1294
      %1296 = vmatmul.f32.gmra.mxu0 %v1170
      %v1297 = vpop.f32.mrf.mxu0
      %v1298 = vadd.f32 0.0, %v1297
      %1299 = vmatmul.f32.gmra.mxu0 %v1173
      %v1300 = vpop.f32.mrf.mxu0
      %v1301 = vadd.f32 0.0, %v1300
      %1302 = vmatmul.f32.gmra.mxu0 %v1176
      %v1303 = vpop.f32.mrf.mxu0
      %v1304 = vadd.f32 0.0, %v1303
      %1305 = vmatmul.f32.gmra.mxu0 %v1179
      %v1306 = vpop.f32.mrf.mxu0
      %v1307 = vadd.f32 0.0, %v1306
      %1308 = vmatmul.f32.gmra.mxu0 %v1182
      %v1309 = vpop.f32.mrf.mxu0
      %v1310 = vadd.f32 0.0, %v1309
      %1311 = vmatmul.f32.gmra.mxu0 %v1185
      %v1312 = vpop.f32.mrf.mxu0
      %v1313 = vadd.f32 0.0, %v1312
      %1314 = vmatmul.f32.gmra.mxu0 %v1188
      %v1315 = vpop.f32.mrf.mxu0
      %v1316 = vadd.f32 0.0, %v1315
      %1317 = vmatmul.f32.gmra.mxu0 %v1191
      %v1318 = vpop.f32.mrf.mxu0
      %v1319 = vadd.f32 0.0, %v1318
      %1320 = vmatmul.f32.gmra.mxu0 %v1194
      %v1321 = vpop.f32.mrf.mxu0
      %v1322 = vadd.f32 0.0, %v1321
      %1323 = vmatmul.f32.gmra.mxu0 %v1197
      %v1324 = vpop.f32.mrf.mxu0
      %v1325 = vadd.f32 0.0, %v1324
      %1326 = vmatmul.f32.gmra.mxu0 %v1200
      %v1327 = vpop.f32.mrf.mxu0
      %v1328 = vadd.f32 0.0, %v1327
      %1329 = vmatmul.f32.gmra.mxu0 %v1203
      %v1330 = vpop.f32.mrf.mxu0
      %v1331 = vadd.f32 0.0, %v1330
      %1332 = vmatmul.f32.gmra.mxu0 %v1206
      %v1333 = vpop.f32.mrf.mxu0
      %v1334 = vadd.f32 0.0, %v1333
      %1335 = vmatmul.f32.gmra.mxu0 %v1209
      %v1336 = vpop.f32.mrf.mxu0
      %v1337 = vadd.f32 0.0, %v1336
      %1338 = vmatmul.f32.gmra.mxu0 %v1212
      %v1339 = vpop.f32.mrf.mxu0
      %v1340 = vadd.f32 0.0, %v1339
      %1341 = vmatmul.f32.gmra.mxu0 %v1215
      %v1342 = vpop.f32.mrf.mxu0
      %v1343 = vadd.f32 0.0, %v1342
      %1344 = vmatmul.f32.gmra.mxu0 %v1218
      %v1345 = vpop.f32.mrf.mxu0
      %v1346 = vadd.f32 0.0, %v1345
      %1347 = vmatmul.f32.gmra.mxu0 %v1221
      %v1348 = vpop.f32.mrf.mxu0
      %v1349 = vadd.f32 0.0, %v1348
      %1350 = vmatmul.f32.gmra.mxu0 %v1224
      %v1351 = vpop.f32.mrf.mxu0
      %v1352 = vadd.f32 0.0, %v1351
      %1353 = vmatmul.f32.gmra.mxu0 %v1227
      %v1354 = vpop.f32.mrf.mxu0
      %v1355 = vadd.f32 0.0, %v1354
      %1356 = vmatmul.f32.gmra.mxu0 %v1230
      %v1357 = vpop.f32.mrf.mxu0
      %v1358 = vadd.f32 0.0, %v1357
      %1359 = vmatmul.f32.gmra.mxu0 %v1233
      %v1360 = vpop.f32.mrf.mxu0
      %v1361 = vadd.f32 0.0, %v1360
      %1362 = vmatmul.f32.gmra.mxu0 %v1236
      %v1363 = vpop.f32.mrf.mxu0
      %v1364 = vadd.f32 0.0, %v1363
      %1365 = vmatmul.f32.gmra.mxu0 %v1239
      %v1366 = vpop.f32.mrf.mxu0
      %v1367 = vadd.f32 0.0, %v1366
      %1368 = vmatmul.f32.gmra.mxu0 %v1242
      %v1369 = vpop.f32.mrf.mxu0
      %v1370 = vadd.f32 0.0, %v1369
      %1371 = vmatmul.f32.gmra.mxu0 %v1245
      %v1372 = vpop.f32.mrf.mxu0
      %v1373 = vadd.f32 0.0, %v1372
      %1374 = vmatmul.f32.gmra.mxu0 %v1248
      %v1375 = vpop.f32.mrf.mxu0
      %v1376 = vadd.f32 0.0, %v1375
      %1377 = vdwg.mxu0
      %v1378 = vadd.f32 %v1068, %v1271
      %v1379 = vadd.f32 %v1069, %v1274
      %v1380 = vadd.f32 %v1070, %v1277
      %v1381 = vadd.f32 %v1071, %v1280
      %v1382 = vadd.f32 %v1072, %v1283
      %v1383 = vadd.f32 %v1073, %v1286
      %v1384 = vadd.f32 %v1074, %v1289
      %v1385 = vadd.f32 %v1075, %v1292
      %v1386 = vadd.f32 %v1076, %v1295
      %v1387 = vadd.f32 %v1077, %v1298
      %v1388 = vadd.f32 %v1078, %v1301
      %v1389 = vadd.f32 %v1079, %v1304
      %v1390 = vadd.f32 %v1080, %v1307
      %v1391 = vadd.f32 %v1081, %v1310
      %v1392 = vadd.f32 %v1082, %v1313
      %v1393 = vadd.f32 %v1083, %v1316
      %v1394 = vadd.f32 %v1084, %v1319
      %v1395 = vadd.f32 %v1085, %v1322
      %v1396 = vadd.f32 %v1086, %v1325
      %v1397 = vadd.f32 %v1087, %v1328
      %v1398 = vadd.f32 %v1088, %v1331
      %v1399 = vadd.f32 %v1089, %v1334
      %v1400 = vadd.f32 %v1090, %v1337
      %v1401 = vadd.f32 %v1091, %v1340
      %v1402 = vadd.f32 %v1092, %v1343
      %v1403 = vadd.f32 %v1093, %v1346
      %v1404 = vadd.f32 %v1094, %v1349
      %v1405 = vadd.f32 %v1095, %v1352
      %v1406 = vadd.f32 %v1096, %v1355
      %v1407 = vadd.f32 %v1097, %v1358
      %v1408 = vadd.f32 %v1098, %v1361
      %v1409 = vadd.f32 %v1099, %v1364
      %v1410 = vadd.f32 %v1100, %v1367
      %v1411 = vadd.f32 %v1101, %v1370
      %v1412 = vadd.f32 %v1102, %v1373
      %v1413 = vadd.f32 %v1103, %v1376
      %v1414 = vld [vmem:[%s234 + $0x13] sm:$0xff]
      %v1415 = vld [vmem:[%s234 + $0x1b] sm:$0xff]
      %v1416 = vld [vmem:[%s234 + $0x23] sm:$0xff]
      %v1417 = vld [vmem:[%s234 + $0x2b] sm:$0xff]
      %v1418 = vld [vmem:[%s234 + $0x33] sm:$0xff]
      %v1419 = vld [vmem:[%s234 + $0x3b] sm:$0xff]
      %v1420 = vld [vmem:[%s234 + $0x43] sm:$0xff]
      %v1421 = vld [vmem:[%s234 + $0x4b] sm:$0xff]
      %v1422 = vld [vmem:[%s234 + $0x53] sm:$0xff]
      %v1423 = vld [vmem:[%s234 + $0x5b] sm:$0xff]
      %v1424 = vld [vmem:[%s234 + $0x63] sm:$0xff]
      %v1425 = vld [vmem:[%s234 + $0x6b] sm:$0xff]
      %v1426 = vld [vmem:[%s234 + $0x73] sm:$0xff]
      %v1427 = vld [vmem:[%s234 + $0x7b] sm:$0xff]
      %v1428 = vld [vmem:[%s234 + $0x83] sm:$0xff]
      %v1429 = vld [vmem:[%s234 + $0x8b] sm:$0xff]
      %v1430 = vld [vmem:[%s234 + $0x93] sm:$0xff]
      %v1431 = vld [vmem:[%s234 + $0x9b] sm:$0xff]
      %v1432 = vld [vmem:[%s234 + $0xa3] sm:$0xff]
      %v1433 = vld [vmem:[%s234 + $0xab] sm:$0xff]
      %v1434 = vld [vmem:[%s234 + $0xb3] sm:$0xff]
      %v1435 = vld [vmem:[%s234 + $0xbb] sm:$0xff]
      %v1436 = vld [vmem:[%s234 + $0xc3] sm:$0xff]
      %v1437 = vld [vmem:[%s234 + $0xcb] sm:$0xff]
      %v1438 = vld [vmem:[%s234 + $0xd3] sm:$0xff]
      %v1439 = vld [vmem:[%s234 + $0xdb] sm:$0xff]
      %v1440 = vld [vmem:[%s234 + $0xe3] sm:$0xff]
      %v1441 = vld [vmem:[%s234 + $0xeb] sm:$0xff]
      %v1442 = vld [vmem:[%s234 + $0xf3] sm:$0xff]
      %v1443 = vld [vmem:[%s234 + $0xfb] sm:$0xff]
      %v1444 = vld [vmem:[%s234 + $0x103] sm:$0xff]
      %v1445 = vld [vmem:[%s234 + $0x10b] sm:$0xff]
      %v1446 = vld [vmem:[%s234 + $0x113] sm:$0xff]
      %v1447 = vld [vmem:[%s234 + $0x11b] sm:$0xff]
      %v1448 = vld [vmem:[%s234 + $0x123] sm:$0xff]
      %v1449 = vld [vmem:[%s234 + $0x12b] sm:$0xff]
      %s1450 = scalar_lea.vmem %s1, 16
      %v1451 = vld [vmem:[%s1450] sm:$0xf]
      %v1453 = vsel %vm320, %v1414, 0
      %v1456 = vsel %vm320, %v1415, 0
      %v1459 = vsel %vm320, %v1416, 0
      %v1462 = vsel %vm320, %v1417, 0
      %v1465 = vsel %vm320, %v1418, 0
      %v1468 = vsel %vm320, %v1419, 0
      %v1471 = vsel %vm320, %v1420, 0
      %v1474 = vsel %vm320, %v1421, 0
      %v1477 = vsel %vm320, %v1422, 0
      %v1480 = vsel %vm320, %v1423, 0
      %v1483 = vsel %vm320, %v1424, 0
      %v1486 = vsel %vm320, %v1425, 0
      %v1489 = vsel %vm320, %v1426, 0
      %v1492 = vsel %vm320, %v1427, 0
      %v1495 = vsel %vm320, %v1428, 0
      %v1498 = vsel %vm320, %v1429, 0
      %v1501 = vsel %vm320, %v1430, 0
      %v1504 = vsel %vm320, %v1431, 0
      %v1507 = vsel %vm320, %v1432, 0
      %v1510 = vsel %vm320, %v1433, 0
      %v1513 = vsel %vm320, %v1434, 0
      %v1516 = vsel %vm320, %v1435, 0
      %v1519 = vsel %vm320, %v1436, 0
      %v1522 = vsel %vm320, %v1437, 0
      %v1525 = vsel %vm320, %v1438, 0
      %v1528 = vsel %vm320, %v1439, 0
      %v1531 = vsel %vm320, %v1440, 0
      %v1534 = vsel %vm320, %v1441, 0
      %v1537 = vsel %vm320, %v1442, 0
      %v1540 = vsel %vm320, %v1443, 0
      %v1543 = vsel %vm320, %v1444, 0
      %v1546 = vsel %vm320, %v1445, 0
      %v1549 = vsel %vm320, %v1446, 0
      %v1552 = vsel %vm320, %v1447, 0
      %v1555 = vsel %vm320, %v1448, 0
      %v1558 = vsel %vm320, %v1449, 0
      %v1561 = vsel %vm429, %v1451, 0
      %1563 = vmatpush.msra.mxu0 0.0
      %1564 = vmatpush.msra.mxu0 0.0
      %1565 = vmatpush.msra.mxu0 0.0
      %1566 = vmatpush.msra.mxu0 0.0
      %1567 = vmatpush.msra.mxu0 0.0
      %1568 = vmatpush.msra.mxu0 0.0
      %1569 = vmatpush.msra.mxu0 0.0
      %1570 = vmatpush.msra.mxu0 0.0
      %1571 = vmatpush.msra.mxu0 0.0
      %1572 = vmatpush.msra.mxu0 0.0
      %1573 = vmatpush.msra.mxu0 0.0
      %1574 = vmatpush.msra.mxu0 0.0
      %1575 = vmatpush.msra.mxu0 0.0
      %1576 = vmatpush.msra.mxu0 0.0
      %1577 = vmatpush.msra.mxu0 0.0
      %1578 = vmatpush.msra.mxu0 %v1561
      %1579 = vmatmul.f32.gmra.mxu0 %v1453
      %v1580 = vpop.f32.mrf.mxu0
      %v1581 = vadd.f32 0.0, %v1580
      %1582 = vmatmul.f32.gmra.mxu0 %v1456
      %v1583 = vpop.f32.mrf.mxu0
      %v1584 = vadd.f32 0.0, %v1583
      %1585 = vmatmul.f32.gmra.mxu0 %v1459
      %v1586 = vpop.f32.mrf.mxu0
      %v1587 = vadd.f32 0.0, %v1586
      %1588 = vmatmul.f32.gmra.mxu0 %v1462
      %v1589 = vpop.f32.mrf.mxu0
      %v1590 = vadd.f32 0.0, %v1589
      %1591 = vmatmul.f32.gmra.mxu0 %v1465
      %v1592 = vpop.f32.mrf.mxu0
      %v1593 = vadd.f32 0.0, %v1592
      %1594 = vmatmul.f32.gmra.mxu0 %v1468
      %v1595 = vpop.f32.mrf.mxu0
      %v1596 = vadd.f32 0.0, %v1595
      %1597 = vmatmul.f32.gmra.mxu0 %v1471
      %v1598 = vpop.f32.mrf.mxu0
      %v1599 = vadd.f32 0.0, %v1598
      %1600 = vmatmul.f32.gmra.mxu0 %v1474
      %v1601 = vpop.f32.mrf.mxu0
      %v1602 = vadd.f32 0.0, %v1601
      %1603 = vmatmul.f32.gmra.mxu0 %v1477
      %v1604 = vpop.f32.mrf.mxu0
      %v1605 = vadd.f32 0.0, %v1604
      %1606 = vmatmul.f32.gmra.mxu0 %v1480
      %v1607 = vpop.f32.mrf.mxu0
      %v1608 = vadd.f32 0.0, %v1607
      %1609 = vmatmul.f32.gmra.mxu0 %v1483
      %v1610 = vpop.f32.mrf.mxu0
      %v1611 = vadd.f32 0.0, %v1610
      %1612 = vmatmul.f32.gmra.mxu0 %v1486
      %v1613 = vpop.f32.mrf.mxu0
      %v1614 = vadd.f32 0.0, %v1613
      %1615 = vmatmul.f32.gmra.mxu0 %v1489
      %v1616 = vpop.f32.mrf.mxu0
      %v1617 = vadd.f32 0.0, %v1616
      %1618 = vmatmul.f32.gmra.mxu0 %v1492
      %v1619 = vpop.f32.mrf.mxu0
      %v1620 = vadd.f32 0.0, %v1619
      %1621 = vmatmul.f32.gmra.mxu0 %v1495
      %v1622 = vpop.f32.mrf.mxu0
      %v1623 = vadd.f32 0.0, %v1622
      %1624 = vmatmul.f32.gmra.mxu0 %v1498
      %v1625 = vpop.f32.mrf.mxu0
      %v1626 = vadd.f32 0.0, %v1625
      %1627 = vmatmul.f32.gmra.mxu0 %v1501
      %v1628 = vpop.f32.mrf.mxu0
      %v1629 = vadd.f32 0.0, %v1628
      %1630 = vmatmul.f32.gmra.mxu0 %v1504
      %v1631 = vpop.f32.mrf.mxu0
      %v1632 = vadd.f32 0.0, %v1631
      %1633 = vmatmul.f32.gmra.mxu0 %v1507
      %v1634 = vpop.f32.mrf.mxu0
      %v1635 = vadd.f32 0.0, %v1634
      %1636 = vmatmul.f32.gmra.mxu0 %v1510
      %v1637 = vpop.f32.mrf.mxu0
      %v1638 = vadd.f32 0.0, %v1637
      %1639 = vmatmul.f32.gmra.mxu0 %v1513
      %v1640 = vpop.f32.mrf.mxu0
      %v1641 = vadd.f32 0.0, %v1640
      %1642 = vmatmul.f32.gmra.mxu0 %v1516
      %v1643 = vpop.f32.mrf.mxu0
      %v1644 = vadd.f32 0.0, %v1643
      %1645 = vmatmul.f32.gmra.mxu0 %v1519
      %v1646 = vpop.f32.mrf.mxu0
      %v1647 = vadd.f32 0.0, %v1646
      %1648 = vmatmul.f32.gmra.mxu0 %v1522
      %v1649 = vpop.f32.mrf.mxu0
      %v1650 = vadd.f32 0.0, %v1649
      %1651 = vmatmul.f32.gmra.mxu0 %v1525
      %v1652 = vpop.f32.mrf.mxu0
      %v1653 = vadd.f32 0.0, %v1652
      %1654 = vmatmul.f32.gmra.mxu0 %v1528
      %v1655 = vpop.f32.mrf.mxu0
      %v1656 = vadd.f32 0.0, %v1655
      %1657 = vmatmul.f32.gmra.mxu0 %v1531
      %v1658 = vpop.f32.mrf.mxu0
      %v1659 = vadd.f32 0.0, %v1658
      %1660 = vmatmul.f32.gmra.mxu0 %v1534
      %v1661 = vpop.f32.mrf.mxu0
      %v1662 = vadd.f32 0.0, %v1661
      %1663 = vmatmul.f32.gmra.mxu0 %v1537
      %v1664 = vpop.f32.mrf.mxu0
      %v1665 = vadd.f32 0.0, %v1664
      %1666 = vmatmul.f32.gmra.mxu0 %v1540
      %v1667 = vpop.f32.mrf.mxu0
      %v1668 = vadd.f32 0.0, %v1667
      %1669 = vmatmul.f32.gmra.mxu0 %v1543
      %v1670 = vpop.f32.mrf.mxu0
      %v1671 = vadd.f32 0.0, %v1670
      %1672 = vmatmul.f32.gmra.mxu0 %v1546
      %v1673 = vpop.f32.mrf.mxu0
      %v1674 = vadd.f32 0.0, %v1673
      %1675 = vmatmul.f32.gmra.mxu0 %v1549
      %v1676 = vpop.f32.mrf.mxu0
      %v1677 = vadd.f32 0.0, %v1676
      %1678 = vmatmul.f32.gmra.mxu0 %v1552
      %v1679 = vpop.f32.mrf.mxu0
      %v1680 = vadd.f32 0.0, %v1679
      %1681 = vmatmul.f32.gmra.mxu0 %v1555
      %v1682 = vpop.f32.mrf.mxu0
      %v1683 = vadd.f32 0.0, %v1682
      %1684 = vmatmul.f32.gmra.mxu0 %v1558
      %v1685 = vpop.f32.mrf.mxu0
      %v1686 = vadd.f32 0.0, %v1685
      %1687 = vdwg.mxu0
      %v1688 = vadd.f32 %v1378, %v1581
      %v1689 = vadd.f32 %v1379, %v1584
      %v1690 = vadd.f32 %v1380, %v1587
      %v1691 = vadd.f32 %v1381, %v1590
      %v1692 = vadd.f32 %v1382, %v1593
      %v1693 = vadd.f32 %v1383, %v1596
      %v1694 = vadd.f32 %v1384, %v1599
      %v1695 = vadd.f32 %v1385, %v1602
      %v1696 = vadd.f32 %v1386, %v1605
      %v1697 = vadd.f32 %v1387, %v1608
      %v1698 = vadd.f32 %v1388, %v1611
      %v1699 = vadd.f32 %v1389, %v1614
      %v1700 = vadd.f32 %v1390, %v1617
      %v1701 = vadd.f32 %v1391, %v1620
      %v1702 = vadd.f32 %v1392, %v1623
      %v1703 = vadd.f32 %v1393, %v1626
      %v1704 = vadd.f32 %v1394, %v1629
      %v1705 = vadd.f32 %v1395, %v1632
      %v1706 = vadd.f32 %v1396, %v1635
      %v1707 = vadd.f32 %v1397, %v1638
      %v1708 = vadd.f32 %v1398, %v1641
      %v1709 = vadd.f32 %v1399, %v1644
      %v1710 = vadd.f32 %v1400, %v1647
      %v1711 = vadd.f32 %v1401, %v1650
      %v1712 = vadd.f32 %v1402, %v1653
      %v1713 = vadd.f32 %v1403, %v1656
      %v1714 = vadd.f32 %v1404, %v1659
      %v1715 = vadd.f32 %v1405, %v1662
      %v1716 = vadd.f32 %v1406, %v1665
      %v1717 = vadd.f32 %v1407, %v1668
      %v1718 = vadd.f32 %v1408, %v1671
      %v1719 = vadd.f32 %v1409, %v1674
      %v1720 = vadd.f32 %v1410, %v1677
      %v1721 = vadd.f32 %v1411, %v1680
      %v1722 = vadd.f32 %v1412, %v1683
      %v1723 = vadd.f32 %v1413, %v1686
      %v1724 = vld [vmem:[%s234 + $0x14] sm:$0xff]
      %v1725 = vld [vmem:[%s234 + $0x1c] sm:$0xff]
      %v1726 = vld [vmem:[%s234 + $0x24] sm:$0xff]
      %v1727 = vld [vmem:[%s234 + $0x2c] sm:$0xff]
      %v1728 = vld [vmem:[%s234 + $0x34] sm:$0xff]
      %v1729 = vld [vmem:[%s234 + $0x3c] sm:$0xff]
      %v1730 = vld [vmem:[%s234 + $0x44] sm:$0xff]
      %v1731 = vld [vmem:[%s234 + $0x4c] sm:$0xff]
      %v1732 = vld [vmem:[%s234 + $0x54] sm:$0xff]
      %v1733 = vld [vmem:[%s234 + $0x5c] sm:$0xff]
      %v1734 = vld [vmem:[%s234 + $0x64] sm:$0xff]
      %v1735 = vld [vmem:[%s234 + $0x6c] sm:$0xff]
      %v1736 = vld [vmem:[%s234 + $0x74] sm:$0xff]
      %v1737 = vld [vmem:[%s234 + $0x7c] sm:$0xff]
      %v1738 = vld [vmem:[%s234 + $0x84] sm:$0xff]
      %v1739 = vld [vmem:[%s234 + $0x8c] sm:$0xff]
      %v1740 = vld [vmem:[%s234 + $0x94] sm:$0xff]
      %v1741 = vld [vmem:[%s234 + $0x9c] sm:$0xff]
      %v1742 = vld [vmem:[%s234 + $0xa4] sm:$0xff]
      %v1743 = vld [vmem:[%s234 + $0xac] sm:$0xff]
      %v1744 = vld [vmem:[%s234 + $0xb4] sm:$0xff]
      %v1745 = vld [vmem:[%s234 + $0xbc] sm:$0xff]
      %v1746 = vld [vmem:[%s234 + $0xc4] sm:$0xff]
      %v1747 = vld [vmem:[%s234 + $0xcc] sm:$0xff]
      %v1748 = vld [vmem:[%s234 + $0xd4] sm:$0xff]
      %v1749 = vld [vmem:[%s234 + $0xdc] sm:$0xff]
      %v1750 = vld [vmem:[%s234 + $0xe4] sm:$0xff]
      %v1751 = vld [vmem:[%s234 + $0xec] sm:$0xff]
      %v1752 = vld [vmem:[%s234 + $0xf4] sm:$0xff]
      %v1753 = vld [vmem:[%s234 + $0xfc] sm:$0xff]
      %v1754 = vld [vmem:[%s234 + $0x104] sm:$0xff]
      %v1755 = vld [vmem:[%s234 + $0x10c] sm:$0xff]
      %v1756 = vld [vmem:[%s234 + $0x114] sm:$0xff]
      %v1757 = vld [vmem:[%s234 + $0x11c] sm:$0xff]
      %v1758 = vld [vmem:[%s234 + $0x124] sm:$0xff]
      %v1759 = vld [vmem:[%s234 + $0x12c] sm:$0xff]
      %s1760 = scalar_lea.vmem %s1, 20
      %v1761 = vld [vmem:[%s1760] sm:$0xf]
      %v1763 = vsel %vm320, %v1724, 0
      %v1766 = vsel %vm320, %v1725, 0
      %v1769 = vsel %vm320, %v1726, 0
      %v1772 = vsel %vm320, %v1727, 0
      %v1775 = vsel %vm320, %v1728, 0
      %v1778 = vsel %vm320, %v1729, 0
      %v1781 = vsel %vm320, %v1730, 0
      %v1784 = vsel %vm320, %v1731, 0
      %v1787 = vsel %vm320, %v1732, 0
      %v1790 = vsel %vm320, %v1733, 0
      %v1793 = vsel %vm320, %v1734, 0
      %v1796 = vsel %vm320, %v1735, 0
      %v1799 = vsel %vm320, %v1736, 0
      %v1802 = vsel %vm320, %v1737, 0
      %v1805 = vsel %vm320, %v1738, 0
      %v1808 = vsel %vm320, %v1739, 0
      %v1811 = vsel %vm320, %v1740, 0
      %v1814 = vsel %vm320, %v1741, 0
      %v1817 = vsel %vm320, %v1742, 0
      %v1820 = vsel %vm320, %v1743, 0
      %v1823 = vsel %vm320, %v1744, 0
      %v1826 = vsel %vm320, %v1745, 0
      %v1829 = vsel %vm320, %v1746, 0
      %v1832 = vsel %vm320, %v1747, 0
      %v1835 = vsel %vm320, %v1748, 0
      %v1838 = vsel %vm320, %v1749, 0
      %v1841 = vsel %vm320, %v1750, 0
      %v1844 = vsel %vm320, %v1751, 0
      %v1847 = vsel %vm320, %v1752, 0
      %v1850 = vsel %vm320, %v1753, 0
      %v1853 = vsel %vm320, %v1754, 0
      %v1856 = vsel %vm320, %v1755, 0
      %v1859 = vsel %vm320, %v1756, 0
      %v1862 = vsel %vm320, %v1757, 0
      %v1865 = vsel %vm320, %v1758, 0
      %v1868 = vsel %vm320, %v1759, 0
      %v1871 = vsel %vm429, %v1761, 0
      %1873 = vmatpush.msra.mxu0 0.0
      %1874 = vmatpush.msra.mxu0 0.0
      %1875 = vmatpush.msra.mxu0 0.0
      %1876 = vmatpush.msra.mxu0 0.0
      %1877 = vmatpush.msra.mxu0 0.0
      %1878 = vmatpush.msra.mxu0 0.0
      %1879 = vmatpush.msra.mxu0 0.0
      %1880 = vmatpush.msra.mxu0 0.0
      %1881 = vmatpush.msra.mxu0 0.0
      %1882 = vmatpush.msra.mxu0 0.0
      %1883 = vmatpush.msra.mxu0 0.0
      %1884 = vmatpush.msra.mxu0 0.0
      %1885 = vmatpush.msra.mxu0 0.0
      %1886 = vmatpush.msra.mxu0 0.0
      %1887 = vmatpush.msra.mxu0 0.0
      %1888 = vmatpush.msra.mxu0 %v1871
      %1889 = vmatmul.f32.gmra.mxu0 %v1763
      %v1890 = vpop.f32.mrf.mxu0
      %v1891 = vadd.f32 0.0, %v1890
      %1892 = vmatmul.f32.gmra.mxu0 %v1766
      %v1893 = vpop.f32.mrf.mxu0
      %v1894 = vadd.f32 0.0, %v1893
      %1895 = vmatmul.f32.gmra.mxu0 %v1769
      %v1896 = vpop.f32.mrf.mxu0
      %v1897 = vadd.f32 0.0, %v1896
      %1898 = vmatmul.f32.gmra.mxu0 %v1772
      %v1899 = vpop.f32.mrf.mxu0
      %v1900 = vadd.f32 0.0, %v1899
      %1901 = vmatmul.f32.gmra.mxu0 %v1775
      %v1902 = vpop.f32.mrf.mxu0
      %v1903 = vadd.f32 0.0, %v1902
      %1904 = vmatmul.f32.gmra.mxu0 %v1778
      %v1905 = vpop.f32.mrf.mxu0
      %v1906 = vadd.f32 0.0, %v1905
      %1907 = vmatmul.f32.gmra.mxu0 %v1781
      %v1908 = vpop.f32.mrf.mxu0
      %v1909 = vadd.f32 0.0, %v1908
      %1910 = vmatmul.f32.gmra.mxu0 %v1784
      %v1911 = vpop.f32.mrf.mxu0
      %v1912 = vadd.f32 0.0, %v1911
      %1913 = vmatmul.f32.gmra.mxu0 %v1787
      %v1914 = vpop.f32.mrf.mxu0
      %v1915 = vadd.f32 0.0, %v1914
      %1916 = vmatmul.f32.gmra.mxu0 %v1790
      %v1917 = vpop.f32.mrf.mxu0
      %v1918 = vadd.f32 0.0, %v1917
      %1919 = vmatmul.f32.gmra.mxu0 %v1793
      %v1920 = vpop.f32.mrf.mxu0
      %v1921 = vadd.f32 0.0, %v1920
      %1922 = vmatmul.f32.gmra.mxu0 %v1796
      %v1923 = vpop.f32.mrf.mxu0
      %v1924 = vadd.f32 0.0, %v1923
      %1925 = vmatmul.f32.gmra.mxu0 %v1799
      %v1926 = vpop.f32.mrf.mxu0
      %v1927 = vadd.f32 0.0, %v1926
      %1928 = vmatmul.f32.gmra.mxu0 %v1802
      %v1929 = vpop.f32.mrf.mxu0
      %v1930 = vadd.f32 0.0, %v1929
      %1931 = vmatmul.f32.gmra.mxu0 %v1805
      %v1932 = vpop.f32.mrf.mxu0
      %v1933 = vadd.f32 0.0, %v1932
      %1934 = vmatmul.f32.gmra.mxu0 %v1808
      %v1935 = vpop.f32.mrf.mxu0
      %v1936 = vadd.f32 0.0, %v1935
      %1937 = vmatmul.f32.gmra.mxu0 %v1811
      %v1938 = vpop.f32.mrf.mxu0
      %v1939 = vadd.f32 0.0, %v1938
      %1940 = vmatmul.f32.gmra.mxu0 %v1814
      %v1941 = vpop.f32.mrf.mxu0
      %v1942 = vadd.f32 0.0, %v1941
      %1943 = vmatmul.f32.gmra.mxu0 %v1817
      %v1944 = vpop.f32.mrf.mxu0
      %v1945 = vadd.f32 0.0, %v1944
      %1946 = vmatmul.f32.gmra.mxu0 %v1820
      %v1947 = vpop.f32.mrf.mxu0
      %v1948 = vadd.f32 0.0, %v1947
      %1949 = vmatmul.f32.gmra.mxu0 %v1823
      %v1950 = vpop.f32.mrf.mxu0
      %v1951 = vadd.f32 0.0, %v1950
      %1952 = vmatmul.f32.gmra.mxu0 %v1826
      %v1953 = vpop.f32.mrf.mxu0
      %v1954 = vadd.f32 0.0, %v1953
      %1955 = vmatmul.f32.gmra.mxu0 %v1829
      %v1956 = vpop.f32.mrf.mxu0
      %v1957 = vadd.f32 0.0, %v1956
      %1958 = vmatmul.f32.gmra.mxu0 %v1832
      %v1959 = vpop.f32.mrf.mxu0
      %v1960 = vadd.f32 0.0, %v1959
      %1961 = vmatmul.f32.gmra.mxu0 %v1835
      %v1962 = vpop.f32.mrf.mxu0
      %v1963 = vadd.f32 0.0, %v1962
      %1964 = vmatmul.f32.gmra.mxu0 %v1838
      %v1965 = vpop.f32.mrf.mxu0
      %v1966 = vadd.f32 0.0, %v1965
      %1967 = vmatmul.f32.gmra.mxu0 %v1841
      %v1968 = vpop.f32.mrf.mxu0
      %v1969 = vadd.f32 0.0, %v1968
      %1970 = vmatmul.f32.gmra.mxu0 %v1844
      %v1971 = vpop.f32.mrf.mxu0
      %v1972 = vadd.f32 0.0, %v1971
      %1973 = vmatmul.f32.gmra.mxu0 %v1847
      %v1974 = vpop.f32.mrf.mxu0
      %v1975 = vadd.f32 0.0, %v1974
      %1976 = vmatmul.f32.gmra.mxu0 %v1850
      %v1977 = vpop.f32.mrf.mxu0
      %v1978 = vadd.f32 0.0, %v1977
      %1979 = vmatmul.f32.gmra.mxu0 %v1853
      %v1980 = vpop.f32.mrf.mxu0
      %v1981 = vadd.f32 0.0, %v1980
      %1982 = vmatmul.f32.gmra.mxu0 %v1856
      %v1983 = vpop.f32.mrf.mxu0
      %v1984 = vadd.f32 0.0, %v1983
      %1985 = vmatmul.f32.gmra.mxu0 %v1859
      %v1986 = vpop.f32.mrf.mxu0
      %v1987 = vadd.f32 0.0, %v1986
      %1988 = vmatmul.f32.gmra.mxu0 %v1862
      %v1989 = vpop.f32.mrf.mxu0
      %v1990 = vadd.f32 0.0, %v1989
      %1991 = vmatmul.f32.gmra.mxu0 %v1865
      %v1992 = vpop.f32.mrf.mxu0
      %v1993 = vadd.f32 0.0, %v1992
      %1994 = vmatmul.f32.gmra.mxu0 %v1868
      %v1995 = vpop.f32.mrf.mxu0
      %v1996 = vadd.f32 0.0, %v1995
      %1997 = vdwg.mxu0
      %v1998 = vadd.f32 %v1688, %v1891
      %v1999 = vadd.f32 %v1689, %v1894
      %v2000 = vadd.f32 %v1690, %v1897
      %v2001 = vadd.f32 %v1691, %v1900
      %v2002 = vadd.f32 %v1692, %v1903
      %v2003 = vadd.f32 %v1693, %v1906
      %v2004 = vadd.f32 %v1694, %v1909
      %v2005 = vadd.f32 %v1695, %v1912
      %v2006 = vadd.f32 %v1696, %v1915
      %v2007 = vadd.f32 %v1697, %v1918
      %v2008 = vadd.f32 %v1698, %v1921
      %v2009 = vadd.f32 %v1699, %v1924
      %v2010 = vadd.f32 %v1700, %v1927
      %v2011 = vadd.f32 %v1701, %v1930
      %v2012 = vadd.f32 %v1702, %v1933
      %v2013 = vadd.f32 %v1703, %v1936
      %v2014 = vadd.f32 %v1704, %v1939
      %v2015 = vadd.f32 %v1705, %v1942
      %v2016 = vadd.f32 %v1706, %v1945
      %v2017 = vadd.f32 %v1707, %v1948
      %v2018 = vadd.f32 %v1708, %v1951
      %v2019 = vadd.f32 %v1709, %v1954
      %v2020 = vadd.f32 %v1710, %v1957
      %v2021 = vadd.f32 %v1711, %v1960
      %v2022 = vadd.f32 %v1712, %v1963
      %v2023 = vadd.f32 %v1713, %v1966
      %v2024 = vadd.f32 %v1714, %v1969
      %v2025 = vadd.f32 %v1715, %v1972
      %v2026 = vadd.f32 %v1716, %v1975
      %v2027 = vadd.f32 %v1717, %v1978
      %v2028 = vadd.f32 %v1718, %v1981
      %v2029 = vadd.f32 %v1719, %v1984
      %v2030 = vadd.f32 %v1720, %v1987
      %v2031 = vadd.f32 %v1721, %v1990
      %v2032 = vadd.f32 %v1722, %v1993
      %v2033 = vadd.f32 %v1723, %v1996
      %v2034 = vld [vmem:[%s234 + $0x24] sm:$0xff]
      %v2035 = vld [vmem:[%s234 + $0x2c] sm:$0xff]
      %v2036 = vld [vmem:[%s234 + $0x34] sm:$0xff]
      %v2037 = vld [vmem:[%s234 + $0x3c] sm:$0xff]
      %v2038 = vld [vmem:[%s234 + $0x44] sm:$0xff]
      %v2039 = vld [vmem:[%s234 + $0x4c] sm:$0xff]
      %v2040 = vld [vmem:[%s234 + $0x54] sm:$0xff]
      %v2041 = vld [vmem:[%s234 + $0x5c] sm:$0xff]
      %v2042 = vld [vmem:[%s234 + $0x64] sm:$0xff]
      %v2043 = vld [vmem:[%s234 + $0x6c] sm:$0xff]
      %v2044 = vld [vmem:[%s234 + $0x74] sm:$0xff]
      %v2045 = vld [vmem:[%s234 + $0x7c] sm:$0xff]
      %v2046 = vld [vmem:[%s234 + $0x84] sm:$0xff]
      %v2047 = vld [vmem:[%s234 + $0x8c] sm:$0xff]
      %v2048 = vld [vmem:[%s234 + $0x94] sm:$0xff]
      %v2049 = vld [vmem:[%s234 + $0x9c] sm:$0xff]
      %v2050 = vld [vmem:[%s234 + $0xa4] sm:$0xff]
      %v2051 = vld [vmem:[%s234 + $0xac] sm:$0xff]
      %v2052 = vld [vmem:[%s234 + $0xb4] sm:$0xff]
      %v2053 = vld [vmem:[%s234 + $0xbc] sm:$0xff]
      %v2054 = vld [vmem:[%s234 + $0xc4] sm:$0xff]
      %v2055 = vld [vmem:[%s234 + $0xcc] sm:$0xff]
      %v2056 = vld [vmem:[%s234 + $0xd4] sm:$0xff]
      %v2057 = vld [vmem:[%s234 + $0xdc] sm:$0xff]
      %v2058 = vld [vmem:[%s234 + $0xe4] sm:$0xff]
      %v2059 = vld [vmem:[%s234 + $0xec] sm:$0xff]
      %v2060 = vld [vmem:[%s234 + $0xf4] sm:$0xff]
      %v2061 = vld [vmem:[%s234 + $0xfc] sm:$0xff]
      %v2062 = vld [vmem:[%s234 + $0x104] sm:$0xff]
      %v2063 = vld [vmem:[%s234 + $0x10c] sm:$0xff]
      %v2064 = vld [vmem:[%s234 + $0x114] sm:$0xff]
      %v2065 = vld [vmem:[%s234 + $0x11c] sm:$0xff]
      %v2066 = vld [vmem:[%s234 + $0x124] sm:$0xff]
      %v2067 = vld [vmem:[%s234 + $0x12c] sm:$0xff]
      %v2068 = vld [vmem:[%s234 + $0x134] sm:$0xff]
      %v2069 = vld [vmem:[%s234 + $0x13c] sm:$0xff]
      %s2070 = scalar_lea.vmem %s1, 24
      %v2071 = vld [vmem:[%s2070] sm:$0xf]
      %v2073 = vsel %vm320, %v2034, 0
      %v2076 = vsel %vm320, %v2035, 0
      %v2079 = vsel %vm320, %v2036, 0
      %v2082 = vsel %vm320, %v2037, 0
      %v2085 = vsel %vm320, %v2038, 0
      %v2088 = vsel %vm320, %v2039, 0
      %v2091 = vsel %vm320, %v2040, 0
      %v2094 = vsel %vm320, %v2041, 0
      %v2097 = vsel %vm320, %v2042, 0
      %v2100 = vsel %vm320, %v2043, 0
      %v2103 = vsel %vm320, %v2044, 0
      %v2106 = vsel %vm320, %v2045, 0
      %v2109 = vsel %vm320, %v2046, 0
      %v2112 = vsel %vm320, %v2047, 0
      %v2115 = vsel %vm320, %v2048, 0
      %v2118 = vsel %vm320, %v2049, 0
      %v2121 = vsel %vm320, %v2050, 0
      %v2124 = vsel %vm320, %v2051, 0
      %v2127 = vsel %vm320, %v2052, 0
      %v2130 = vsel %vm320, %v2053, 0
      %v2133 = vsel %vm320, %v2054, 0
      %v2136 = vsel %vm320, %v2055, 0
      %v2139 = vsel %vm320, %v2056, 0
      %v2142 = vsel %vm320, %v2057, 0
      %v2145 = vsel %vm320, %v2058, 0
      %v2148 = vsel %vm320, %v2059, 0
      %v2151 = vsel %vm320, %v2060, 0
      %v2154 = vsel %vm320, %v2061, 0
      %v2157 = vsel %vm320, %v2062, 0
      %v2160 = vsel %vm320, %v2063, 0
      %v2163 = vsel %vm320, %v2064, 0
      %v2166 = vsel %vm320, %v2065, 0
      %v2169 = vsel %vm320, %v2066, 0
      %v2172 = vsel %vm320, %v2067, 0
      %v2175 = vsel %vm320, %v2068, 0
      %v2178 = vsel %vm320, %v2069, 0
      %v2181 = vsel %vm429, %v2071, 0
      %2183 = vmatpush.msra.mxu0 0.0
      %2184 = vmatpush.msra.mxu0 0.0
      %2185 = vmatpush.msra.mxu0 0.0
      %2186 = vmatpush.msra.mxu0 0.0
      %2187 = vmatpush.msra.mxu0 0.0
      %2188 = vmatpush.msra.mxu0 0.0
      %2189 = vmatpush.msra.mxu0 0.0
      %2190 = vmatpush.msra.mxu0 0.0
      %2191 = vmatpush.msra.mxu0 0.0
      %2192 = vmatpush.msra.mxu0 0.0
      %2193 = vmatpush.msra.mxu0 0.0
      %2194 = vmatpush.msra.mxu0 0.0
      %2195 = vmatpush.msra.mxu0 0.0
      %2196 = vmatpush.msra.mxu0 0.0
      %2197 = vmatpush.msra.mxu0 0.0
      %2198 = vmatpush.msra.mxu0 %v2181
      %2199 = vmatmul.f32.gmra.mxu0 %v2073
      %v2200 = vpop.f32.mrf.mxu0
      %v2201 = vadd.f32 0.0, %v2200
      %2202 = vmatmul.f32.gmra.mxu0 %v2076
      %v2203 = vpop.f32.mrf.mxu0
      %v2204 = vadd.f32 0.0, %v2203
      %2205 = vmatmul.f32.gmra.mxu0 %v2079
      %v2206 = vpop.f32.mrf.mxu0
      %v2207 = vadd.f32 0.0, %v2206
      %2208 = vmatmul.f32.gmra.mxu0 %v2082
      %v2209 = vpop.f32.mrf.mxu0
      %v2210 = vadd.f32 0.0, %v2209
      %2211 = vmatmul.f32.gmra.mxu0 %v2085
      %v2212 = vpop.f32.mrf.mxu0
      %v2213 = vadd.f32 0.0, %v2212
      %2214 = vmatmul.f32.gmra.mxu0 %v2088
      %v2215 = vpop.f32.mrf.mxu0
      %v2216 = vadd.f32 0.0, %v2215
      %2217 = vmatmul.f32.gmra.mxu0 %v2091
      %v2218 = vpop.f32.mrf.mxu0
      %v2219 = vadd.f32 0.0, %v2218
      %2220 = vmatmul.f32.gmra.mxu0 %v2094
      %v2221 = vpop.f32.mrf.mxu0
      %v2222 = vadd.f32 0.0, %v2221
      %2223 = vmatmul.f32.gmra.mxu0 %v2097
      %v2224 = vpop.f32.mrf.mxu0
      %v2225 = vadd.f32 0.0, %v2224
      %2226 = vmatmul.f32.gmra.mxu0 %v2100
      %v2227 = vpop.f32.mrf.mxu0
      %v2228 = vadd.f32 0.0, %v2227
      %2229 = vmatmul.f32.gmra.mxu0 %v2103
      %v2230 = vpop.f32.mrf.mxu0
      %v2231 = vadd.f32 0.0, %v2230
      %2232 = vmatmul.f32.gmra.mxu0 %v2106
      %v2233 = vpop.f32.mrf.mxu0
      %v2234 = vadd.f32 0.0, %v2233
      %2235 = vmatmul.f32.gmra.mxu0 %v2109
      %v2236 = vpop.f32.mrf.mxu0
      %v2237 = vadd.f32 0.0, %v2236
      %2238 = vmatmul.f32.gmra.mxu0 %v2112
      %v2239 = vpop.f32.mrf.mxu0
      %v2240 = vadd.f32 0.0, %v2239
      %2241 = vmatmul.f32.gmra.mxu0 %v2115
      %v2242 = vpop.f32.mrf.mxu0
      %v2243 = vadd.f32 0.0, %v2242
      %2244 = vmatmul.f32.gmra.mxu0 %v2118
      %v2245 = vpop.f32.mrf.mxu0
      %v2246 = vadd.f32 0.0, %v2245
      %2247 = vmatmul.f32.gmra.mxu0 %v2121
      %v2248 = vpop.f32.mrf.mxu0
      %v2249 = vadd.f32 0.0, %v2248
      %2250 = vmatmul.f32.gmra.mxu0 %v2124
      %v2251 = vpop.f32.mrf.mxu0
      %v2252 = vadd.f32 0.0, %v2251
      %2253 = vmatmul.f32.gmra.mxu0 %v2127
      %v2254 = vpop.f32.mrf.mxu0
      %v2255 = vadd.f32 0.0, %v2254
      %2256 = vmatmul.f32.gmra.mxu0 %v2130
      %v2257 = vpop.f32.mrf.mxu0
      %v2258 = vadd.f32 0.0, %v2257
      %2259 = vmatmul.f32.gmra.mxu0 %v2133
      %v2260 = vpop.f32.mrf.mxu0
      %v2261 = vadd.f32 0.0, %v2260
      %2262 = vmatmul.f32.gmra.mxu0 %v2136
      %v2263 = vpop.f32.mrf.mxu0
      %v2264 = vadd.f32 0.0, %v2263
      %2265 = vmatmul.f32.gmra.mxu0 %v2139
      %v2266 = vpop.f32.mrf.mxu0
      %v2267 = vadd.f32 0.0, %v2266
      %2268 = vmatmul.f32.gmra.mxu0 %v2142
      %v2269 = vpop.f32.mrf.mxu0
      %v2270 = vadd.f32 0.0, %v2269
      %2271 = vmatmul.f32.gmra.mxu0 %v2145
      %v2272 = vpop.f32.mrf.mxu0
      %v2273 = vadd.f32 0.0, %v2272
      %2274 = vmatmul.f32.gmra.mxu0 %v2148
      %v2275 = vpop.f32.mrf.mxu0
      %v2276 = vadd.f32 0.0, %v2275
      %2277 = vmatmul.f32.gmra.mxu0 %v2151
      %v2278 = vpop.f32.mrf.mxu0
      %v2279 = vadd.f32 0.0, %v2278
      %2280 = vmatmul.f32.gmra.mxu0 %v2154
      %v2281 = vpop.f32.mrf.mxu0
      %v2282 = vadd.f32 0.0, %v2281
      %2283 = vmatmul.f32.gmra.mxu0 %v2157
      %v2284 = vpop.f32.mrf.mxu0
      %v2285 = vadd.f32 0.0, %v2284
      %2286 = vmatmul.f32.gmra.mxu0 %v2160
      %v2287 = vpop.f32.mrf.mxu0
      %v2288 = vadd.f32 0.0, %v2287
      %2289 = vmatmul.f32.gmra.mxu0 %v2163
      %v2290 = vpop.f32.mrf.mxu0
      %v2291 = vadd.f32 0.0, %v2290
      %2292 = vmatmul.f32.gmra.mxu0 %v2166
      %v2293 = vpop.f32.mrf.mxu0
      %v2294 = vadd.f32 0.0, %v2293
      %2295 = vmatmul.f32.gmra.mxu0 %v2169
      %v2296 = vpop.f32.mrf.mxu0
      %v2297 = vadd.f32 0.0, %v2296
      %2298 = vmatmul.f32.gmra.mxu0 %v2172
      %v2299 = vpop.f32.mrf.mxu0
      %v2300 = vadd.f32 0.0, %v2299
      %2301 = vmatmul.f32.gmra.mxu0 %v2175
      %v2302 = vpop.f32.mrf.mxu0
      %v2303 = vadd.f32 0.0, %v2302
      %2304 = vmatmul.f32.gmra.mxu0 %v2178
      %v2305 = vpop.f32.mrf.mxu0
      %v2306 = vadd.f32 0.0, %v2305
      %2307 = vdwg.mxu0
      %v2308 = vadd.f32 %v1998, %v2201
      %v2309 = vadd.f32 %v1999, %v2204
      %v2310 = vadd.f32 %v2000, %v2207
      %v2311 = vadd.f32 %v2001, %v2210
      %v2312 = vadd.f32 %v2002, %v2213
      %v2313 = vadd.f32 %v2003, %v2216
      %v2314 = vadd.f32 %v2004, %v2219
      %v2315 = vadd.f32 %v2005, %v2222
      %v2316 = vadd.f32 %v2006, %v2225
      %v2317 = vadd.f32 %v2007, %v2228
      %v2318 = vadd.f32 %v2008, %v2231
      %v2319 = vadd.f32 %v2009, %v2234
      %v2320 = vadd.f32 %v2010, %v2237
      %v2321 = vadd.f32 %v2011, %v2240
      %v2322 = vadd.f32 %v2012, %v2243
      %v2323 = vadd.f32 %v2013, %v2246
      %v2324 = vadd.f32 %v2014, %v2249
      %v2325 = vadd.f32 %v2015, %v2252
      %v2326 = vadd.f32 %v2016, %v2255
      %v2327 = vadd.f32 %v2017, %v2258
      %v2328 = vadd.f32 %v2018, %v2261
      %v2329 = vadd.f32 %v2019, %v2264
      %v2330 = vadd.f32 %v2020, %v2267
      %v2331 = vadd.f32 %v2021, %v2270
      %v2332 = vadd.f32 %v2022, %v2273
      %v2333 = vadd.f32 %v2023, %v2276
      %v2334 = vadd.f32 %v2024, %v2279
      %v2335 = vadd.f32 %v2025, %v2282
      %v2336 = vadd.f32 %v2026, %v2285
      %v2337 = vadd.f32 %v2027, %v2288
      %v2338 = vadd.f32 %v2028, %v2291
      %v2339 = vadd.f32 %v2029, %v2294
      %v2340 = vadd.f32 %v2030, %v2297
      %v2341 = vadd.f32 %v2031, %v2300
      %v2342 = vadd.f32 %v2032, %v2303
      %v2343 = vadd.f32 %v2033, %v2306
      %v2344 = vld [vmem:[%s234 + $0x25] sm:$0xff]
      %v2345 = vld [vmem:[%s234 + $0x2d] sm:$0xff]
      %v2346 = vld [vmem:[%s234 + $0x35] sm:$0xff]
      %v2347 = vld [vmem:[%s234 + $0x3d] sm:$0xff]
      %v2348 = vld [vmem:[%s234 + $0x45] sm:$0xff]
      %v2349 = vld [vmem:[%s234 + $0x4d] sm:$0xff]
      %v2350 = vld [vmem:[%s234 + $0x55] sm:$0xff]
      %v2351 = vld [vmem:[%s234 + $0x5d] sm:$0xff]
      %v2352 = vld [vmem:[%s234 + $0x65] sm:$0xff]
      %v2353 = vld [vmem:[%s234 + $0x6d] sm:$0xff]
      %v2354 = vld [vmem:[%s234 + $0x75] sm:$0xff]
      %v2355 = vld [vmem:[%s234 + $0x7d] sm:$0xff]
      %v2356 = vld [vmem:[%s234 + $0x85] sm:$0xff]
      %v2357 = vld [vmem:[%s234 + $0x8d] sm:$0xff]
      %v2358 = vld [vmem:[%s234 + $0x95] sm:$0xff]
      %v2359 = vld [vmem:[%s234 + $0x9d] sm:$0xff]
      %v2360 = vld [vmem:[%s234 + $0xa5] sm:$0xff]
      %v2361 = vld [vmem:[%s234 + $0xad] sm:$0xff]
      %v2362 = vld [vmem:[%s234 + $0xb5] sm:$0xff]
      %v2363 = vld [vmem:[%s234 + $0xbd] sm:$0xff]
      %v2364 = vld [vmem:[%s234 + $0xc5] sm:$0xff]
      %v2365 = vld [vmem:[%s234 + $0xcd] sm:$0xff]
      %v2366 = vld [vmem:[%s234 + $0xd5] sm:$0xff]
      %v2367 = vld [vmem:[%s234 + $0xdd] sm:$0xff]
      %v2368 = vld [vmem:[%s234 + $0xe5] sm:$0xff]
      %v2369 = vld [vmem:[%s234 + $0xed] sm:$0xff]
      %v2370 = vld [vmem:[%s234 + $0xf5] sm:$0xff]
      %v2371 = vld [vmem:[%s234 + $0xfd] sm:$0xff]
      %v2372 = vld [vmem:[%s234 + $0x105] sm:$0xff]
      %v2373 = vld [vmem:[%s234 + $0x10d] sm:$0xff]
      %v2374 = vld [vmem:[%s234 + $0x115] sm:$0xff]
      %v2375 = vld [vmem:[%s234 + $0x11d] sm:$0xff]
      %v2376 = vld [vmem:[%s234 + $0x125] sm:$0xff]
      %v2377 = vld [vmem:[%s234 + $0x12d] sm:$0xff]
      %v2378 = vld [vmem:[%s234 + $0x135] sm:$0xff]
      %v2379 = vld [vmem:[%s234 + $0x13d] sm:$0xff]
      %s2380 = scalar_lea.vmem %s1, 28
      %v2381 = vld [vmem:[%s2380] sm:$0xf]
      %v2383 = vsel %vm320, %v2344, 0
      %v2386 = vsel %vm320, %v2345, 0
      %v2389 = vsel %vm320, %v2346, 0
      %v2392 = vsel %vm320, %v2347, 0
      %v2395 = vsel %vm320, %v2348, 0
      %v2398 = vsel %vm320, %v2349, 0
      %v2401 = vsel %vm320, %v2350, 0
      %v2404 = vsel %vm320, %v2351, 0
      %v2407 = vsel %vm320, %v2352, 0
      %v2410 = vsel %vm320, %v2353, 0
      %v2413 = vsel %vm320, %v2354, 0
      %v2416 = vsel %vm320, %v2355, 0
      %v2419 = vsel %vm320, %v2356, 0
      %v2422 = vsel %vm320, %v2357, 0
      %v2425 = vsel %vm320, %v2358, 0
      %v2428 = vsel %vm320, %v2359, 0
      %v2431 = vsel %vm320, %v2360, 0
      %v2434 = vsel %vm320, %v2361, 0
      %v2437 = vsel %vm320, %v2362, 0
      %v2440 = vsel %vm320, %v2363, 0
      %v2443 = vsel %vm320, %v2364, 0
      %v2446 = vsel %vm320, %v2365, 0
      %v2449 = vsel %vm320, %v2366, 0
      %v2452 = vsel %vm320, %v2367, 0
      %v2455 = vsel %vm320, %v2368, 0
      %v2458 = vsel %vm320, %v2369, 0
      %v2461 = vsel %vm320, %v2370, 0
      %v2464 = vsel %vm320, %v2371, 0
      %v2467 = vsel %vm320, %v2372, 0
      %v2470 = vsel %vm320, %v2373, 0
      %v2473 = vsel %vm320, %v2374, 0
      %v2476 = vsel %vm320, %v2375, 0
      %v2479 = vsel %vm320, %v2376, 0
      %v2482 = vsel %vm320, %v2377, 0
      %v2485 = vsel %vm320, %v2378, 0
      %v2488 = vsel %vm320, %v2379, 0
      %v2491 = vsel %vm429, %v2381, 0
      %2493 = vmatpush.msra.mxu0 0.0
      %2494 = vmatpush.msra.mxu0 0.0
      %2495 = vmatpush.msra.mxu0 0.0
      %2496 = vmatpush.msra.mxu0 0.0
      %2497 = vmatpush.msra.mxu0 0.0
      %2498 = vmatpush.msra.mxu0 0.0
      %2499 = vmatpush.msra.mxu0 0.0
      %2500 = vmatpush.msra.mxu0 0.0
      %2501 = vmatpush.msra.mxu0 0.0
      %2502 = vmatpush.msra.mxu0 0.0
      %2503 = vmatpush.msra.mxu0 0.0
      %2504 = vmatpush.msra.mxu0 0.0
      %2505 = vmatpush.msra.mxu0 0.0
      %2506 = vmatpush.msra.mxu0 0.0
      %2507 = vmatpush.msra.mxu0 0.0
      %2508 = vmatpush.msra.mxu0 %v2491
      %2509 = vmatmul.f32.gmra.mxu0 %v2383
      %v2510 = vpop.f32.mrf.mxu0
      %v2511 = vadd.f32 0.0, %v2510
      %2512 = vmatmul.f32.gmra.mxu0 %v2386
      %v2513 = vpop.f32.mrf.mxu0
      %v2514 = vadd.f32 0.0, %v2513
      %2515 = vmatmul.f32.gmra.mxu0 %v2389
      %v2516 = vpop.f32.mrf.mxu0
      %v2517 = vadd.f32 0.0, %v2516
      %2518 = vmatmul.f32.gmra.mxu0 %v2392
      %v2519 = vpop.f32.mrf.mxu0
      %v2520 = vadd.f32 0.0, %v2519
      %2521 = vmatmul.f32.gmra.mxu0 %v2395
      %v2522 = vpop.f32.mrf.mxu0
      %v2523 = vadd.f32 0.0, %v2522
      %2524 = vmatmul.f32.gmra.mxu0 %v2398
      %v2525 = vpop.f32.mrf.mxu0
      %v2526 = vadd.f32 0.0, %v2525
      %2527 = vmatmul.f32.gmra.mxu0 %v2401
      %v2528 = vpop.f32.mrf.mxu0
      %v2529 = vadd.f32 0.0, %v2528
      %2530 = vmatmul.f32.gmra.mxu0 %v2404
      %v2531 = vpop.f32.mrf.mxu0
      %v2532 = vadd.f32 0.0, %v2531
      %2533 = vmatmul.f32.gmra.mxu0 %v2407
      %v2534 = vpop.f32.mrf.mxu0
      %v2535 = vadd.f32 0.0, %v2534
      %2536 = vmatmul.f32.gmra.mxu0 %v2410
      %v2537 = vpop.f32.mrf.mxu0
      %v2538 = vadd.f32 0.0, %v2537
      %2539 = vmatmul.f32.gmra.mxu0 %v2413
      %v2540 = vpop.f32.mrf.mxu0
      %v2541 = vadd.f32 0.0, %v2540
      %2542 = vmatmul.f32.gmra.mxu0 %v2416
      %v2543 = vpop.f32.mrf.mxu0
      %v2544 = vadd.f32 0.0, %v2543
      %2545 = vmatmul.f32.gmra.mxu0 %v2419
      %v2546 = vpop.f32.mrf.mxu0
      %v2547 = vadd.f32 0.0, %v2546
      %2548 = vmatmul.f32.gmra.mxu0 %v2422
      %v2549 = vpop.f32.mrf.mxu0
      %v2550 = vadd.f32 0.0, %v2549
      %2551 = vmatmul.f32.gmra.mxu0 %v2425
      %v2552 = vpop.f32.mrf.mxu0
      %v2553 = vadd.f32 0.0, %v2552
      %2554 = vmatmul.f32.gmra.mxu0 %v2428
      %v2555 = vpop.f32.mrf.mxu0
      %v2556 = vadd.f32 0.0, %v2555
      %2557 = vmatmul.f32.gmra.mxu0 %v2431
      %v2558 = vpop.f32.mrf.mxu0
      %v2559 = vadd.f32 0.0, %v2558
      %2560 = vmatmul.f32.gmra.mxu0 %v2434
      %v2561 = vpop.f32.mrf.mxu0
      %v2562 = vadd.f32 0.0, %v2561
      %2563 = vmatmul.f32.gmra.mxu0 %v2437
      %v2564 = vpop.f32.mrf.mxu0
      %v2565 = vadd.f32 0.0, %v2564
      %2566 = vmatmul.f32.gmra.mxu0 %v2440
      %v2567 = vpop.f32.mrf.mxu0
      %v2568 = vadd.f32 0.0, %v2567
      %2569 = vmatmul.f32.gmra.mxu0 %v2443
      %v2570 = vpop.f32.mrf.mxu0
      %v2571 = vadd.f32 0.0, %v2570
      %2572 = vmatmul.f32.gmra.mxu0 %v2446
      %v2573 = vpop.f32.mrf.mxu0
      %v2574 = vadd.f32 0.0, %v2573
      %2575 = vmatmul.f32.gmra.mxu0 %v2449
      %v2576 = vpop.f32.mrf.mxu0
      %v2577 = vadd.f32 0.0, %v2576
      %2578 = vmatmul.f32.gmra.mxu0 %v2452
      %v2579 = vpop.f32.mrf.mxu0
      %v2580 = vadd.f32 0.0, %v2579
      %2581 = vmatmul.f32.gmra.mxu0 %v2455
      %v2582 = vpop.f32.mrf.mxu0
      %v2583 = vadd.f32 0.0, %v2582
      %2584 = vmatmul.f32.gmra.mxu0 %v2458
      %v2585 = vpop.f32.mrf.mxu0
      %v2586 = vadd.f32 0.0, %v2585
      %2587 = vmatmul.f32.gmra.mxu0 %v2461
      %v2588 = vpop.f32.mrf.mxu0
      %v2589 = vadd.f32 0.0, %v2588
      %2590 = vmatmul.f32.gmra.mxu0 %v2464
      %v2591 = vpop.f32.mrf.mxu0
      %v2592 = vadd.f32 0.0, %v2591
      %2593 = vmatmul.f32.gmra.mxu0 %v2467
      %v2594 = vpop.f32.mrf.mxu0
      %v2595 = vadd.f32 0.0, %v2594
      %2596 = vmatmul.f32.gmra.mxu0 %v2470
      %v2597 = vpop.f32.mrf.mxu0
      %v2598 = vadd.f32 0.0, %v2597
      %2599 = vmatmul.f32.gmra.mxu0 %v2473
      %v2600 = vpop.f32.mrf.mxu0
      %v2601 = vadd.f32 0.0, %v2600
      %2602 = vmatmul.f32.gmra.mxu0 %v2476
      %v2603 = vpop.f32.mrf.mxu0
      %v2604 = vadd.f32 0.0, %v2603
      %2605 = vmatmul.f32.gmra.mxu0 %v2479
      %v2606 = vpop.f32.mrf.mxu0
      %v2607 = vadd.f32 0.0, %v2606
      %2608 = vmatmul.f32.gmra.mxu0 %v2482
      %v2609 = vpop.f32.mrf.mxu0
      %v2610 = vadd.f32 0.0, %v2609
      %2611 = vmatmul.f32.gmra.mxu0 %v2485
      %v2612 = vpop.f32.mrf.mxu0
      %v2613 = vadd.f32 0.0, %v2612
      %2614 = vmatmul.f32.gmra.mxu0 %v2488
      %v2615 = vpop.f32.mrf.mxu0
      %v2616 = vadd.f32 0.0, %v2615
      %2617 = vdwg.mxu0
      %v2618 = vadd.f32 %v2308, %v2511
      %v2619 = vadd.f32 %v2309, %v2514
      %v2620 = vadd.f32 %v2310, %v2517
      %v2621 = vadd.f32 %v2311, %v2520
      %v2622 = vadd.f32 %v2312, %v2523
      %v2623 = vadd.f32 %v2313, %v2526
      %v2624 = vadd.f32 %v2314, %v2529
      %v2625 = vadd.f32 %v2315, %v2532
      %v2626 = vadd.f32 %v2316, %v2535
      %v2627 = vadd.f32 %v2317, %v2538
      %v2628 = vadd.f32 %v2318, %v2541
      %v2629 = vadd.f32 %v2319, %v2544
      %v2630 = vadd.f32 %v2320, %v2547
      %v2631 = vadd.f32 %v2321, %v2550
      %v2632 = vadd.f32 %v2322, %v2553
      %v2633 = vadd.f32 %v2323, %v2556
      %v2634 = vadd.f32 %v2324, %v2559
      %v2635 = vadd.f32 %v2325, %v2562
      %v2636 = vadd.f32 %v2326, %v2565
      %v2637 = vadd.f32 %v2327, %v2568
      %v2638 = vadd.f32 %v2328, %v2571
      %v2639 = vadd.f32 %v2329, %v2574
      %v2640 = vadd.f32 %v2330, %v2577
      %v2641 = vadd.f32 %v2331, %v2580
      %v2642 = vadd.f32 %v2332, %v2583
      %v2643 = vadd.f32 %v2333, %v2586
      %v2644 = vadd.f32 %v2334, %v2589
      %v2645 = vadd.f32 %v2335, %v2592
      %v2646 = vadd.f32 %v2336, %v2595
      %v2647 = vadd.f32 %v2337, %v2598
      %v2648 = vadd.f32 %v2338, %v2601
      %v2649 = vadd.f32 %v2339, %v2604
      %v2650 = vadd.f32 %v2340, %v2607
      %v2651 = vadd.f32 %v2341, %v2610
      %v2652 = vadd.f32 %v2342, %v2613
      %v2653 = vadd.f32 %v2343, %v2616
      %v2654 = vld [vmem:[%s234 + $0x26] sm:$0xff]
      %v2655 = vld [vmem:[%s234 + $0x2e] sm:$0xff]
      %v2656 = vld [vmem:[%s234 + $0x36] sm:$0xff]
      %v2657 = vld [vmem:[%s234 + $0x3e] sm:$0xff]
      %v2658 = vld [vmem:[%s234 + $0x46] sm:$0xff]
      %v2659 = vld [vmem:[%s234 + $0x4e] sm:$0xff]
      %v2660 = vld [vmem:[%s234 + $0x56] sm:$0xff]
      %v2661 = vld [vmem:[%s234 + $0x5e] sm:$0xff]
      %v2662 = vld [vmem:[%s234 + $0x66] sm:$0xff]
      %v2663 = vld [vmem:[%s234 + $0x6e] sm:$0xff]
      %v2664 = vld [vmem:[%s234 + $0x76] sm:$0xff]
      %v2665 = vld [vmem:[%s234 + $0x7e] sm:$0xff]
      %v2666 = vld [vmem:[%s234 + $0x86] sm:$0xff]
      %v2667 = vld [vmem:[%s234 + $0x8e] sm:$0xff]
      %v2668 = vld [vmem:[%s234 + $0x96] sm:$0xff]
      %v2669 = vld [vmem:[%s234 + $0x9e] sm:$0xff]
      %v2670 = vld [vmem:[%s234 + $0xa6] sm:$0xff]
      %v2671 = vld [vmem:[%s234 + $0xae] sm:$0xff]
      %v2672 = vld [vmem:[%s234 + $0xb6] sm:$0xff]
      %v2673 = vld [vmem:[%s234 + $0xbe] sm:$0xff]
      %v2674 = vld [vmem:[%s234 + $0xc6] sm:$0xff]
      %v2675 = vld [vmem:[%s234 + $0xce] sm:$0xff]
      %v2676 = vld [vmem:[%s234 + $0xd6] sm:$0xff]
      %v2677 = vld [vmem:[%s234 + $0xde] sm:$0xff]
      %v2678 = vld [vmem:[%s234 + $0xe6] sm:$0xff]
      %v2679 = vld [vmem:[%s234 + $0xee] sm:$0xff]
      %v2680 = vld [vmem:[%s234 + $0xf6] sm:$0xff]
      %v2681 = vld [vmem:[%s234 + $0xfe] sm:$0xff]
      %v2682 = vld [vmem:[%s234 + $0x106] sm:$0xff]
      %v2683 = vld [vmem:[%s234 + $0x10e] sm:$0xff]
      %v2684 = vld [vmem:[%s234 + $0x116] sm:$0xff]
      %v2685 = vld [vmem:[%s234 + $0x11e] sm:$0xff]
      %v2686 = vld [vmem:[%s234 + $0x126] sm:$0xff]
      %v2687 = vld [vmem:[%s234 + $0x12e] sm:$0xff]
      %v2688 = vld [vmem:[%s234 + $0x136] sm:$0xff]
      %v2689 = vld [vmem:[%s234 + $0x13e] sm:$0xff]
      %s2690 = scalar_lea.vmem %s1, 32
      %v2691 = vld [vmem:[%s2690] sm:$0xf]
      %v2693 = vsel %vm320, %v2654, 0
      %v2696 = vsel %vm320, %v2655, 0
      %v2699 = vsel %vm320, %v2656, 0
      %v2702 = vsel %vm320, %v2657, 0
      %v2705 = vsel %vm320, %v2658, 0
      %v2708 = vsel %vm320, %v2659, 0
      %v2711 = vsel %vm320, %v2660, 0
      %v2714 = vsel %vm320, %v2661, 0
      %v2717 = vsel %vm320, %v2662, 0
      %v2720 = vsel %vm320, %v2663, 0
      %v2723 = vsel %vm320, %v2664, 0
      %v2726 = vsel %vm320, %v2665, 0
      %v2729 = vsel %vm320, %v2666, 0
      %v2732 = vsel %vm320, %v2667, 0
      %v2735 = vsel %vm320, %v2668, 0
      %v2738 = vsel %vm320, %v2669, 0
      %v2741 = vsel %vm320, %v2670, 0
      %v2744 = vsel %vm320, %v2671, 0
      %v2747 = vsel %vm320, %v2672, 0
      %v2750 = vsel %vm320, %v2673, 0
      %v2753 = vsel %vm320, %v2674, 0
      %v2756 = vsel %vm320, %v2675, 0
      %v2759 = vsel %vm320, %v2676, 0
      %v2762 = vsel %vm320, %v2677, 0
      %v2765 = vsel %vm320, %v2678, 0
      %v2768 = vsel %vm320, %v2679, 0
      %v2771 = vsel %vm320, %v2680, 0
      %v2774 = vsel %vm320, %v2681, 0
      %v2777 = vsel %vm320, %v2682, 0
      %v2780 = vsel %vm320, %v2683, 0
      %v2783 = vsel %vm320, %v2684, 0
      %v2786 = vsel %vm320, %v2685, 0
      %v2789 = vsel %vm320, %v2686, 0
      %v2792 = vsel %vm320, %v2687, 0
      %v2795 = vsel %vm320, %v2688, 0
      %v2798 = vsel %vm320, %v2689, 0
      %v2801 = vsel %vm429, %v2691, 0
      %2803 = vmatpush.msra.mxu0 0.0
      %2804 = vmatpush.msra.mxu0 0.0
      %2805 = vmatpush.msra.mxu0 0.0
      %2806 = vmatpush.msra.mxu0 0.0
      %2807 = vmatpush.msra.mxu0 0.0
      %2808 = vmatpush.msra.mxu0 0.0
      %2809 = vmatpush.msra.mxu0 0.0
      %2810 = vmatpush.msra.mxu0 0.0
      %2811 = vmatpush.msra.mxu0 0.0
      %2812 = vmatpush.msra.mxu0 0.0
      %2813 = vmatpush.msra.mxu0 0.0
      %2814 = vmatpush.msra.mxu0 0.0
      %2815 = vmatpush.msra.mxu0 0.0
      %2816 = vmatpush.msra.mxu0 0.0
      %2817 = vmatpush.msra.mxu0 0.0
      %2818 = vmatpush.msra.mxu0 %v2801
      %2819 = vmatmul.f32.gmra.mxu0 %v2693
      %v2820 = vpop.f32.mrf.mxu0
      %v2821 = vadd.f32 0.0, %v2820
      %2822 = vmatmul.f32.gmra.mxu0 %v2696
      %v2823 = vpop.f32.mrf.mxu0
      %v2824 = vadd.f32 0.0, %v2823
      %2825 = vmatmul.f32.gmra.mxu0 %v2699
      %v2826 = vpop.f32.mrf.mxu0
      %v2827 = vadd.f32 0.0, %v2826
      %2828 = vmatmul.f32.gmra.mxu0 %v2702
      %v2829 = vpop.f32.mrf.mxu0
      %v2830 = vadd.f32 0.0, %v2829
      %2831 = vmatmul.f32.gmra.mxu0 %v2705
      %v2832 = vpop.f32.mrf.mxu0
      %v2833 = vadd.f32 0.0, %v2832
      %2834 = vmatmul.f32.gmra.mxu0 %v2708
      %v2835 = vpop.f32.mrf.mxu0
      %v2836 = vadd.f32 0.0, %v2835
      %2837 = vmatmul.f32.gmra.mxu0 %v2711
      %v2838 = vpop.f32.mrf.mxu0
      %v2839 = vadd.f32 0.0, %v2838
      %2840 = vmatmul.f32.gmra.mxu0 %v2714
      %v2841 = vpop.f32.mrf.mxu0
      %v2842 = vadd.f32 0.0, %v2841
      %2843 = vmatmul.f32.gmra.mxu0 %v2717
      %v2844 = vpop.f32.mrf.mxu0
      %v2845 = vadd.f32 0.0, %v2844
      %2846 = vmatmul.f32.gmra.mxu0 %v2720
      %v2847 = vpop.f32.mrf.mxu0
      %v2848 = vadd.f32 0.0, %v2847
      %2849 = vmatmul.f32.gmra.mxu0 %v2723
      %v2850 = vpop.f32.mrf.mxu0
      %v2851 = vadd.f32 0.0, %v2850
      %2852 = vmatmul.f32.gmra.mxu0 %v2726
      %v2853 = vpop.f32.mrf.mxu0
      %v2854 = vadd.f32 0.0, %v2853
      %2855 = vmatmul.f32.gmra.mxu0 %v2729
      %v2856 = vpop.f32.mrf.mxu0
      %v2857 = vadd.f32 0.0, %v2856
      %2858 = vmatmul.f32.gmra.mxu0 %v2732
      %v2859 = vpop.f32.mrf.mxu0
      %v2860 = vadd.f32 0.0, %v2859
      %2861 = vmatmul.f32.gmra.mxu0 %v2735
      %v2862 = vpop.f32.mrf.mxu0
      %v2863 = vadd.f32 0.0, %v2862
      %2864 = vmatmul.f32.gmra.mxu0 %v2738
      %v2865 = vpop.f32.mrf.mxu0
      %v2866 = vadd.f32 0.0, %v2865
      %2867 = vmatmul.f32.gmra.mxu0 %v2741
      %v2868 = vpop.f32.mrf.mxu0
      %v2869 = vadd.f32 0.0, %v2868
      %2870 = vmatmul.f32.gmra.mxu0 %v2744
      %v2871 = vpop.f32.mrf.mxu0
      %v2872 = vadd.f32 0.0, %v2871
      %2873 = vmatmul.f32.gmra.mxu0 %v2747
      %v2874 = vpop.f32.mrf.mxu0
      %v2875 = vadd.f32 0.0, %v2874
      %2876 = vmatmul.f32.gmra.mxu0 %v2750
      %v2877 = vpop.f32.mrf.mxu0
      %v2878 = vadd.f32 0.0, %v2877
      %2879 = vmatmul.f32.gmra.mxu0 %v2753
      %v2880 = vpop.f32.mrf.mxu0
      %v2881 = vadd.f32 0.0, %v2880
      %2882 = vmatmul.f32.gmra.mxu0 %v2756
      %v2883 = vpop.f32.mrf.mxu0
      %v2884 = vadd.f32 0.0, %v2883
      %2885 = vmatmul.f32.gmra.mxu0 %v2759
      %v2886 = vpop.f32.mrf.mxu0
      %v2887 = vadd.f32 0.0, %v2886
      %2888 = vmatmul.f32.gmra.mxu0 %v2762
      %v2889 = vpop.f32.mrf.mxu0
      %v2890 = vadd.f32 0.0, %v2889
      %2891 = vmatmul.f32.gmra.mxu0 %v2765
      %v2892 = vpop.f32.mrf.mxu0
      %v2893 = vadd.f32 0.0, %v2892
      %2894 = vmatmul.f32.gmra.mxu0 %v2768
      %v2895 = vpop.f32.mrf.mxu0
      %v2896 = vadd.f32 0.0, %v2895
      %2897 = vmatmul.f32.gmra.mxu0 %v2771
      %v2898 = vpop.f32.mrf.mxu0
      %v2899 = vadd.f32 0.0, %v2898
      %2900 = vmatmul.f32.gmra.mxu0 %v2774
      %v2901 = vpop.f32.mrf.mxu0
      %v2902 = vadd.f32 0.0, %v2901
      %2903 = vmatmul.f32.gmra.mxu0 %v2777
      %v2904 = vpop.f32.mrf.mxu0
      %v2905 = vadd.f32 0.0, %v2904
      %2906 = vmatmul.f32.gmra.mxu0 %v2780
      %v2907 = vpop.f32.mrf.mxu0
      %v2908 = vadd.f32 0.0, %v2907
      %2909 = vmatmul.f32.gmra.mxu0 %v2783
      %v2910 = vpop.f32.mrf.mxu0
      %v2911 = vadd.f32 0.0, %v2910
      %2912 = vmatmul.f32.gmra.mxu0 %v2786
      %v2913 = vpop.f32.mrf.mxu0
      %v2914 = vadd.f32 0.0, %v2913
      %2915 = vmatmul.f32.gmra.mxu0 %v2789
      %v2916 = vpop.f32.mrf.mxu0
      %v2917 = vadd.f32 0.0, %v2916
      %2918 = vmatmul.f32.gmra.mxu0 %v2792
      %v2919 = vpop.f32.mrf.mxu0
      %v2920 = vadd.f32 0.0, %v2919
      %2921 = vmatmul.f32.gmra.mxu0 %v2795
      %v2922 = vpop.f32.mrf.mxu0
      %v2923 = vadd.f32 0.0, %v2922
      %2924 = vmatmul.f32.gmra.mxu0 %v2798
      %v2925 = vpop.f32.mrf.mxu0
      %v2926 = vadd.f32 0.0, %v2925
      %2927 = vdwg.mxu0
      %v2928 = vadd.f32 %v2618, %v2821
      %v2929 = vadd.f32 %v2619, %v2824
      %v2930 = vadd.f32 %v2620, %v2827
      %v2931 = vadd.f32 %v2621, %v2830
      %v2932 = vadd.f32 %v2622, %v2833
      %v2933 = vadd.f32 %v2623, %v2836
      %v2934 = vadd.f32 %v2624, %v2839
      %v2935 = vadd.f32 %v2625, %v2842
      %v2936 = vadd.f32 %v2626, %v2845
      %v2937 = vadd.f32 %v2627, %v2848
      %v2938 = vadd.f32 %v2628, %v2851
      %v2939 = vadd.f32 %v2629, %v2854
      %v2940 = vadd.f32 %v2630, %v2857
      %v2941 = vadd.f32 %v2631, %v2860
      %v2942 = vadd.f32 %v2632, %v2863
      %v2943 = vadd.f32 %v2633, %v2866
      %v2944 = vadd.f32 %v2634, %v2869
      %v2945 = vadd.f32 %v2635, %v2872
      %v2946 = vadd.f32 %v2636, %v2875
      %v2947 = vadd.f32 %v2637, %v2878
      %v2948 = vadd.f32 %v2638, %v2881
      %v2949 = vadd.f32 %v2639, %v2884
      %v2950 = vadd.f32 %v2640, %v2887
      %v2951 = vadd.f32 %v2641, %v2890
      %v2952 = vadd.f32 %v2642, %v2893
      %v2953 = vadd.f32 %v2643, %v2896
      %v2954 = vadd.f32 %v2644, %v2899
      %v2955 = vadd.f32 %v2645, %v2902
      %v2956 = vadd.f32 %v2646, %v2905
      %v2957 = vadd.f32 %v2647, %v2908
      %v2958 = vadd.f32 %v2648, %v2911
      %v2959 = vadd.f32 %v2649, %v2914
      %v2960 = vadd.f32 %v2650, %v2917
      %v2961 = vadd.f32 %v2651, %v2920
      %v2962 = vadd.f32 %v2652, %v2923
      %v2963 = vadd.f32 %v2653, %v2926
      %v2964 = vld [vmem:[%s2] sm:$0x1]
      %v2966 = vperm.slane %v2964, 0
      %v2968 = vmul.f32 %v2928, %v2966
      %v2969 = vmul.f32 %v2929, %v2966
      %v2970 = vmul.f32 %v2930, %v2966
      %v2971 = vmul.f32 %v2931, %v2966
      %v2972 = vmul.f32 %v2932, %v2966
      %v2973 = vmul.f32 %v2933, %v2966
      %v2974 = vmul.f32 %v2934, %v2966
      %v2975 = vmul.f32 %v2935, %v2966
      %v2976 = vmul.f32 %v2936, %v2966
      %v2977 = vmul.f32 %v2937, %v2966
      %v2978 = vmul.f32 %v2938, %v2966
      %v2979 = vmul.f32 %v2939, %v2966
      %v2980 = vmul.f32 %v2940, %v2966
      %v2981 = vmul.f32 %v2941, %v2966
      %v2982 = vmul.f32 %v2942, %v2966
      %v2983 = vmul.f32 %v2943, %v2966
      %v2984 = vmul.f32 %v2944, %v2966
      %v2985 = vmul.f32 %v2945, %v2966
      %v2986 = vmul.f32 %v2946, %v2966
      %v2987 = vmul.f32 %v2947, %v2966
      %v2988 = vmul.f32 %v2948, %v2966
      %v2989 = vmul.f32 %v2949, %v2966
      %v2990 = vmul.f32 %v2950, %v2966
      %v2991 = vmul.f32 %v2951, %v2966
      %v2992 = vmul.f32 %v2952, %v2966
      %v2993 = vmul.f32 %v2953, %v2966
      %v2994 = vmul.f32 %v2954, %v2966
      %v2995 = vmul.f32 %v2955, %v2966
      %v2996 = vmul.f32 %v2956, %v2966
      %v2997 = vmul.f32 %v2957, %v2966
      %v2998 = vmul.f32 %v2958, %v2966
      %v2999 = vmul.f32 %v2959, %v2966
      %v3000 = vmul.f32 %v2960, %v2966
      %v3001 = vmul.f32 %v2961, %v2966
      %v3002 = vmul.f32 %v2962, %v2966
      %v3003 = vmul.f32 %v2963, %v2966
      %v3004 = vld [vmem:[%s3] sm:$0x1]
      %v3006 = vperm.slane %v3004, 0
      %v3008 = vadd.f32 %v2968, %v3006
      %v3009 = vadd.f32 %v2969, %v3006
      %v3010 = vadd.f32 %v2970, %v3006
      %v3011 = vadd.f32 %v2971, %v3006
      %v3012 = vadd.f32 %v2972, %v3006
      %v3013 = vadd.f32 %v2973, %v3006
      %v3014 = vadd.f32 %v2974, %v3006
      %v3015 = vadd.f32 %v2975, %v3006
      %v3016 = vadd.f32 %v2976, %v3006
      %v3017 = vadd.f32 %v2977, %v3006
      %v3018 = vadd.f32 %v2978, %v3006
      %v3019 = vadd.f32 %v2979, %v3006
      %v3020 = vadd.f32 %v2980, %v3006
      %v3021 = vadd.f32 %v2981, %v3006
      %v3022 = vadd.f32 %v2982, %v3006
      %v3023 = vadd.f32 %v2983, %v3006
      %v3024 = vadd.f32 %v2984, %v3006
      %v3025 = vadd.f32 %v2985, %v3006
      %v3026 = vadd.f32 %v2986, %v3006
      %v3027 = vadd.f32 %v2987, %v3006
      %v3028 = vadd.f32 %v2988, %v3006
      %v3029 = vadd.f32 %v2989, %v3006
      %v3030 = vadd.f32 %v2990, %v3006
      %v3031 = vadd.f32 %v2991, %v3006
      %v3032 = vadd.f32 %v2992, %v3006
      %v3033 = vadd.f32 %v2993, %v3006
      %v3034 = vadd.f32 %v2994, %v3006
      %v3035 = vadd.f32 %v2995, %v3006
      %v3036 = vadd.f32 %v2996, %v3006
      %v3037 = vadd.f32 %v2997, %v3006
      %v3038 = vadd.f32 %v2998, %v3006
      %v3039 = vadd.f32 %v2999, %v3006
      %v3040 = vadd.f32 %v3000, %v3006
      %v3041 = vadd.f32 %v3001, %v3006
      %v3042 = vadd.f32 %v3002, %v3006
      %v3043 = vadd.f32 %v3003, %v3006
      %v3044 = vld [vmem:[%s239] sm:$0xff]
      %v3045 = vld [vmem:[%s239 + $0x8] sm:$0xff]
      %v3046 = vld [vmem:[%s239 + $0x10] sm:$0xff]
      %v3047 = vld [vmem:[%s239 + $0x18] sm:$0xff]
      %v3048 = vld [vmem:[%s239 + $0x20] sm:$0xff]
      %v3049 = vld [vmem:[%s239 + $0x28] sm:$0xff]
      %v3050 = vld [vmem:[%s239 + $0x30] sm:$0xff]
      %v3051 = vld [vmem:[%s239 + $0x38] sm:$0xff]
      %v3052 = vld [vmem:[%s239 + $0x40] sm:$0xff]
      %v3053 = vld [vmem:[%s239 + $0x48] sm:$0xff]
      %v3054 = vld [vmem:[%s239 + $0x50] sm:$0xff]
      %v3055 = vld [vmem:[%s239 + $0x58] sm:$0xff]
      %v3056 = vld [vmem:[%s239 + $0x60] sm:$0xff]
      %v3057 = vld [vmem:[%s239 + $0x68] sm:$0xff]
      %v3058 = vld [vmem:[%s239 + $0x70] sm:$0xff]
      %v3059 = vld [vmem:[%s239 + $0x78] sm:$0xff]
      %v3060 = vld [vmem:[%s239 + $0x80] sm:$0xff]
      %v3061 = vld [vmem:[%s239 + $0x88] sm:$0xff]
      %v3062 = vld [vmem:[%s239 + $0x90] sm:$0xff]
      %v3063 = vld [vmem:[%s239 + $0x98] sm:$0xff]
      %v3064 = vld [vmem:[%s239 + $0xa0] sm:$0xff]
      %v3065 = vld [vmem:[%s239 + $0xa8] sm:$0xff]
      %v3066 = vld [vmem:[%s239 + $0xb0] sm:$0xff]
      %v3067 = vld [vmem:[%s239 + $0xb8] sm:$0xff]
      %v3068 = vld [vmem:[%s239 + $0xc0] sm:$0xff]
      %v3069 = vld [vmem:[%s239 + $0xc8] sm:$0xff]
      %v3070 = vld [vmem:[%s239 + $0xd0] sm:$0xff]
      %v3071 = vld [vmem:[%s239 + $0xd8] sm:$0xff]
      %v3072 = vld [vmem:[%s239 + $0xe0] sm:$0xff]
      %v3073 = vld [vmem:[%s239 + $0xe8] sm:$0xff]
      %v3074 = vld [vmem:[%s239 + $0xf0] sm:$0xff]
      %v3075 = vld [vmem:[%s239 + $0xf8] sm:$0xff]
      %v3076 = vld [vmem:[%s239 + $0x100] sm:$0xff]
      %v3077 = vld [vmem:[%s239 + $0x108] sm:$0xff]
      %v3078 = vld [vmem:[%s239 + $0x110] sm:$0xff]
      %v3079 = vld [vmem:[%s239 + $0x118] sm:$0xff]
      %v3080 = vadd.f32 %v3008, %v3044
      %v3081 = vadd.f32 %v3009, %v3045
      %v3082 = vadd.f32 %v3010, %v3046
      %v3083 = vadd.f32 %v3011, %v3047
      %v3084 = vadd.f32 %v3012, %v3048
      %v3085 = vadd.f32 %v3013, %v3049
      %v3086 = vadd.f32 %v3014, %v3050
      %v3087 = vadd.f32 %v3015, %v3051
      %v3088 = vadd.f32 %v3016, %v3052
      %v3089 = vadd.f32 %v3017, %v3053
      %v3090 = vadd.f32 %v3018, %v3054
      %v3091 = vadd.f32 %v3019, %v3055
      %v3092 = vadd.f32 %v3020, %v3056
      %v3093 = vadd.f32 %v3021, %v3057
      %v3094 = vadd.f32 %v3022, %v3058
      %v3095 = vadd.f32 %v3023, %v3059
      %v3096 = vadd.f32 %v3024, %v3060
      %v3097 = vadd.f32 %v3025, %v3061
      %v3098 = vadd.f32 %v3026, %v3062
      %v3099 = vadd.f32 %v3027, %v3063
      %v3100 = vadd.f32 %v3028, %v3064
      %v3101 = vadd.f32 %v3029, %v3065
      %v3102 = vadd.f32 %v3030, %v3066
      %v3103 = vadd.f32 %v3031, %v3067
      %v3104 = vadd.f32 %v3032, %v3068
      %v3105 = vadd.f32 %v3033, %v3069
      %v3106 = vadd.f32 %v3034, %v3070
      %v3107 = vadd.f32 %v3035, %v3071
      %v3108 = vadd.f32 %v3036, %v3072
      %v3109 = vadd.f32 %v3037, %v3073
      %v3110 = vadd.f32 %v3038, %v3074
      %v3111 = vadd.f32 %v3039, %v3075
      %v3112 = vadd.f32 %v3040, %v3076
      %v3113 = vadd.f32 %v3041, %v3077
      %v3114 = vadd.f32 %v3042, %v3078
      %v3115 = vadd.f32 %v3043, %v3079
      %v3116 = vmax.f32 %v3080, 0.0
      %v3117 = vmax.f32 %v3081, 0.0
      %v3118 = vmax.f32 %v3082, 0.0
      %v3119 = vmax.f32 %v3083, 0.0
      %v3120 = vmax.f32 %v3084, 0.0
      %v3121 = vmax.f32 %v3085, 0.0
      %v3122 = vmax.f32 %v3086, 0.0
      %v3123 = vmax.f32 %v3087, 0.0
      %v3124 = vmax.f32 %v3088, 0.0
      %v3125 = vmax.f32 %v3089, 0.0
      %v3126 = vmax.f32 %v3090, 0.0
      %v3127 = vmax.f32 %v3091, 0.0
      %v3128 = vmax.f32 %v3092, 0.0
      %v3129 = vmax.f32 %v3093, 0.0
      %v3130 = vmax.f32 %v3094, 0.0
      %v3131 = vmax.f32 %v3095, 0.0
      %v3132 = vmax.f32 %v3096, 0.0
      %v3133 = vmax.f32 %v3097, 0.0
      %v3134 = vmax.f32 %v3098, 0.0
      %v3135 = vmax.f32 %v3099, 0.0
      %v3136 = vmax.f32 %v3100, 0.0
      %v3137 = vmax.f32 %v3101, 0.0
      %v3138 = vmax.f32 %v3102, 0.0
      %v3139 = vmax.f32 %v3103, 0.0
      %v3140 = vmax.f32 %v3104, 0.0
      %v3141 = vmax.f32 %v3105, 0.0
      %v3142 = vmax.f32 %v3106, 0.0
      %v3143 = vmax.f32 %v3107, 0.0
      %v3144 = vmax.f32 %v3108, 0.0
      %v3145 = vmax.f32 %v3109, 0.0
      %v3146 = vmax.f32 %v3110, 0.0
      %v3147 = vmax.f32 %v3111, 0.0
      %v3148 = vmax.f32 %v3112, 0.0
      %v3149 = vmax.f32 %v3113, 0.0
      %v3150 = vmax.f32 %v3114, 0.0
      %v3151 = vmax.f32 %v3115, 0.0
      %3152 = vst.msk [vmem:[%s244] sm:$0xff] %vm320, %v3116
      %3153 = vst.msk [vmem:[%s244 + $0x8] sm:$0xff] %vm320, %v3117
      %3154 = vst.msk [vmem:[%s244 + $0x10] sm:$0xff] %vm320, %v3118
      %3155 = vst.msk [vmem:[%s244 + $0x18] sm:$0xff] %vm320, %v3119
      %3156 = vst.msk [vmem:[%s244 + $0x20] sm:$0xff] %vm320, %v3120
      %3157 = vst.msk [vmem:[%s244 + $0x28] sm:$0xff] %vm320, %v3121
      %3158 = vst.msk [vmem:[%s244 + $0x30] sm:$0xff] %vm320, %v3122
      %3159 = vst.msk [vmem:[%s244 + $0x38] sm:$0xff] %vm320, %v3123
      %3160 = vst.msk [vmem:[%s244 + $0x40] sm:$0xff] %vm320, %v3124
      %3161 = vst.msk [vmem:[%s244 + $0x48] sm:$0xff] %vm320, %v3125
      %3162 = vst.msk [vmem:[%s244 + $0x50] sm:$0xff] %vm320, %v3126
      %3163 = vst.msk [vmem:[%s244 + $0x58] sm:$0xff] %vm320, %v3127
      %3164 = vst.msk [vmem:[%s244 + $0x60] sm:$0xff] %vm320, %v3128
      %3165 = vst.msk [vmem:[%s244 + $0x68] sm:$0xff] %vm320, %v3129
      %3166 = vst.msk [vmem:[%s244 + $0x70] sm:$0xff] %vm320, %v3130
      %3167 = vst.msk [vmem:[%s244 + $0x78] sm:$0xff] %vm320, %v3131
      %3168 = vst.msk [vmem:[%s244 + $0x80] sm:$0xff] %vm320, %v3132
      %3169 = vst.msk [vmem:[%s244 + $0x88] sm:$0xff] %vm320, %v3133
      %3170 = vst.msk [vmem:[%s244 + $0x90] sm:$0xff] %vm320, %v3134
      %3171 = vst.msk [vmem:[%s244 + $0x98] sm:$0xff] %vm320, %v3135
      %3172 = vst.msk [vmem:[%s244 + $0xa0] sm:$0xff] %vm320, %v3136
      %3173 = vst.msk [vmem:[%s244 + $0xa8] sm:$0xff] %vm320, %v3137
      %3174 = vst.msk [vmem:[%s244 + $0xb0] sm:$0xff] %vm320, %v3138
      %3175 = vst.msk [vmem:[%s244 + $0xb8] sm:$0xff] %vm320, %v3139
      %3176 = vst.msk [vmem:[%s244 + $0xc0] sm:$0xff] %vm320, %v3140
      %3177 = vst.msk [vmem:[%s244 + $0xc8] sm:$0xff] %vm320, %v3141
      %3178 = vst.msk [vmem:[%s244 + $0xd0] sm:$0xff] %vm320, %v3142
      %3179 = vst.msk [vmem:[%s244 + $0xd8] sm:$0xff] %vm320, %v3143
      %3180 = vst.msk [vmem:[%s244 + $0xe0] sm:$0xff] %vm320, %v3144
      %3181 = vst.msk [vmem:[%s244 + $0xe8] sm:$0xff] %vm320, %v3145
      %3182 = vst.msk [vmem:[%s244 + $0xf0] sm:$0xff] %vm320, %v3146
      %3183 = vst.msk [vmem:[%s244 + $0xf8] sm:$0xff] %vm320, %v3147
      %3184 = vst.msk [vmem:[%s244 + $0x100] sm:$0xff] %vm320, %v3148
      %3185 = vst.msk [vmem:[%s244 + $0x108] sm:$0xff] %vm320, %v3149
      %3186 = vst.msk [vmem:[%s244 + $0x110] sm:$0xff] %vm320, %v3150
      %3187 = vst.msk [vmem:[%s244 + $0x118] sm:$0xff] %vm320, %v3151
      %p3188 = scmp.lt.s32.totalorder %s16, 1
      %s3189 = scalar_select %p3188, %s16, 1
      %s3190 = smul.addr %s3189, 36
      %s3191 = smul.addr %s3190, 8
      %s3192 = scalar_lea.vmem %s5, %s3191
      // Predicated region
      $region41: #{residual_forward.3} parent=39 // pred_check
        %p3193 = pneg %p149
      $region42: #{residual_forward.3} parent=39 // pred_check_branch
        %3195 = sbr.rel (%p3193) target = $region44
      $region43: #{residual_forward.3} parent=39 // pred_region
        _
      $region44: #{residual_forward.3} parent=39 // pred_fallthru
        _
    $region40: #{residual_forward.3} parent=5 // pred_fallthru
      _
    %p3196 = scmp.le.s32.totalorder 2, %s11
    // Predicated region
    $region45: #{residual_forward.3} parent=5 // pred_check
      %p3197 = pneg %p3196
    $region46: #{residual_forward.3} parent=5 // pred_check_branch
      %3199 = sbr.rel (%p3197) target = $region48
    $region47: #{residual_forward.3} parent=5 // pred_region
      %s3200 = ssub.s32 %s11, 2
      // Predicated region
      $region49: #{residual_forward.3} parent=47 // pred_check
        %p3201 = pneg %p155
      $region50: #{residual_forward.3} parent=47 // pred_check_branch
        %3203 = sbr.rel (%p3201) target = $region52
      $region51: #{residual_forward.3} parent=47 // pred_region
        %p3204 = scmp.lt.s32.totalorder %s17, 1
        %s3205 = scalar_select %p3204, %s17, 1
        %s3206 = smul.addr %s3205, 36
        %s3207 = smul.addr %s3206, 8
        %s3208 = scalar_lea.vmem %s5, %s3207
      $region52: #{residual_forward.3} parent=47 // pred_fallthru
        _
    $region48: #{residual_forward.3} parent=5 // pred_fallthru
      _
  $region6: #{residual_forward.3} parent=0 // loop_footer
    %s15 = sadd.s32 1, %s11
  $region7: #{residual_forward.3} parent=0 // loop_footer_branch
    %10 = sbr.rel target = $region3
  $region8: #{residual_forward.3} parent=0 // loop_exit
    _

</llo_original>
